<compile_context>
chip_gen: v7x
topology: tpu7x:2x2x1
jax: 0.10.0
libtpu: 0.0.40
codegen_flags: <defaults>
</compile_context>

<pallas_src>
import jax
import jax.numpy as jnp
from jax import lax
from jax.experimental import pallas as pl
from jax.experimental.pallas import tpu as pltpu

INPUT_SIZE = 225          # 15 x 15 keypoint grid flattened
HIDDEN = 256
GATES = 4 * HIDDEN        # i, f, g, o (PyTorch gate order)
NUM_CLASSES = 10


def _lstm_cell(xt, h, c, w_ih, w_hh, b):
    """Reference-only PyTorch-style LSTM cell step (f32). xt:(B,D) h,c:(B,H)."""
    gates = (jnp.dot(xt, w_ih, preferred_element_type=jnp.float32)
             + jnp.dot(h, w_hh, preferred_element_type=jnp.float32)
             + b)
    i = jax.nn.sigmoid(gates[:, 0 * HIDDEN:1 * HIDDEN])
    f = jax.nn.sigmoid(gates[:, 1 * HIDDEN:2 * HIDDEN])
    g = jnp.tanh(gates[:, 2 * HIDDEN:3 * HIDDEN])
    o = jax.nn.sigmoid(gates[:, 3 * HIDDEN:4 * HIDDEN])
    c_new = f * c + i * g
    return o * jnp.tanh(c_new), c_new


def _make_kernel(T, Bp):
    """Build the single-invocation kernel; T, Bp are trace-time constants."""

    def kernel(x_ref,                           # (T*Bp, D) bf16, time-major, batch-padded
               wih_f_ref, whh_f_ref, b_f_ref,   # forward LSTM weights (bf16/bf16/f32)
               wih_b_ref, b_b_ref,              # backward LSTM weights (W_hh_bwd unused)
               wfc_ref, bfc_ref,                # classifier head (class-padded to 128)
               out_ref,                         # (Bp, Cp) f32
               gx_ref):                         # VMEM scratch: (T*Bp, GATES) f32
        # ---- Hoisted input projection: one tall MXU matmul over all (t, b) rows.
        gx_ref[...] = (jnp.dot(x_ref[...], wih_f_ref[...],
                               preferred_element_type=jnp.float32)
                       + b_f_ref[...])

        whh = whh_f_ref[...]                    # (H, 4H) bf16, resident for the loop

        # ---- Forward recurrence: per step only h @ W_hh + gx[t] (gate math in f32).
        def step(t, carry):
            h, c = carry
            gates = gx_ref[pl.ds(t * Bp, Bp), :] + jnp.dot(
                h.astype(jnp.bfloat16), whh, preferred_element_type=jnp.float32)
            i = jax.nn.sigmoid(gates[:, 0 * HIDDEN:1 * HIDDEN])
            f = jax.nn.sigmoid(gates[:, 1 * HIDDEN:2 * HIDDEN])
            g = jnp.tanh(gates[:, 2 * HIDDEN:3 * HIDDEN])
            o = jax.nn.sigmoid(gates[:, 3 * HIDDEN:4 * HIDDEN])
            c = f * c + i * g
            h = o * jnp.tanh(c)
            return h, c

        zeros = jnp.zeros((Bp, HIDDEN), jnp.float32)
        h_fwd, _ = lax.fori_loop(0, T, step, (zeros, zeros), unroll=True)

        # ---- Backward direction at t = T-1: one LSTM step from a zero state,
        # so the h @ W_hh term vanishes and the forget gate is irrelevant (c=0).
        x_last = x_ref[(T - 1) * Bp:T * Bp, :]                   # static, tile-aligned
        gates_b = (jnp.dot(x_last, wih_b_ref[...],
                           preferred_element_type=jnp.float32) + b_b_ref[...])
        i_b = jax.nn.sigmoid(gates_b[:, 0 * HIDDEN:1 * HIDDEN])
        g_b = jnp.tanh(gates_b[:, 2 * HIDDEN:3 * HIDDEN])
        o_b = jax.nn.sigmoid(gates_b[:, 3 * HIDDEN:4 * HIDDEN])
        h_bwd = o_b * jnp.tanh(i_b * g_b)

        # ---- Classifier head: lane-dense (Bp, 128) store.
        feat = jnp.concatenate([h_fwd, h_bwd], axis=-1).astype(jnp.bfloat16)
        out_ref[...] = (jnp.dot(feat, wfc_ref[...],
                                preferred_element_type=jnp.float32)
                        + bfc_ref[...])

    return kernel


def sign_language_forward(x, params):
    """Pallas implementation of SignLanguageModel.forward."""
    if x.ndim == 4:
        b0, t0 = x.shape[0], x.shape[1]
        x = x.reshape(b0, t0, -1)
    B, T, D = x.shape
    assert D == INPUT_SIZE, f"expected feature dim {INPUT_SIZE}, got {D}"
    C = params["w_fc"].shape[1]

    Bp = max(8, -(-B // 8) * 8)            # sublane-aligned batch
    Cp = max(128, -(-C // 128) * 128)      # lane-dense output width

    # Time-major, zero-pad batch to Bp, flatten to (T*Bp, D): the hoisted input
    # projection is one tall MXU matmul and each per-step gx read is an aligned
    # (Bp, 4H) slab.  Padded rows produce garbage rows that are sliced away.
    x_t = jnp.transpose(x.astype(jnp.float32), (1, 0, 2))        # (T, B, D)
    x_t = jnp.pad(x_t, ((0, 0), (0, Bp - B), (0, 0)))
    x2d = x_t.reshape(T * Bp, D).astype(jnp.bfloat16)

    bf16 = lambda w: w.astype(jnp.bfloat16)
    w_fc = bf16(jnp.pad(params["w_fc"], ((0, 0), (0, Cp - C))))
    b_fc = jnp.pad(params["b_fc"], ((0, 0), (0, Cp - C)))

    full = lambda i: (0, 0)
    grid_spec = pltpu.PrefetchScalarGridSpec(
        num_scalar_prefetch=0,
        grid=(1,),                                    # single step: recurrence is in-kernel
        in_specs=[
            pl.BlockSpec((T * Bp, D), full),          # x (time-major, flattened)
            pl.BlockSpec((D, GATES), full),           # W_ih fwd
            pl.BlockSpec((HIDDEN, GATES), full),      # W_hh fwd
            pl.BlockSpec((1, GATES), full),           # b fwd (b_ih + b_hh)
            pl.BlockSpec((D, GATES), full),           # W_ih bwd
            pl.BlockSpec((1, GATES), full),           # b bwd
            pl.BlockSpec((2 * HIDDEN, Cp), full),     # W_fc (class-padded)
            pl.BlockSpec((1, Cp), full),              # b_fc
        ],
        out_specs=pl.BlockSpec((Bp, Cp), full),
        scratch_shapes=[pltpu.VMEM((T * Bp, GATES), jnp.float32)],  # projected gates
    )

    out = pl.pallas_call(
        _make_kernel(T, Bp),
        out_shape=jax.ShapeDtypeStruct((Bp, Cp), jnp.float32),
        grid_spec=grid_spec,
        compiler_params=pltpu.CompilerParams(
            dimension_semantics=("arbitrary",)),
    )(x2d,
      bf16(params["w_ih_f"]), bf16(params["w_hh_f"]), params["b_f"],
      bf16(params["w_ih_b"]), params["b_b"],
      w_fc, b_fc)
    return out[:B, :C]


def init_params(key, num_classes):
    """Deterministic init matching the PyTorch module's parameter shapes."""
    ks = jax.random.split(key, 12)
    k_lstm = 1.0 / jnp.sqrt(HIDDEN)
    k_fc = 1.0 / jnp.sqrt(2 * HIDDEN)
    u = lambda k, shape, s: jax.random.uniform(k, shape, jnp.float32, -s, s)
    # Stored transposed vs PyTorch (so matmuls are x @ W); LSTM biases pre-summed.
    return {
        "w_ih_f": u(ks[0], (INPUT_SIZE, GATES), k_lstm),
        "w_hh_f": u(ks[1], (HIDDEN, GATES), k_lstm),
        "b_f":    (u(ks[2], (1, GATES), k_lstm) + u(ks[3], (1, GATES), k_lstm)),
        "w_ih_b": u(ks[4], (INPUT_SIZE, GATES), k_lstm),
        "w_hh_b": u(ks[5], (HIDDEN, GATES), k_lstm),   # unused by kernel (exact shortcut)
        "b_b":    (u(ks[6], (1, GATES), k_lstm) + u(ks[7], (1, GATES), k_lstm)),
        "w_fc":   u(ks[8], (2 * HIDDEN, num_classes), k_fc),
        "b_fc":   u(ks[9], (1, num_classes), k_fc),
    }


def reference_forward(x, params):
    """Pure-JAX f32 reference: full bidirectional LSTM, then fc(output[:, -1])."""
    if x.ndim == 4:
        B, T = x.shape[0], x.shape[1]
        x = x.reshape(B, T, -1)
    B, T, D = x.shape
    x_t = jnp.transpose(x, (1, 0, 2)).astype(jnp.float32)    # (T, B, D)
    zeros = jnp.zeros((B, HIDDEN), jnp.float32)

    def run(x_seq, w_ih, w_hh, b):
        def step(carry, xt):
            h, c = carry
            h, c = _lstm_cell(xt, h, c, w_ih, w_hh, b)
            return (h, c), h
        _, hs = lax.scan(step, (zeros, zeros), x_seq)
        return hs                                             # (T, B, H)

    hs_f = run(x_t, params["w_ih_f"], params["w_hh_f"], params["b_f"])
    hs_b = run(x_t[::-1], params["w_ih_b"], params["w_hh_b"], params["b_b"])[::-1]
    last = jnp.concatenate([hs_f[-1], hs_b[-1]], axis=-1)     # (B, 2H) == out[:, -1]
    return last @ params["w_fc"] + params["b_fc"]


if __name__ == "__main__":
    B, T = 2, 8
    key = jax.random.PRNGKey(0)
    kx, kp = jax.random.split(key)
    # 4-D input as the module expects: (batch, seq, 15, 15) -> 225 features.
    x = jax.random.normal(kx, (B, T, 15, 15), jnp.float32)
    params = init_params(kp, NUM_CLASSES)

    out = sign_language_forward(x, params)
    out = jax.block_until_ready(out)
    assert out.shape == (B, NUM_CLASSES)

    ref = jax.block_until_ready(reference_forward(x, params))
    assert jnp.allclose(out, ref, rtol=5e-2, atol=5e-2), (
        f"max abs err {jnp.max(jnp.abs(out - ref))}")

    print("KERNEL_OK")
</pallas_src>

<mosaic_0001>
module attributes {stable_mosaic.version = 11 : i64} {
  func.func @kernel(%arg0: i32, %arg1: memref<64x225xbf16, #tpu.memory_space<vmem>>, %arg2: memref<225x1024xbf16, #tpu.memory_space<vmem>>, %arg3: memref<256x1024xbf16, #tpu.memory_space<vmem>>, %arg4: memref<1x1024xf32, #tpu.memory_space<vmem>>, %arg5: memref<225x1024xbf16, #tpu.memory_space<vmem>>, %arg6: memref<1x1024xf32, #tpu.memory_space<vmem>>, %arg7: memref<512x128xbf16, #tpu.memory_space<vmem>>, %arg8: memref<1x128xf32, #tpu.memory_space<vmem>>, %arg9: memref<8x128xf32, #tpu.memory_space<vmem>>, %arg10: memref<64x1024xf32, #tpu.memory_space<vmem>>) attributes {dimension_semantics = [#tpu.dimension_semantics<arbitrary>], iteration_bounds = array<i64: 1>, scalar_prefetch = 0 : i64, scratch_operands = 1 : i64, tpu.core_type = #tpu.core_type<tc>, window_params = [{pipeline_mode = #tpu.pipeline_mode<synchronous>, transform_indices = @transform_0, window_bounds = array<i64: 64, 225>}, {pipeline_mode = #tpu.pipeline_mode<synchronous>, transform_indices = @transform_1, window_bounds = array<i64: 225, 1024>}, {pipeline_mode = #tpu.pipeline_mode<synchronous>, transform_indices = @transform_2, window_bounds = array<i64: 256, 1024>}, {pipeline_mode = #tpu.pipeline_mode<synchronous>, transform_indices = @transform_3, window_bounds = array<i64: 1, 1024>}, {pipeline_mode = #tpu.pipeline_mode<synchronous>, transform_indices = @transform_4, window_bounds = array<i64: 225, 1024>}, {pipeline_mode = #tpu.pipeline_mode<synchronous>, transform_indices = @transform_5, window_bounds = array<i64: 1, 1024>}, {pipeline_mode = #tpu.pipeline_mode<synchronous>, transform_indices = @transform_6, window_bounds = array<i64: 512, 128>}, {pipeline_mode = #tpu.pipeline_mode<synchronous>, transform_indices = @transform_7, window_bounds = array<i64: 1, 128>}, {pipeline_mode = #tpu.pipeline_mode<synchronous>, transform_indices = @transform_8, window_bounds = array<i64: 8, 128>}]} {
    %c0 = arith.constant 0 : index
    %c0_0 = arith.constant 0 : index
    %0 = vector.load %arg1[%c0, %c0_0] : memref<64x225xbf16, #tpu.memory_space<vmem>>, vector<64x225xbf16>
    %c0_1 = arith.constant 0 : index
    %c0_2 = arith.constant 0 : index
    %1 = vector.load %arg2[%c0_1, %c0_2] : memref<225x1024xbf16, #tpu.memory_space<vmem>>, vector<225x1024xbf16>
    %cst = arith.constant dense<0.000000e+00> : vector<64x1024xf32>
    %2 = tpu.matmul %0, %1, %cst {dimension_numbers = #tpu.dot_dimension_numbers<[1], [0], [0], [1], [0, 0, 1, 1], [], []>} : vector<64x225xbf16>, vector<225x1024xbf16>, vector<64x1024xf32> -> vector<64x1024xf32>
    %c0_3 = arith.constant 0 : index
    %c0_4 = arith.constant 0 : index
    %3 = vector.load %arg4[%c0_3, %c0_4] : memref<1x1024xf32, #tpu.memory_space<vmem>>, vector<1x1024xf32>
    %4 = vector.broadcast %3 : vector<1x1024xf32> to vector<64x1024xf32>
    %5 = arith.addf %2, %4 : vector<64x1024xf32>
    %c0_5 = arith.constant 0 : index
    %c0_6 = arith.constant 0 : index
    %6 = vector.load %arg10[%c0_5, %c0_6] : memref<64x1024xf32, #tpu.memory_space<vmem>>, vector<64x1024xf32>
    tpu.vector_store %arg10[%c0_5, %c0_6], %5 {strides = array<i32>} : memref<64x1024xf32, #tpu.memory_space<vmem>>, vector<64x1024xf32>,
    %c0_7 = arith.constant 0 : index
    %c0_8 = arith.constant 0 : index
    %7 = vector.load %arg3[%c0_7, %c0_8] : memref<256x1024xbf16, #tpu.memory_space<vmem>>, vector<256x1024xbf16>
    %cst_9 = arith.constant 0.000000e+00 : f32
    %8 = vector.broadcast %cst_9 : f32 to vector<8x256xf32>
    %c0_i32 = arith.constant 0 : i32
    %c8_i32 = arith.constant 8 : i32
    %9 = arith.muli %c0_i32, %c8_i32 : i32
    %10 = arith.index_cast %9 : i32 to index
    %c0_10 = arith.constant 0 : index
    %11 = vector.load %arg10[%10, %c0_10] : memref<64x1024xf32, #tpu.memory_space<vmem>>, vector<8x1024xf32>
    %12 = arith.truncf %8 : vector<8x256xf32> to vector<8x256xbf16>
    %cst_11 = arith.constant dense<0.000000e+00> : vector<8x1024xf32>
    %13 = tpu.matmul %12, %7, %cst_11 {dimension_numbers = #tpu.dot_dimension_numbers<[1], [0], [0], [1], [0, 0, 1, 1], [], []>} : vector<8x256xbf16>, vector<256x1024xbf16>, vector<8x1024xf32> -> vector<8x1024xf32>
    %14 = arith.addf %11, %13 : vector<8x1024xf32>
    %15 = vector.extract_strided_slice %14 {offsets = [0, 0], sizes = [8, 256], strides = [1, 1]} : vector<8x1024xf32> to vector<8x256xf32>
    %16 = arith.negf %15 : vector<8x256xf32>
    %17 = math.exp %16 : vector<8x256xf32>
    %cst_12 = arith.constant 1.000000e+00 : f32
    %18 = vector.broadcast %cst_12 : f32 to vector<8x256xf32>
    %19 = arith.addf %18, %17 : vector<8x256xf32>
    %20 = arith.divf %18, %19 : vector<8x256xf32>
    %21 = vector.extract_strided_slice %14 {offsets = [0, 256], sizes = [8, 256], strides = [1, 1]} : vector<8x1024xf32> to vector<8x256xf32>
    %22 = arith.negf %21 : vector<8x256xf32>
    %23 = math.exp %22 : vector<8x256xf32>
    %cst_13 = arith.constant 1.000000e+00 : f32
    %24 = vector.broadcast %cst_13 : f32 to vector<8x256xf32>
    %25 = arith.addf %24, %23 : vector<8x256xf32>
    %26 = arith.divf %24, %25 : vector<8x256xf32>
    %27 = vector.extract_strided_slice %14 {offsets = [0, 512], sizes = [8, 256], strides = [1, 1]} : vector<8x1024xf32> to vector<8x256xf32>
    %28 = math.tanh %27 : vector<8x256xf32>
    %29 = vector.extract_strided_slice %14 {offsets = [0, 768], sizes = [8, 256], strides = [1, 1]} : vector<8x1024xf32> to vector<8x256xf32>
    %30 = arith.negf %29 : vector<8x256xf32>
    %31 = math.exp %30 : vector<8x256xf32>
    %cst_14 = arith.constant 1.000000e+00 : f32
    %32 = vector.broadcast %cst_14 : f32 to vector<8x256xf32>
    %33 = arith.addf %32, %31 : vector<8x256xf32>
    %34 = arith.divf %32, %33 : vector<8x256xf32>
    %35 = arith.mulf %26, %8 : vector<8x256xf32>
    %36 = arith.mulf %20, %28 : vector<8x256xf32>
    %37 = arith.addf %35, %36 : vector<8x256xf32>
    %38 = math.tanh %37 : vector<8x256xf32>
    %39 = arith.mulf %34, %38 : vector<8x256xf32>
    %c1_i32 = arith.constant 1 : i32
    %c8_i32_15 = arith.constant 8 : i32
    %40 = arith.muli %c1_i32, %c8_i32_15 : i32
    %41 = arith.index_cast %40 : i32 to index
    %c0_16 = arith.constant 0 : index
    %42 = vector.load %arg10[%41, %c0_16] : memref<64x1024xf32, #tpu.memory_space<vmem>>, vector<8x1024xf32>
    %43 = arith.truncf %39 : vector<8x256xf32> to vector<8x256xbf16>
    %cst_17 = arith.constant dense<0.000000e+00> : vector<8x1024xf32>
    %44 = tpu.matmul %43, %7, %cst_17 {dimension_numbers = #tpu.dot_dimension_numbers<[1], [0], [0], [1], [0, 0, 1, 1], [], []>} : vector<8x256xbf16>, vector<256x1024xbf16>, vector<8x1024xf32> -> vector<8x1024xf32>
    %45 = arith.addf %42, %44 : vector<8x1024xf32>
    %46 = vector.extract_strided_slice %45 {offsets = [0, 0], sizes = [8, 256], strides = [1, 1]} : vector<8x1024xf32> to vector<8x256xf32>
    %47 = arith.negf %46 : vector<8x256xf32>
    %48 = math.exp %47 : vector<8x256xf32>
    %cst_18 = arith.constant 1.000000e+00 : f32
    %49 = vector.broadcast %cst_18 : f32 to vector<8x256xf32>
    %50 = arith.addf %49, %48 : vector<8x256xf32>
    %51 = arith.divf %49, %50 : vector<8x256xf32>
    %52 = vector.extract_strided_slice %45 {offsets = [0, 256], sizes = [8, 256], strides = [1, 1]} : vector<8x1024xf32> to vector<8x256xf32>
    %53 = arith.negf %52 : vector<8x256xf32>
    %54 = math.exp %53 : vector<8x256xf32>
    %cst_19 = arith.constant 1.000000e+00 : f32
    %55 = vector.broadcast %cst_19 : f32 to vector<8x256xf32>
    %56 = arith.addf %55, %54 : vector<8x256xf32>
    %57 = arith.divf %55, %56 : vector<8x256xf32>
    %58 = vector.extract_strided_slice %45 {offsets = [0, 512], sizes = [8, 256], strides = [1, 1]} : vector<8x1024xf32> to vector<8x256xf32>
    %59 = math.tanh %58 : vector<8x256xf32>
    %60 = vector.extract_strided_slice %45 {offsets = [0, 768], sizes = [8, 256], strides = [1, 1]} : vector<8x1024xf32> to vector<8x256xf32>
    %61 = arith.negf %60 : vector<8x256xf32>
    %62 = math.exp %61 : vector<8x256xf32>
    %cst_20 = arith.constant 1.000000e+00 : f32
    %63 = vector.broadcast %cst_20 : f32 to vector<8x256xf32>
    %64 = arith.addf %63, %62 : vector<8x256xf32>
    %65 = arith.divf %63, %64 : vector<8x256xf32>
    %66 = arith.mulf %57, %37 : vector<8x256xf32>
    %67 = arith.mulf %51, %59 : vector<8x256xf32>
    %68 = arith.addf %66, %67 : vector<8x256xf32>
    %69 = math.tanh %68 : vector<8x256xf32>
    %70 = arith.mulf %65, %69 : vector<8x256xf32>
    %c2_i32 = arith.constant 2 : i32
    %c8_i32_21 = arith.constant 8 : i32
    %71 = arith.muli %c2_i32, %c8_i32_21 : i32
    %72 = arith.index_cast %71 : i32 to index
    %c0_22 = arith.constant 0 : index
    %73 = vector.load %arg10[%72, %c0_22] : memref<64x1024xf32, #tpu.memory_space<vmem>>, vector<8x1024xf32>
    %74 = arith.truncf %70 : vector<8x256xf32> to vector<8x256xbf16>
    %cst_23 = arith.constant dense<0.000000e+00> : vector<8x1024xf32>
    %75 = tpu.matmul %74, %7, %cst_23 {dimension_numbers = #tpu.dot_dimension_numbers<[1], [0], [0], [1], [0, 0, 1, 1], [], []>} : vector<8x256xbf16>, vector<256x1024xbf16>, vector<8x1024xf32> -> vector<8x1024xf32>
    %76 = arith.addf %73, %75 : vector<8x1024xf32>
    %77 = vector.extract_strided_slice %76 {offsets = [0, 0], sizes = [8, 256], strides = [1, 1]} : vector<8x1024xf32> to vector<8x256xf32>
    %78 = arith.negf %77 : vector<8x256xf32>
    %79 = math.exp %78 : vector<8x256xf32>
    %cst_24 = arith.constant 1.000000e+00 : f32
    %80 = vector.broadcast %cst_24 : f32 to vector<8x256xf32>
    %81 = arith.addf %80, %79 : vector<8x256xf32>
    %82 = arith.divf %80, %81 : vector<8x256xf32>
    %83 = vector.extract_strided_slice %76 {offsets = [0, 256], sizes = [8, 256], strides = [1, 1]} : vector<8x1024xf32> to vector<8x256xf32>
    %84 = arith.negf %83 : vector<8x256xf32>
    %85 = math.exp %84 : vector<8x256xf32>
    %cst_25 = arith.constant 1.000000e+00 : f32
    %86 = vector.broadcast %cst_25 : f32 to vector<8x256xf32>
    %87 = arith.addf %86, %85 : vector<8x256xf32>
    %88 = arith.divf %86, %87 : vector<8x256xf32>
    %89 = vector.extract_strided_slice %76 {offsets = [0, 512], sizes = [8, 256], strides = [1, 1]} : vector<8x1024xf32> to vector<8x256xf32>
    %90 = math.tanh %89 : vector<8x256xf32>
    %91 = vector.extract_strided_slice %76 {offsets = [0, 768], sizes = [8, 256], strides = [1, 1]} : vector<8x1024xf32> to vector<8x256xf32>
    %92 = arith.negf %91 : vector<8x256xf32>
    %93 = math.exp %92 : vector<8x256xf32>
    %cst_26 = arith.constant 1.000000e+00 : f32
    %94 = vector.broadcast %cst_26 : f32 to vector<8x256xf32>
    %95 = arith.addf %94, %93 : vector<8x256xf32>
    %96 = arith.divf %94, %95 : vector<8x256xf32>
    %97 = arith.mulf %88, %68 : vector<8x256xf32>
    %98 = arith.mulf %82, %90 : vector<8x256xf32>
    %99 = arith.addf %97, %98 : vector<8x256xf32>
    %100 = math.tanh %99 : vector<8x256xf32>
    %101 = arith.mulf %96, %100 : vector<8x256xf32>
    %c3_i32 = arith.constant 3 : i32
    %c8_i32_27 = arith.constant 8 : i32
    %102 = arith.muli %c3_i32, %c8_i32_27 : i32
    %103 = arith.index_cast %102 : i32 to index
    %c0_28 = arith.constant 0 : index
    %104 = vector.load %arg10[%103, %c0_28] : memref<64x1024xf32, #tpu.memory_space<vmem>>, vector<8x1024xf32>
    %105 = arith.truncf %101 : vector<8x256xf32> to vector<8x256xbf16>
    %cst_29 = arith.constant dense<0.000000e+00> : vector<8x1024xf32>
    %106 = tpu.matmul %105, %7, %cst_29 {dimension_numbers = #tpu.dot_dimension_numbers<[1], [0], [0], [1], [0, 0, 1, 1], [], []>} : vector<8x256xbf16>, vector<256x1024xbf16>, vector<8x1024xf32> -> vector<8x1024xf32>
    %107 = arith.addf %104, %106 : vector<8x1024xf32>
    %108 = vector.extract_strided_slice %107 {offsets = [0, 0], sizes = [8, 256], strides = [1, 1]} : vector<8x1024xf32> to vector<8x256xf32>
    %109 = arith.negf %108 : vector<8x256xf32>
    %110 = math.exp %109 : vector<8x256xf32>
    %cst_30 = arith.constant 1.000000e+00 : f32
    %111 = vector.broadcast %cst_30 : f32 to vector<8x256xf32>
    %112 = arith.addf %111, %110 : vector<8x256xf32>
    %113 = arith.divf %111, %112 : vector<8x256xf32>
    %114 = vector.extract_strided_slice %107 {offsets = [0, 256], sizes = [8, 256], strides = [1, 1]} : vector<8x1024xf32> to vector<8x256xf32>
    %115 = arith.negf %114 : vector<8x256xf32>
    %116 = math.exp %115 : vector<8x256xf32>
    %cst_31 = arith.constant 1.000000e+00 : f32
    %117 = vector.broadcast %cst_31 : f32 to vector<8x256xf32>
    %118 = arith.addf %117, %116 : vector<8x256xf32>
    %119 = arith.divf %117, %118 : vector<8x256xf32>
    %120 = vector.extract_strided_slice %107 {offsets = [0, 512], sizes = [8, 256], strides = [1, 1]} : vector<8x1024xf32> to vector<8x256xf32>
    %121 = math.tanh %120 : vector<8x256xf32>
    %122 = vector.extract_strided_slice %107 {offsets = [0, 768], sizes = [8, 256], strides = [1, 1]} : vector<8x1024xf32> to vector<8x256xf32>
    %123 = arith.negf %122 : vector<8x256xf32>
    %124 = math.exp %123 : vector<8x256xf32>
    %cst_32 = arith.constant 1.000000e+00 : f32
    %125 = vector.broadcast %cst_32 : f32 to vector<8x256xf32>
    %126 = arith.addf %125, %124 : vector<8x256xf32>
    %127 = arith.divf %125, %126 : vector<8x256xf32>
    %128 = arith.mulf %119, %99 : vector<8x256xf32>
    %129 = arith.mulf %113, %121 : vector<8x256xf32>
    %130 = arith.addf %128, %129 : vector<8x256xf32>
    %131 = math.tanh %130 : vector<8x256xf32>
    %132 = arith.mulf %127, %131 : vector<8x256xf32>
    %c4_i32 = arith.constant 4 : i32
    %c8_i32_33 = arith.constant 8 : i32
    %133 = arith.muli %c4_i32, %c8_i32_33 : i32
    %134 = arith.index_cast %133 : i32 to index
    %c0_34 = arith.constant 0 : index
    %135 = vector.load %arg10[%134, %c0_34] : memref<64x1024xf32, #tpu.memory_space<vmem>>, vector<8x1024xf32>
    %136 = arith.truncf %132 : vector<8x256xf32> to vector<8x256xbf16>
    %cst_35 = arith.constant dense<0.000000e+00> : vector<8x1024xf32>
    %137 = tpu.matmul %136, %7, %cst_35 {dimension_numbers = #tpu.dot_dimension_numbers<[1], [0], [0], [1], [0, 0, 1, 1], [], []>} : vector<8x256xbf16>, vector<256x1024xbf16>, vector<8x1024xf32> -> vector<8x1024xf32>
    %138 = arith.addf %135, %137 : vector<8x1024xf32>
    %139 = vector.extract_strided_slice %138 {offsets = [0, 0], sizes = [8, 256], strides = [1, 1]} : vector<8x1024xf32> to vector<8x256xf32>
    %140 = arith.negf %139 : vector<8x256xf32>
    %141 = math.exp %140 : vector<8x256xf32>
    %cst_36 = arith.constant 1.000000e+00 : f32
    %142 = vector.broadcast %cst_36 : f32 to vector<8x256xf32>
    %143 = arith.addf %142, %141 : vector<8x256xf32>
    %144 = arith.divf %142, %143 : vector<8x256xf32>
    %145 = vector.extract_strided_slice %138 {offsets = [0, 256], sizes = [8, 256], strides = [1, 1]} : vector<8x1024xf32> to vector<8x256xf32>
    %146 = arith.negf %145 : vector<8x256xf32>
    %147 = math.exp %146 : vector<8x256xf32>
    %cst_37 = arith.constant 1.000000e+00 : f32
    %148 = vector.broadcast %cst_37 : f32 to vector<8x256xf32>
    %149 = arith.addf %148, %147 : vector<8x256xf32>
    %150 = arith.divf %148, %149 : vector<8x256xf32>
    %151 = vector.extract_strided_slice %138 {offsets = [0, 512], sizes = [8, 256], strides = [1, 1]} : vector<8x1024xf32> to vector<8x256xf32>
    %152 = math.tanh %151 : vector<8x256xf32>
    %153 = vector.extract_strided_slice %138 {offsets = [0, 768], sizes = [8, 256], strides = [1, 1]} : vector<8x1024xf32> to vector<8x256xf32>
    %154 = arith.negf %153 : vector<8x256xf32>
    %155 = math.exp %154 : vector<8x256xf32>
    %cst_38 = arith.constant 1.000000e+00 : f32
    %156 = vector.broadcast %cst_38 : f32 to vector<8x256xf32>
    %157 = arith.addf %156, %155 : vector<8x256xf32>
    %158 = arith.divf %156, %157 : vector<8x256xf32>
    %159 = arith.mulf %150, %130 : vector<8x256xf32>
    %160 = arith.mulf %144, %152 : vector<8x256xf32>
    %161 = arith.addf %159, %160 : vector<8x256xf32>
    %162 = math.tanh %161 : vector<8x256xf32>
    %163 = arith.mulf %158, %162 : vector<8x256xf32>
    %c5_i32 = arith.constant 5 : i32
    %c8_i32_39 = arith.constant 8 : i32
    %164 = arith.muli %c5_i32, %c8_i32_39 : i32
    %165 = arith.index_cast %164 : i32 to index
    %c0_40 = arith.constant 0 : index
    %166 = vector.load %arg10[%165, %c0_40] : memref<64x1024xf32, #tpu.memory_space<vmem>>, vector<8x1024xf32>
    %167 = arith.truncf %163 : vector<8x256xf32> to vector<8x256xbf16>
    %cst_41 = arith.constant dense<0.000000e+00> : vector<8x1024xf32>
    %168 = tpu.matmul %167, %7, %cst_41 {dimension_numbers = #tpu.dot_dimension_numbers<[1], [0], [0], [1], [0, 0, 1, 1], [], []>} : vector<8x256xbf16>, vector<256x1024xbf16>, vector<8x1024xf32> -> vector<8x1024xf32>
    %169 = arith.addf %166, %168 : vector<8x1024xf32>
    %170 = vector.extract_strided_slice %169 {offsets = [0, 0], sizes = [8, 256], strides = [1, 1]} : vector<8x1024xf32> to vector<8x256xf32>
    %171 = arith.negf %170 : vector<8x256xf32>
    %172 = math.exp %171 : vector<8x256xf32>
    %cst_42 = arith.constant 1.000000e+00 : f32
    %173 = vector.broadcast %cst_42 : f32 to vector<8x256xf32>
    %174 = arith.addf %173, %172 : vector<8x256xf32>
    %175 = arith.divf %173, %174 : vector<8x256xf32>
    %176 = vector.extract_strided_slice %169 {offsets = [0, 256], sizes = [8, 256], strides = [1, 1]} : vector<8x1024xf32> to vector<8x256xf32>
    %177 = arith.negf %176 : vector<8x256xf32>
    %178 = math.exp %177 : vector<8x256xf32>
    %cst_43 = arith.constant 1.000000e+00 : f32
    %179 = vector.broadcast %cst_43 : f32 to vector<8x256xf32>
    %180 = arith.addf %179, %178 : vector<8x256xf32>
    %181 = arith.divf %179, %180 : vector<8x256xf32>
    %182 = vector.extract_strided_slice %169 {offsets = [0, 512], sizes = [8, 256], strides = [1, 1]} : vector<8x1024xf32> to vector<8x256xf32>
    %183 = math.tanh %182 : vector<8x256xf32>
    %184 = vector.extract_strided_slice %169 {offsets = [0, 768], sizes = [8, 256], strides = [1, 1]} : vector<8x1024xf32> to vector<8x256xf32>
    %185 = arith.negf %184 : vector<8x256xf32>
    %186 = math.exp %185 : vector<8x256xf32>
    %cst_44 = arith.constant 1.000000e+00 : f32
    %187 = vector.broadcast %cst_44 : f32 to vector<8x256xf32>
    %188 = arith.addf %187, %186 : vector<8x256xf32>
    %189 = arith.divf %187, %188 : vector<8x256xf32>
    %190 = arith.mulf %181, %161 : vector<8x256xf32>
    %191 = arith.mulf %175, %183 : vector<8x256xf32>
    %192 = arith.addf %190, %191 : vector<8x256xf32>
    %193 = math.tanh %192 : vector<8x256xf32>
    %194 = arith.mulf %189, %193 : vector<8x256xf32>
    %c6_i32 = arith.constant 6 : i32
    %c8_i32_45 = arith.constant 8 : i32
    %195 = arith.muli %c6_i32, %c8_i32_45 : i32
    %196 = arith.index_cast %195 : i32 to index
    %c0_46 = arith.constant 0 : index
    %197 = vector.load %arg10[%196, %c0_46] : memref<64x1024xf32, #tpu.memory_space<vmem>>, vector<8x1024xf32>
    %198 = arith.truncf %194 : vector<8x256xf32> to vector<8x256xbf16>
    %cst_47 = arith.constant dense<0.000000e+00> : vector<8x1024xf32>
    %199 = tpu.matmul %198, %7, %cst_47 {dimension_numbers = #tpu.dot_dimension_numbers<[1], [0], [0], [1], [0, 0, 1, 1], [], []>} : vector<8x256xbf16>, vector<256x1024xbf16>, vector<8x1024xf32> -> vector<8x1024xf32>
    %200 = arith.addf %197, %199 : vector<8x1024xf32>
    %201 = vector.extract_strided_slice %200 {offsets = [0, 0], sizes = [8, 256], strides = [1, 1]} : vector<8x1024xf32> to vector<8x256xf32>
    %202 = arith.negf %201 : vector<8x256xf32>
    %203 = math.exp %202 : vector<8x256xf32>
    %cst_48 = arith.constant 1.000000e+00 : f32
    %204 = vector.broadcast %cst_48 : f32 to vector<8x256xf32>
    %205 = arith.addf %204, %203 : vector<8x256xf32>
    %206 = arith.divf %204, %205 : vector<8x256xf32>
    %207 = vector.extract_strided_slice %200 {offsets = [0, 256], sizes = [8, 256], strides = [1, 1]} : vector<8x1024xf32> to vector<8x256xf32>
    %208 = arith.negf %207 : vector<8x256xf32>
    %209 = math.exp %208 : vector<8x256xf32>
    %cst_49 = arith.constant 1.000000e+00 : f32
    %210 = vector.broadcast %cst_49 : f32 to vector<8x256xf32>
    %211 = arith.addf %210, %209 : vector<8x256xf32>
    %212 = arith.divf %210, %211 : vector<8x256xf32>
    %213 = vector.extract_strided_slice %200 {offsets = [0, 512], sizes = [8, 256], strides = [1, 1]} : vector<8x1024xf32> to vector<8x256xf32>
    %214 = math.tanh %213 : vector<8x256xf32>
    %215 = vector.extract_strided_slice %200 {offsets = [0, 768], sizes = [8, 256], strides = [1, 1]} : vector<8x1024xf32> to vector<8x256xf32>
    %216 = arith.negf %215 : vector<8x256xf32>
    %217 = math.exp %216 : vector<8x256xf32>
    %cst_50 = arith.constant 1.000000e+00 : f32
    %218 = vector.broadcast %cst_50 : f32 to vector<8x256xf32>
    %219 = arith.addf %218, %217 : vector<8x256xf32>
    %220 = arith.divf %218, %219 : vector<8x256xf32>
    %221 = arith.mulf %212, %192 : vector<8x256xf32>
    %222 = arith.mulf %206, %214 : vector<8x256xf32>
    %223 = arith.addf %221, %222 : vector<8x256xf32>
    %224 = math.tanh %223 : vector<8x256xf32>
    %225 = arith.mulf %220, %224 : vector<8x256xf32>
    %c7_i32 = arith.constant 7 : i32
    %c8_i32_51 = arith.constant 8 : i32
    %226 = arith.muli %c7_i32, %c8_i32_51 : i32
    %227 = arith.index_cast %226 : i32 to index
    %c0_52 = arith.constant 0 : index
    %228 = vector.load %arg10[%227, %c0_52] : memref<64x1024xf32, #tpu.memory_space<vmem>>, vector<8x1024xf32>
    %229 = arith.truncf %225 : vector<8x256xf32> to vector<8x256xbf16>
    %cst_53 = arith.constant dense<0.000000e+00> : vector<8x1024xf32>
    %230 = tpu.matmul %229, %7, %cst_53 {dimension_numbers = #tpu.dot_dimension_numbers<[1], [0], [0], [1], [0, 0, 1, 1], [], []>} : vector<8x256xbf16>, vector<256x1024xbf16>, vector<8x1024xf32> -> vector<8x1024xf32>
    %231 = arith.addf %228, %230 : vector<8x1024xf32>
    %232 = vector.extract_strided_slice %231 {offsets = [0, 0], sizes = [8, 256], strides = [1, 1]} : vector<8x1024xf32> to vector<8x256xf32>
    %233 = arith.negf %232 : vector<8x256xf32>
    %234 = math.exp %233 : vector<8x256xf32>
    %cst_54 = arith.constant 1.000000e+00 : f32
    %235 = vector.broadcast %cst_54 : f32 to vector<8x256xf32>
    %236 = arith.addf %235, %234 : vector<8x256xf32>
    %237 = arith.divf %235, %236 : vector<8x256xf32>
    %238 = vector.extract_strided_slice %231 {offsets = [0, 256], sizes = [8, 256], strides = [1, 1]} : vector<8x1024xf32> to vector<8x256xf32>
    %239 = arith.negf %238 : vector<8x256xf32>
    %240 = math.exp %239 : vector<8x256xf32>
    %cst_55 = arith.constant 1.000000e+00 : f32
    %241 = vector.broadcast %cst_55 : f32 to vector<8x256xf32>
    %242 = arith.addf %241, %240 : vector<8x256xf32>
    %243 = arith.divf %241, %242 : vector<8x256xf32>
    %244 = vector.extract_strided_slice %231 {offsets = [0, 512], sizes = [8, 256], strides = [1, 1]} : vector<8x1024xf32> to vector<8x256xf32>
    %245 = math.tanh %244 : vector<8x256xf32>
    %246 = vector.extract_strided_slice %231 {offsets = [0, 768], sizes = [8, 256], strides = [1, 1]} : vector<8x1024xf32> to vector<8x256xf32>
    %247 = arith.negf %246 : vector<8x256xf32>
    %248 = math.exp %247 : vector<8x256xf32>
    %cst_56 = arith.constant 1.000000e+00 : f32
    %249 = vector.broadcast %cst_56 : f32 to vector<8x256xf32>
    %250 = arith.addf %249, %248 : vector<8x256xf32>
    %251 = arith.divf %249, %250 : vector<8x256xf32>
    %252 = arith.mulf %243, %223 : vector<8x256xf32>
    %253 = arith.mulf %237, %245 : vector<8x256xf32>
    %254 = arith.addf %252, %253 : vector<8x256xf32>
    %255 = math.tanh %254 : vector<8x256xf32>
    %256 = arith.mulf %251, %255 : vector<8x256xf32>
    %c8_i32_57 = arith.constant 8 : i32
    %c56 = arith.constant 56 : index
    %c0_58 = arith.constant 0 : index
    %257 = vector.load %arg1[%c56, %c0_58] : memref<64x225xbf16, #tpu.memory_space<vmem>>, vector<8x225xbf16>
    %c0_59 = arith.constant 0 : index
    %c0_60 = arith.constant 0 : index
    %258 = vector.load %arg5[%c0_59, %c0_60] : memref<225x1024xbf16, #tpu.memory_space<vmem>>, vector<225x1024xbf16>
    %cst_61 = arith.constant dense<0.000000e+00> : vector<8x1024xf32>
    %259 = tpu.matmul %257, %258, %cst_61 {dimension_numbers = #tpu.dot_dimension_numbers<[1], [0], [0], [1], [0, 0, 1, 1], [], []>} : vector<8x225xbf16>, vector<225x1024xbf16>, vector<8x1024xf32> -> vector<8x1024xf32>
    %c0_62 = arith.constant 0 : index
    %c0_63 = arith.constant 0 : index
    %260 = vector.load %arg6[%c0_62, %c0_63] : memref<1x1024xf32, #tpu.memory_space<vmem>>, vector<1x1024xf32>
    %261 = vector.broadcast %260 : vector<1x1024xf32> to vector<8x1024xf32>
    %262 = arith.addf %259, %261 : vector<8x1024xf32>
    %263 = vector.extract_strided_slice %262 {offsets = [0, 0], sizes = [8, 256], strides = [1, 1]} : vector<8x1024xf32> to vector<8x256xf32>
    %264 = arith.negf %263 : vector<8x256xf32>
    %265 = math.exp %264 : vector<8x256xf32>
    %cst_64 = arith.constant 1.000000e+00 : f32
    %266 = vector.broadcast %cst_64 : f32 to vector<8x256xf32>
    %267 = arith.addf %266, %265 : vector<8x256xf32>
    %268 = arith.divf %266, %267 : vector<8x256xf32>
    %269 = vector.extract_strided_slice %262 {offsets = [0, 512], sizes = [8, 256], strides = [1, 1]} : vector<8x1024xf32> to vector<8x256xf32>
    %270 = math.tanh %269 : vector<8x256xf32>
    %271 = vector.extract_strided_slice %262 {offsets = [0, 768], sizes = [8, 256], strides = [1, 1]} : vector<8x1024xf32> to vector<8x256xf32>
    %272 = arith.negf %271 : vector<8x256xf32>
    %273 = math.exp %272 : vector<8x256xf32>
    %cst_65 = arith.constant 1.000000e+00 : f32
    %274 = vector.broadcast %cst_65 : f32 to vector<8x256xf32>
    %275 = arith.addf %274, %273 : vector<8x256xf32>
    %276 = arith.divf %274, %275 : vector<8x256xf32>
    %277 = arith.mulf %268, %270 : vector<8x256xf32>
    %278 = math.tanh %277 : vector<8x256xf32>
    %279 = arith.mulf %276, %278 : vector<8x256xf32>
    %280 = tpu.concatenate %256, %279 in 1 : vector<8x256xf32>, vector<8x256xf32> -> vector<8x512xf32>
    %281 = arith.truncf %280 : vector<8x512xf32> to vector<8x512xbf16>
    %c0_66 = arith.constant 0 : index
    %c0_67 = arith.constant 0 : index
    %282 = vector.load %arg7[%c0_66, %c0_67] : memref<512x128xbf16, #tpu.memory_space<vmem>>, vector<512x128xbf16>
    %cst_68 = arith.constant dense<0.000000e+00> : vector<8x128xf32>
    %283 = tpu.matmul %281, %282, %cst_68 {dimension_numbers = #tpu.dot_dimension_numbers<[1], [0], [0], [1], [0, 0, 1, 1], [], []>} : vector<8x512xbf16>, vector<512x128xbf16>, vector<8x128xf32> -> vector<8x128xf32>
    %c0_69 = arith.constant 0 : index
    %c0_70 = arith.constant 0 : index
    %284 = vector.load %arg8[%c0_69, %c0_70] : memref<1x128xf32, #tpu.memory_space<vmem>>, vector<1x128xf32>
    %285 = vector.broadcast %284 : vector<1x128xf32> to vector<8x128xf32>
    %286 = arith.addf %283, %285 : vector<8x128xf32>
    %c0_71 = arith.constant 0 : index
    %c0_72 = arith.constant 0 : index
    %287 = vector.load %arg9[%c0_71, %c0_72] : memref<8x128xf32, #tpu.memory_space<vmem>>, vector<8x128xf32>
    tpu.vector_store %arg9[%c0_71, %c0_72], %286 {strides = array<i32>} : memref<8x128xf32, #tpu.memory_space<vmem>>, vector<8x128xf32>,
    return
  }
  func.func @transform_0(%arg0: i32) -> (i32, i32) {
    %c0_i32 = arith.constant 0 : i32
    %c0_i32_0 = arith.constant 0 : i32
    %c0_i32_1 = arith.constant 0 : i32
    return %c0_i32, %c0_i32_0 : i32, i32
  }
  func.func @transform_1(%arg0: i32) -> (i32, i32) {
    %c0_i32 = arith.constant 0 : i32
    %c0_i32_0 = arith.constant 0 : i32
    %c0_i32_1 = arith.constant 0 : i32
    return %c0_i32, %c0_i32_0 : i32, i32
  }
  func.func @transform_2(%arg0: i32) -> (i32, i32) {
    %c0_i32 = arith.constant 0 : i32
    %c0_i32_0 = arith.constant 0 : i32
    %c0_i32_1 = arith.constant 0 : i32
    return %c0_i32, %c0_i32_0 : i32, i32
  }
  func.func @transform_3(%arg0: i32) -> (i32, i32) {
    %c0_i32 = arith.constant 0 : i32
    %c0_i32_0 = arith.constant 0 : i32
    %c0_i32_1 = arith.constant 0 : i32
    return %c0_i32, %c0_i32_0 : i32, i32
  }
  func.func @transform_4(%arg0: i32) -> (i32, i32) {
    %c0_i32 = arith.constant 0 : i32
    %c0_i32_0 = arith.constant 0 : i32
    %c0_i32_1 = arith.constant 0 : i32
    return %c0_i32, %c0_i32_0 : i32, i32
  }
  func.func @transform_5(%arg0: i32) -> (i32, i32) {
    %c0_i32 = arith.constant 0 : i32
    %c0_i32_0 = arith.constant 0 : i32
    %c0_i32_1 = arith.constant 0 : i32
    return %c0_i32, %c0_i32_0 : i32, i32
  }
  func.func @transform_6(%arg0: i32) -> (i32, i32) {
    %c0_i32 = arith.constant 0 : i32
    %c0_i32_0 = arith.constant 0 : i32
    %c0_i32_1 = arith.constant 0 : i32
    return %c0_i32, %c0_i32_0 : i32, i32
  }
  func.func @transform_7(%arg0: i32) -> (i32, i32) {
    %c0_i32 = arith.constant 0 : i32
    %c0_i32_0 = arith.constant 0 : i32
    %c0_i32_1 = arith.constant 0 : i32
    return %c0_i32, %c0_i32_0 : i32, i32
  }
  func.func @transform_8(%arg0: i32) -> (i32, i32) {
    %c0_i32 = arith.constant 0 : i32
    %c0_i32_0 = arith.constant 0 : i32
    %c0_i32_1 = arith.constant 0 : i32
    return %c0_i32, %c0_i32_0 : i32, i32
  }
}

</mosaic_0001>

<llo_original>
// kernel: tpu_custom_call.1
$region0: #{tpu_custom_call.1}
  #allocation0 [shape = 'u32[]', space=smem, size = 0x4, offset = 0x4, fixed_abs, tag = 'smem constant byte address 0x4 - core index']
  #allocation1 [shape = 'u32[144,128]{1,0:T(1,128)}', space=vmem, size = 0x12000, scoped, tag = 'internal scratch']
  #allocation2 [shape = 'f32[64,1024]{1,0:T(8,128)}', space=vmem, size = 0x40000, scoped, tag = 'scratch operand']
  %s0 = inlined_call_operand.hbm [shape: bf16[64,225], index: 0, kind: input, shape index: {}]
  %s1 = inlined_call_operand.hbm [shape: bf16[225,1024], index: 1, kind: input, shape index: {}]
  %s2 = inlined_call_operand.hbm [shape: bf16[256,1024], index: 2, kind: input, shape index: {}]
  %s3 = inlined_call_operand.vmem [shape: f32[1,1024], index: 3, kind: input, shape index: {}]
  %s4 = inlined_call_operand.hbm [shape: bf16[225,1024], index: 4, kind: input, shape index: {}]
  %s5 = inlined_call_operand.vmem [shape: f32[1,1024], index: 5, kind: input, shape index: {}]
  %s6 = inlined_call_operand.hbm [shape: bf16[512,128], index: 6, kind: input, shape index: {}]
  %s7 = inlined_call_operand.vmem [shape: f32[1,128], index: 7, kind: input, shape index: {}]
  %s8 = inlined_call_operand.hbm [shape: f32[8,128], index: 8, kind: output, shape index: {}]
  %s9 = sld [smem:[#allocation0]]
  $region62: #{tpu_custom_call.1} parent=0
    _
  %s11 = ssub.s32 1, %s9
  %s12 = scalar_select 0, %s11, %s9
  $region1: #{tpu_custom_call.1} parent=0
    #allocation3 [shape = 'u8[32768]{0}', space=vmem, size = 0x8000, scoped, tag = 'input window, operand 0, single buffered']
    #allocation4 [shape = 's32[1]{0}', space=sflag, size = 0x4, scoped, tag = 'scoped memory for tpu_custom_call.1']
    #allocation5 [shape = 's32[1]{0}', space=sflag, size = 0x4, scoped, tag = 'scoped memory for tpu_custom_call.1']
    #allocation6 [shape = 'u8[475136]{0}', space=vmem, size = 0x74000, scoped, tag = 'input window, operand 1, single buffered']
    #allocation7 [shape = 's32[1]{0}', space=sflag, size = 0x4, scoped, tag = 'scoped memory for tpu_custom_call.1']
    #allocation8 [shape = 'u8[524288]{0}', space=vmem, size = 0x80000, scoped, tag = 'input window, operand 2, single buffered']
    #allocation9 [shape = 'u8[475136]{0}', space=vmem, size = 0x74000, scoped, tag = 'input window, operand 4, single buffered']
    #allocation10 [shape = 's32[1]{0}', space=sflag, size = 0x4, scoped, tag = 'scoped memory for tpu_custom_call.1']
    #allocation11 [shape = 'u8[131072]{0}', space=vmem, size = 0x20000, scoped, tag = 'input window, operand 6, single buffered']
    #allocation12 [shape = 'u8[4096]{0}', space=vmem, size = 0x1000, scoped, tag = 'output window, operand 0, single buffered']
    %13 = vsyncpa [#allocation4], 0
    %14 = vsyncpa [#allocation7], 0
    %15 = vsyncpa [#allocation10], 0
    %16 = vsyncpa [#allocation5], 0
    // Predicated region
    $region2: #{tpu_custom_call.1} parent=1 // pred_check
      _
    $region3: #{tpu_custom_call.1} parent=1 // pred_check_branch
      %18 = sbr.rel (0) target = $region5
    $region4: #{tpu_custom_call.1} parent=1 // pred_region
      %s20 = ssub.s32 1024, 1024
      %21 = vsyncadd [#allocation4], %s20
      %s22 = sshll.u32 [#allocation3], 4
      %s23 = int_to_ptr.vmem [resolvable:$true] %s22
      %28 = dma.hbm_to_vmem [thread:$0]  %s0, 1024, %s23, [#allocation4], 128, 128, 8
    $region5: #{tpu_custom_call.1} parent=1 // pred_fallthru
      _
    // Predicated region
    $region6: #{tpu_custom_call.1} parent=1 // pred_check
      _
    $region7: #{tpu_custom_call.1} parent=1 // pred_check_branch
      %30 = sbr.rel (0) target = $region9
    $region8: #{tpu_custom_call.1} parent=1 // pred_region
      %s32 = ssub.s32 14848, 14848
      %33 = vsyncadd [#allocation7], %s32
      %s34 = sshll.u32 [#allocation6], 4
      %s35 = int_to_ptr.vmem [resolvable:$true] %s34
      %40 = dma.hbm_to_vmem [thread:$0]  %s1, 14848, %s35, [#allocation7], 512, 512, 32
    $region9: #{tpu_custom_call.1} parent=1 // pred_fallthru
      _
    // Predicated region
    $region10: #{tpu_custom_call.1} parent=1 // pred_check
      _
    $region11: #{tpu_custom_call.1} parent=1 // pred_check_branch
      %42 = sbr.rel (0) target = $region13
    $region12: #{tpu_custom_call.1} parent=1 // pred_region
      %s44 = ssub.s32 16384, 16384
      %45 = vsyncadd [#allocation7], %s44
      %s46 = sshll.u32 [#allocation8], 4
      %s47 = int_to_ptr.vmem [resolvable:$true] %s46
      %52 = dma.hbm_to_vmem [thread:$0]  %s2, 16384, %s47, [#allocation7], 512, 512, 32
    $region13: #{tpu_custom_call.1} parent=1 // pred_fallthru
      _
    // Predicated region
    $region14: #{tpu_custom_call.1} parent=1 // pred_check
      _
    $region15: #{tpu_custom_call.1} parent=1 // pred_check_branch
      %54 = sbr.rel (0) target = $region17
    $region16: #{tpu_custom_call.1} parent=1 // pred_region
      _
    $region17: #{tpu_custom_call.1} parent=1 // pred_fallthru
      _
    // Predicated region
    $region18: #{tpu_custom_call.1} parent=1 // pred_check
      _
    $region19: #{tpu_custom_call.1} parent=1 // pred_check_branch
      %56 = sbr.rel (0) target = $region21
    $region20: #{tpu_custom_call.1} parent=1 // pred_region
      %s58 = ssub.s32 14848, 14848
      %59 = vsyncadd [#allocation10], %s58
      %s60 = sshll.u32 [#allocation9], 4
      %s61 = int_to_ptr.vmem [resolvable:$true] %s60
      %66 = dma.hbm_to_vmem [thread:$0]  %s4, 14848, %s61, [#allocation10], 512, 512, 32
    $region21: #{tpu_custom_call.1} parent=1 // pred_fallthru
      _
    // Predicated region
    $region22: #{tpu_custom_call.1} parent=1 // pred_check
      _
    $region23: #{tpu_custom_call.1} parent=1 // pred_check_branch
      %68 = sbr.rel (0) target = $region25
    $region24: #{tpu_custom_call.1} parent=1 // pred_region
      _
    $region25: #{tpu_custom_call.1} parent=1 // pred_fallthru
      _
    // Predicated region
    $region26: #{tpu_custom_call.1} parent=1 // pred_check
      _
    $region27: #{tpu_custom_call.1} parent=1 // pred_check_branch
      %70 = sbr.rel (0) target = $region29
    $region28: #{tpu_custom_call.1} parent=1 // pred_region
      %s72 = ssub.s32 4096, 4096
      %73 = vsyncadd [#allocation10], %s72
      %s74 = sshll.u32 [#allocation11], 4
      %s75 = int_to_ptr.vmem [resolvable:$true] %s74
      %80 = dma.hbm_to_vmem [thread:$0]  %s6, 4096, %s75, [#allocation10], 64, 64, 4
    $region29: #{tpu_custom_call.1} parent=1 // pred_fallthru
      _
    // Predicated region
    $region30: #{tpu_custom_call.1} parent=1 // pred_check
      _
    $region31: #{tpu_custom_call.1} parent=1 // pred_check_branch
      %82 = sbr.rel (0) target = $region33
    $region32: #{tpu_custom_call.1} parent=1 // pred_region
      _
    $region33: #{tpu_custom_call.1} parent=1 // pred_fallthru
      _
    // Predicated region
    $region34: #{tpu_custom_call.1} parent=1 // pred_check
      _
    $region35: #{tpu_custom_call.1} parent=1 // pred_check_branch
      %84 = sbr.rel (0) target = $region37
    $region36: #{tpu_custom_call.1} parent=1 // pred_region
      %85 = dma.done [#allocation4], 1024
    $region37: #{tpu_custom_call.1} parent=1 // pred_fallthru
      _
    // Predicated region
    $region38: #{tpu_custom_call.1} parent=1 // pred_check
      _
    $region39: #{tpu_custom_call.1} parent=1 // pred_check_branch
      %87 = sbr.rel (0) target = $region41
    $region40: #{tpu_custom_call.1} parent=1 // pred_region
      %88 = dma.done [#allocation7], 14848
    $region41: #{tpu_custom_call.1} parent=1 // pred_fallthru
      _
    // Predicated region
    $region42: #{tpu_custom_call.1} parent=1 // pred_check
      _
    $region43: #{tpu_custom_call.1} parent=1 // pred_check_branch
      %90 = sbr.rel (0) target = $region45
    $region44: #{tpu_custom_call.1} parent=1 // pred_region
      %91 = dma.done [#allocation7], 16384
    $region45: #{tpu_custom_call.1} parent=1 // pred_fallthru
      _
    // Predicated region
    $region46: #{tpu_custom_call.1} parent=1 // pred_check
      _
    $region47: #{tpu_custom_call.1} parent=1 // pred_check_branch
      %93 = sbr.rel (0) target = $region49
    $region48: #{tpu_custom_call.1} parent=1 // pred_region
      %94 = dma.done [#allocation10], 14848
    $region49: #{tpu_custom_call.1} parent=1 // pred_fallthru
      _
    // Predicated region
    $region50: #{tpu_custom_call.1} parent=1 // pred_check
      _
    $region51: #{tpu_custom_call.1} parent=1 // pred_check_branch
      %96 = sbr.rel (0) target = $region53
    $region52: #{tpu_custom_call.1} parent=1 // pred_region
      %97 = dma.done [#allocation10], 4096
    $region53: #{tpu_custom_call.1} parent=1 // pred_fallthru
      _
    %v99 = vld [vmem:[#allocation3] sm:$0xff]
    %v100 = vld [vmem:[#allocation3 + $0x8] sm:$0xff]
    %v101 = vld [vmem:[#allocation3 + $0x10] sm:$0xff]
    %v102 = vld [vmem:[#allocation3 + $0x18] sm:$0xff]
    %v103 = vld [vmem:[#allocation3 + $0x20] sm:$0xff]
    %v104 = vld [vmem:[#allocation3 + $0x28] sm:$0xff]
    %v105 = vld [vmem:[#allocation3 + $0x30] sm:$0xff]
    %v106 = vld [vmem:[#allocation3 + $0x38] sm:$0xff]
    %v107 = vld [vmem:[#allocation6] sm:$0xff]
    %v108 = vld [vmem:[#allocation6 + $0x8] sm:$0xff]
    %v109 = vld [vmem:[#allocation6 + $0x10] sm:$0xff]
    %v110 = vld [vmem:[#allocation6 + $0x18] sm:$0xff]
    %v111 = vld [vmem:[#allocation6 + $0x20] sm:$0xff]
    %v112 = vld [vmem:[#allocation6 + $0x28] sm:$0xff]
    %v113 = vld [vmem:[#allocation6 + $0x30] sm:$0xff]
    %v114 = vld [vmem:[#allocation6 + $0x38] sm:$0xff]
    %v115 = vld [vmem:[#allocation6 + $0x40] sm:$0xff]
    %v116 = vld [vmem:[#allocation6 + $0x48] sm:$0xff]
    %v117 = vld [vmem:[#allocation6 + $0x50] sm:$0xff]
    %v118 = vld [vmem:[#allocation6 + $0x58] sm:$0xff]
    %v119 = vld [vmem:[#allocation6 + $0x60] sm:$0xff]
    %v120 = vld [vmem:[#allocation6 + $0x68] sm:$0xff]
    %v121 = vld [vmem:[#allocation6 + $0x70] sm:$0xff]
    %v122 = vld [vmem:[#allocation6 + $0x78] sm:$0xff]
    %v123 = vld [vmem:[#allocation6 + $0x80] sm:$0xff]
    %v124 = vld [vmem:[#allocation6 + $0x88] sm:$0xff]
    %v125 = vld [vmem:[#allocation6 + $0x90] sm:$0xff]
    %v126 = vld [vmem:[#allocation6 + $0x98] sm:$0xff]
    %v127 = vld [vmem:[#allocation6 + $0xa0] sm:$0xff]
    %v128 = vld [vmem:[#allocation6 + $0xa8] sm:$0xff]
    %v129 = vld [vmem:[#allocation6 + $0xb0] sm:$0xff]
    %v130 = vld [vmem:[#allocation6 + $0xb8] sm:$0xff]
    %v131 = vld [vmem:[#allocation6 + $0xc0] sm:$0xff]
    %v132 = vld [vmem:[#allocation6 + $0xc8] sm:$0xff]
    %v133 = vld [vmem:[#allocation6 + $0xd0] sm:$0xff]
    %v134 = vld [vmem:[#allocation6 + $0xd8] sm:$0xff]
    %v135 = vld [vmem:[#allocation6 + $0xe0] sm:$0xff]
    %v136 = vld [vmem:[#allocation6 + $0xe8] sm:$0xff]
    %v137 = vld [vmem:[#allocation6 + $0xf0] sm:$0xff]
    %v138 = vld [vmem:[#allocation6 + $0xf8] sm:$0xff]
    %v139 = vld [vmem:[#allocation6 + $0x100] sm:$0xff]
    %v140 = vld [vmem:[#allocation6 + $0x108] sm:$0xff]
    %v141 = vld [vmem:[#allocation6 + $0x110] sm:$0xff]
    %v142 = vld [vmem:[#allocation6 + $0x118] sm:$0xff]
    %v143 = vld [vmem:[#allocation6 + $0x120] sm:$0xff]
    %v144 = vld [vmem:[#allocation6 + $0x128] sm:$0xff]
    %v145 = vld [vmem:[#allocation6 + $0x130] sm:$0xff]
    %v146 = vld [vmem:[#allocation6 + $0x138] sm:$0xff]
    %v147 = vld [vmem:[#allocation6 + $0x140] sm:$0xff]
    %v148 = vld [vmem:[#allocation6 + $0x148] sm:$0xff]
    %v149 = vld [vmem:[#allocation6 + $0x150] sm:$0xff]
    %v150 = vld [vmem:[#allocation6 + $0x158] sm:$0xff]
    %v151 = vld [vmem:[#allocation6 + $0x160] sm:$0xff]
    %v152 = vld [vmem:[#allocation6 + $0x168] sm:$0xff]
    %v153 = vld [vmem:[#allocation6 + $0x170] sm:$0xff]
    %v154 = vld [vmem:[#allocation6 + $0x178] sm:$0xff]
    %v155 = vld [vmem:[#allocation6 + $0x180] sm:$0xff]
    %v156 = vld [vmem:[#allocation6 + $0x188] sm:$0xff]
    %v157 = vld [vmem:[#allocation6 + $0x190] sm:$0xff]
    %v158 = vld [vmem:[#allocation6 + $0x198] sm:$0xff]
    %v159 = vld [vmem:[#allocation6 + $0x1a0] sm:$0xff]
    %v160 = vld [vmem:[#allocation6 + $0x1a8] sm:$0xff]
    %v161 = vld [vmem:[#allocation6 + $0x1b0] sm:$0xff]
    %v162 = vld [vmem:[#allocation6 + $0x1b8] sm:$0xff]
    %v163 = vld [vmem:[#allocation6 + $0x1c0] sm:$0xff]
    %v164 = vld [vmem:[#allocation6 + $0x1c8] sm:$0xff]
    %v165 = vld [vmem:[#allocation6 + $0x1d0] sm:$0xff]
    %v166 = vld [vmem:[#allocation6 + $0x1d8] sm:$0xff]
    %v167 = vld [vmem:[#allocation6 + $0x1e0] sm:$0xff]
    %v168 = vld [vmem:[#allocation6 + $0x1e8] sm:$0xff]
    %v169 = vld [vmem:[#allocation6 + $0x1f0] sm:$0xff]
    %v170 = vld [vmem:[#allocation6 + $0x1f8] sm:$0xff]
    %v171 = vld [vmem:[#allocation6 + $0x200] sm:$0xff]
    %v172 = vld [vmem:[#allocation6 + $0x208] sm:$0xff]
    %v173 = vld [vmem:[#allocation6 + $0x210] sm:$0xff]
    %v174 = vld [vmem:[#allocation6 + $0x218] sm:$0xff]
    %v175 = vld [vmem:[#allocation6 + $0x220] sm:$0xff]
    %v176 = vld [vmem:[#allocation6 + $0x228] sm:$0xff]
    %v177 = vld [vmem:[#allocation6 + $0x230] sm:$0xff]
    %v178 = vld [vmem:[#allocation6 + $0x238] sm:$0xff]
    %v179 = vld [vmem:[#allocation6 + $0x240] sm:$0xff]
    %v180 = vld [vmem:[#allocation6 + $0x248] sm:$0xff]
    %v181 = vld [vmem:[#allocation6 + $0x250] sm:$0xff]
    %v182 = vld [vmem:[#allocation6 + $0x258] sm:$0xff]
    %v183 = vld [vmem:[#allocation6 + $0x260] sm:$0xff]
    %v184 = vld [vmem:[#allocation6 + $0x268] sm:$0xff]
    %v185 = vld [vmem:[#allocation6 + $0x270] sm:$0xff]
    %v186 = vld [vmem:[#allocation6 + $0x278] sm:$0xff]
    %v187 = vld [vmem:[#allocation6 + $0x280] sm:$0xff]
    %v188 = vld [vmem:[#allocation6 + $0x288] sm:$0xff]
    %v189 = vld [vmem:[#allocation6 + $0x290] sm:$0xff]
    %v190 = vld [vmem:[#allocation6 + $0x298] sm:$0xff]
    %v191 = vld [vmem:[#allocation6 + $0x2a0] sm:$0xff]
    %v192 = vld [vmem:[#allocation6 + $0x2a8] sm:$0xff]
    %v193 = vld [vmem:[#allocation6 + $0x2b0] sm:$0xff]
    %v194 = vld [vmem:[#allocation6 + $0x2b8] sm:$0xff]
    %v195 = vld [vmem:[#allocation6 + $0x2c0] sm:$0xff]
    %v196 = vld [vmem:[#allocation6 + $0x2c8] sm:$0xff]
    %v197 = vld [vmem:[#allocation6 + $0x2d0] sm:$0xff]
    %v198 = vld [vmem:[#allocation6 + $0x2d8] sm:$0xff]
    %v199 = vld [vmem:[#allocation6 + $0x2e0] sm:$0xff]
    %v200 = vld [vmem:[#allocation6 + $0x2e8] sm:$0xff]
    %v201 = vld [vmem:[#allocation6 + $0x2f0] sm:$0xff]
    %v202 = vld [vmem:[#allocation6 + $0x2f8] sm:$0xff]
    %v203 = vld [vmem:[#allocation6 + $0x300] sm:$0xff]
    %v204 = vld [vmem:[#allocation6 + $0x308] sm:$0xff]
    %v205 = vld [vmem:[#allocation6 + $0x310] sm:$0xff]
    %v206 = vld [vmem:[#allocation6 + $0x318] sm:$0xff]
    %v207 = vld [vmem:[#allocation6 + $0x320] sm:$0xff]
    %v208 = vld [vmem:[#allocation6 + $0x328] sm:$0xff]
    %v209 = vld [vmem:[#allocation6 + $0x330] sm:$0xff]
    %v210 = vld [vmem:[#allocation6 + $0x338] sm:$0xff]
    %v211 = vld [vmem:[#allocation6 + $0x340] sm:$0xff]
    %v212 = vld [vmem:[#allocation6 + $0x348] sm:$0xff]
    %v213 = vld [vmem:[#allocation6 + $0x350] sm:$0xff]
    %v214 = vld [vmem:[#allocation6 + $0x358] sm:$0xff]
    %v215 = vld [vmem:[#allocation6 + $0x360] sm:$0xff]
    %v216 = vld [vmem:[#allocation6 + $0x368] sm:$0xff]
    %v217 = vld [vmem:[#allocation6 + $0x370] sm:$0xff]
    %v218 = vld [vmem:[#allocation6 + $0x378] sm:$0xff]
    %v219 = vld [vmem:[#allocation6 + $0x380] sm:$0x11]
    %v220 = vld [vmem:[#allocation6 + $0x388] sm:$0x11]
    %v221 = vld [vmem:[#allocation6 + $0x390] sm:$0x11]
    %v222 = vld [vmem:[#allocation6 + $0x398] sm:$0x11]
    %v223 = vld [vmem:[%s3] sm:$0xff]
    %v225 = vlaneseq
    %v226 = vshrl.u32 %v225, 7
    %v227 = vsub.s32 0, %v226
    %v228 = vrot.slane %v223, %v227
    %v229 = vlaneseq
    %v230 = vshrl.u32 %v229, 7
    %v231 = vsub.s32 1, %v230
    %v232 = vrot.slane %v223, %v231
    %v233 = vlaneseq
    %v234 = vshrl.u32 %v233, 7
    %v235 = vsub.s32 2, %v234
    %v236 = vrot.slane %v223, %v235
    %v237 = vlaneseq
    %v238 = vshrl.u32 %v237, 7
    %v239 = vsub.s32 3, %v238
    %v240 = vrot.slane %v223, %v239
    %v241 = vlaneseq
    %v242 = vshrl.u32 %v241, 7
    %v243 = vsub.s32 4, %v242
    %v244 = vrot.slane %v223, %v243
    %v245 = vlaneseq
    %v246 = vshrl.u32 %v245, 7
    %v247 = vsub.s32 5, %v246
    %v248 = vrot.slane %v223, %v247
    %v249 = vlaneseq
    %v250 = vshrl.u32 %v249, 7
    %v251 = vsub.s32 6, %v250
    %v252 = vrot.slane %v223, %v251
    %v253 = vlaneseq
    %v254 = vshrl.u32 %v253, 7
    %v255 = vsub.s32 7, %v254
    %v256 = vrot.slane %v223, %v255
    %v273 = vunpack.c.l.b16 %v99
    %v274 = vunpack.c.h.b16 %v99
    %v275 = vunpack.c.l.b16 %v100
    %v276 = vunpack.c.h.b16 %v100
    %v277 = vunpack.c.l.b16 %v101
    %v278 = vunpack.c.h.b16 %v101
    %v279 = vunpack.c.l.b16 %v102
    %v280 = vunpack.c.h.b16 %v102
    %v281 = vunpack.c.l.b16 %v103
    %v282 = vunpack.c.h.b16 %v103
    %v283 = vunpack.c.l.b16 %v104
    %v284 = vunpack.c.h.b16 %v104
    %v285 = vunpack.c.l.b16 %v105
    %v286 = vunpack.c.h.b16 %v105
    %v287 = vunpack.c.l.b16 %v106
    %v288 = vunpack.c.h.b16 %v106
    %v289 = vpack.c.b16 %v275, %v273
    %v290 = vpack.c.b16 %v276, %v274
    %v291 = vpack.c.b16 %v279, %v277
    %v292 = vpack.c.b16 %v280, %v278
    %v293 = vpack.c.b16 %v283, %v281
    %v294 = vpack.c.b16 %v284, %v282
    %v295 = vpack.c.b16 %v287, %v285
    %v296 = vpack.c.b16 %v288, %v286
    %v417 = vunpack.c.l.b16 %v107
    %v418 = vunpack.c.h.b16 %v107
    %v419 = vunpack.c.l.b16 %v108
    %v420 = vunpack.c.h.b16 %v108
    %v421 = vunpack.c.l.b16 %v109
    %v422 = vunpack.c.h.b16 %v109
    %v423 = vunpack.c.l.b16 %v110
    %v424 = vunpack.c.h.b16 %v110
    %v425 = vunpack.c.l.b16 %v111
    %v426 = vunpack.c.h.b16 %v111
    %v427 = vunpack.c.l.b16 %v112
    %v428 = vunpack.c.h.b16 %v112
    %v429 = vunpack.c.l.b16 %v113
    %v430 = vunpack.c.h.b16 %v113
    %v431 = vunpack.c.l.b16 %v114
    %v432 = vunpack.c.h.b16 %v114
    %v433 = vunpack.c.l.b16 %v115
    %v434 = vunpack.c.h.b16 %v115
    %v435 = vunpack.c.l.b16 %v116
    %v436 = vunpack.c.h.b16 %v116
    %v437 = vunpack.c.l.b16 %v117
    %v438 = vunpack.c.h.b16 %v117
    %v439 = vunpack.c.l.b16 %v118
    %v440 = vunpack.c.h.b16 %v118
    %v441 = vunpack.c.l.b16 %v119
    %v442 = vunpack.c.h.b16 %v119
    %v443 = vunpack.c.l.b16 %v120
    %v444 = vunpack.c.h.b16 %v120
    %v445 = vunpack.c.l.b16 %v121
    %v446 = vunpack.c.h.b16 %v121
    %v447 = vunpack.c.l.b16 %v122
    %v448 = vunpack.c.h.b16 %v122
    %v449 = vunpack.c.l.b16 %v123
    %v450 = vunpack.c.h.b16 %v123
    %v451 = vunpack.c.l.b16 %v124
    %v452 = vunpack.c.h.b16 %v124
    %v453 = vunpack.c.l.b16 %v125
    %v454 = vunpack.c.h.b16 %v125
    %v455 = vunpack.c.l.b16 %v126
    %v456 = vunpack.c.h.b16 %v126
    %v457 = vunpack.c.l.b16 %v127
    %v458 = vunpack.c.h.b16 %v127
    %v459 = vunpack.c.l.b16 %v128
    %v460 = vunpack.c.h.b16 %v128
    %v461 = vunpack.c.l.b16 %v129
    %v462 = vunpack.c.h.b16 %v129
    %v463 = vunpack.c.l.b16 %v130
    %v464 = vunpack.c.h.b16 %v130
    %v465 = vunpack.c.l.b16 %v131
    %v466 = vunpack.c.h.b16 %v131
    %v467 = vunpack.c.l.b16 %v132
    %v468 = vunpack.c.h.b16 %v132
    %v469 = vunpack.c.l.b16 %v133
    %v470 = vunpack.c.h.b16 %v133
    %v471 = vunpack.c.l.b16 %v134
    %v472 = vunpack.c.h.b16 %v134
    %v473 = vunpack.c.l.b16 %v135
    %v474 = vunpack.c.h.b16 %v135
    %v475 = vunpack.c.l.b16 %v136
    %v476 = vunpack.c.h.b16 %v136
    %v477 = vunpack.c.l.b16 %v137
    %v478 = vunpack.c.h.b16 %v137
    %v479 = vunpack.c.l.b16 %v138
    %v480 = vunpack.c.h.b16 %v138
    %v481 = vunpack.c.l.b16 %v139
    %v482 = vunpack.c.h.b16 %v139
    %v483 = vunpack.c.l.b16 %v140
    %v484 = vunpack.c.h.b16 %v140
    %v485 = vunpack.c.l.b16 %v141
    %v486 = vunpack.c.h.b16 %v141
    %v487 = vunpack.c.l.b16 %v142
    %v488 = vunpack.c.h.b16 %v142
    %v489 = vunpack.c.l.b16 %v143
    %v490 = vunpack.c.h.b16 %v143
    %v491 = vunpack.c.l.b16 %v144
    %v492 = vunpack.c.h.b16 %v144
    %v493 = vunpack.c.l.b16 %v145
    %v494 = vunpack.c.h.b16 %v145
    %v495 = vunpack.c.l.b16 %v146
    %v496 = vunpack.c.h.b16 %v146
    %v497 = vunpack.c.l.b16 %v147
    %v498 = vunpack.c.h.b16 %v147
    %v499 = vunpack.c.l.b16 %v148
    %v500 = vunpack.c.h.b16 %v148
    %v501 = vunpack.c.l.b16 %v149
    %v502 = vunpack.c.h.b16 %v149
    %v503 = vunpack.c.l.b16 %v150
    %v504 = vunpack.c.h.b16 %v150
    %v505 = vunpack.c.l.b16 %v151
    %v506 = vunpack.c.h.b16 %v151
    %v507 = vunpack.c.l.b16 %v152
    %v508 = vunpack.c.h.b16 %v152
    %v509 = vunpack.c.l.b16 %v153
    %v510 = vunpack.c.h.b16 %v153
    %v511 = vunpack.c.l.b16 %v154
    %v512 = vunpack.c.h.b16 %v154
    %v513 = vunpack.c.l.b16 %v155
    %v514 = vunpack.c.h.b16 %v155
    %v515 = vunpack.c.l.b16 %v156
    %v516 = vunpack.c.h.b16 %v156
    %v517 = vunpack.c.l.b16 %v157
    %v518 = vunpack.c.h.b16 %v157
    %v519 = vunpack.c.l.b16 %v158
    %v520 = vunpack.c.h.b16 %v158
    %v521 = vunpack.c.l.b16 %v159
    %v522 = vunpack.c.h.b16 %v159
    %v523 = vunpack.c.l.b16 %v160
    %v524 = vunpack.c.h.b16 %v160
    %v525 = vunpack.c.l.b16 %v161
    %v526 = vunpack.c.h.b16 %v161
    %v527 = vunpack.c.l.b16 %v162
    %v528 = vunpack.c.h.b16 %v162
    %v529 = vunpack.c.l.b16 %v163
    %v530 = vunpack.c.h.b16 %v163
    %v531 = vunpack.c.l.b16 %v164
    %v532 = vunpack.c.h.b16 %v164
    %v533 = vunpack.c.l.b16 %v165
    %v534 = vunpack.c.h.b16 %v165
    %v535 = vunpack.c.l.b16 %v166
    %v536 = vunpack.c.h.b16 %v166
    %v537 = vunpack.c.l.b16 %v167
    %v538 = vunpack.c.h.b16 %v167
    %v539 = vunpack.c.l.b16 %v168
    %v540 = vunpack.c.h.b16 %v168
    %v541 = vunpack.c.l.b16 %v169
    %v542 = vunpack.c.h.b16 %v169
    %v543 = vunpack.c.l.b16 %v170
    %v544 = vunpack.c.h.b16 %v170
    %v545 = vunpack.c.l.b16 %v171
    %v546 = vunpack.c.h.b16 %v171
    %v547 = vunpack.c.l.b16 %v172
    %v548 = vunpack.c.h.b16 %v172
    %v549 = vunpack.c.l.b16 %v173
    %v550 = vunpack.c.h.b16 %v173
    %v551 = vunpack.c.l.b16 %v174
    %v552 = vunpack.c.h.b16 %v174
    %v553 = vunpack.c.l.b16 %v175
    %v554 = vunpack.c.h.b16 %v175
    %v555 = vunpack.c.l.b16 %v176
    %v556 = vunpack.c.h.b16 %v176
    %v557 = vunpack.c.l.b16 %v177
    %v558 = vunpack.c.h.b16 %v177
    %v559 = vunpack.c.l.b16 %v178
    %v560 = vunpack.c.h.b16 %v178
    %v561 = vunpack.c.l.b16 %v179
    %v562 = vunpack.c.h.b16 %v179
    %v563 = vunpack.c.l.b16 %v180
    %v564 = vunpack.c.h.b16 %v180
    %v565 = vunpack.c.l.b16 %v181
    %v566 = vunpack.c.h.b16 %v181
    %v567 = vunpack.c.l.b16 %v182
    %v568 = vunpack.c.h.b16 %v182
    %v569 = vunpack.c.l.b16 %v183
    %v570 = vunpack.c.h.b16 %v183
    %v571 = vunpack.c.l.b16 %v184
    %v572 = vunpack.c.h.b16 %v184
    %v573 = vunpack.c.l.b16 %v185
    %v574 = vunpack.c.h.b16 %v185
    %v575 = vunpack.c.l.b16 %v186
    %v576 = vunpack.c.h.b16 %v186
    %v577 = vunpack.c.l.b16 %v187
    %v578 = vunpack.c.h.b16 %v187
    %v579 = vunpack.c.l.b16 %v188
    %v580 = vunpack.c.h.b16 %v188
    %v581 = vunpack.c.l.b16 %v189
    %v582 = vunpack.c.h.b16 %v189
    %v583 = vunpack.c.l.b16 %v190
    %v584 = vunpack.c.h.b16 %v190
    %v585 = vunpack.c.l.b16 %v191
    %v586 = vunpack.c.h.b16 %v191
    %v587 = vunpack.c.l.b16 %v192
    %v588 = vunpack.c.h.b16 %v192
    %v589 = vunpack.c.l.b16 %v193
    %v590 = vunpack.c.h.b16 %v193
    %v591 = vunpack.c.l.b16 %v194
    %v592 = vunpack.c.h.b16 %v194
    %v593 = vunpack.c.l.b16 %v195
    %v594 = vunpack.c.h.b16 %v195
    %v595 = vunpack.c.l.b16 %v196
    %v596 = vunpack.c.h.b16 %v196
    %v597 = vunpack.c.l.b16 %v197
    %v598 = vunpack.c.h.b16 %v197
    %v599 = vunpack.c.l.b16 %v198
    %v600 = vunpack.c.h.b16 %v198
    %v601 = vunpack.c.l.b16 %v199
    %v602 = vunpack.c.h.b16 %v199
    %v603 = vunpack.c.l.b16 %v200
    %v604 = vunpack.c.h.b16 %v200
    %v605 = vunpack.c.l.b16 %v201
    %v606 = vunpack.c.h.b16 %v201
    %v607 = vunpack.c.l.b16 %v202
    %v608 = vunpack.c.h.b16 %v202
    %v609 = vunpack.c.l.b16 %v203
    %v610 = vunpack.c.h.b16 %v203
    %v611 = vunpack.c.l.b16 %v204
    %v612 = vunpack.c.h.b16 %v204
    %v613 = vunpack.c.l.b16 %v205
    %v614 = vunpack.c.h.b16 %v205
    %v615 = vunpack.c.l.b16 %v206
    %v616 = vunpack.c.h.b16 %v206
    %v617 = vunpack.c.l.b16 %v207
    %v618 = vunpack.c.h.b16 %v207
    %v619 = vunpack.c.l.b16 %v208
    %v620 = vunpack.c.h.b16 %v208
    %v621 = vunpack.c.l.b16 %v209
    %v622 = vunpack.c.h.b16 %v209
    %v623 = vunpack.c.l.b16 %v210
    %v624 = vunpack.c.h.b16 %v210
    %v625 = vunpack.c.l.b16 %v211
    %v626 = vunpack.c.h.b16 %v211
    %v627 = vunpack.c.l.b16 %v212
    %v628 = vunpack.c.h.b16 %v212
    %v629 = vunpack.c.l.b16 %v213
    %v630 = vunpack.c.h.b16 %v213
    %v631 = vunpack.c.l.b16 %v214
    %v632 = vunpack.c.h.b16 %v214
    %v633 = vunpack.c.l.b16 %v215
    %v634 = vunpack.c.h.b16 %v215
    %v635 = vunpack.c.l.b16 %v216
    %v636 = vunpack.c.h.b16 %v216
    %v637 = vunpack.c.l.b16 %v217
    %v638 = vunpack.c.h.b16 %v217
    %v639 = vunpack.c.l.b16 %v218
    %v640 = vunpack.c.h.b16 %v218
    %v641 = vunpack.c.l.b16 %v219
    %v642 = vunpack.c.h.b16 %v219
    %v643 = vunpack.c.l.b16 %v220
    %v644 = vunpack.c.h.b16 %v220
    %v645 = vunpack.c.l.b16 %v221
    %v646 = vunpack.c.h.b16 %v221
    %v647 = vunpack.c.l.b16 %v222
    %v648 = vunpack.c.h.b16 %v222
    %v649 = vpack.c.b16 %v425, %v417
    %v650 = vpack.c.b16 %v426, %v418
    %v651 = vpack.c.b16 %v427, %v419
    %v652 = vpack.c.b16 %v428, %v420
    %v653 = vpack.c.b16 %v429, %v421
    %v654 = vpack.c.b16 %v430, %v422
    %v655 = vpack.c.b16 %v431, %v423
    %v656 = vpack.c.b16 %v432, %v424
    %v657 = vpack.c.b16 %v441, %v433
    %v658 = vpack.c.b16 %v442, %v434
    %v659 = vpack.c.b16 %v443, %v435
    %v660 = vpack.c.b16 %v444, %v436
    %v661 = vpack.c.b16 %v445, %v437
    %v662 = vpack.c.b16 %v446, %v438
    %v663 = vpack.c.b16 %v447, %v439
    %v664 = vpack.c.b16 %v448, %v440
    %v665 = vpack.c.b16 %v457, %v449
    %v666 = vpack.c.b16 %v458, %v450
    %v667 = vpack.c.b16 %v459, %v451
    %v668 = vpack.c.b16 %v460, %v452
    %v669 = vpack.c.b16 %v461, %v453
    %v670 = vpack.c.b16 %v462, %v454
    %v671 = vpack.c.b16 %v463, %v455
    %v672 = vpack.c.b16 %v464, %v456
    %v673 = vpack.c.b16 %v473, %v465
    %v674 = vpack.c.b16 %v474, %v466
    %v675 = vpack.c.b16 %v475, %v467
    %v676 = vpack.c.b16 %v476, %v468
    %v677 = vpack.c.b16 %v477, %v469
    %v678 = vpack.c.b16 %v478, %v470
    %v679 = vpack.c.b16 %v479, %v471
    %v680 = vpack.c.b16 %v480, %v472
    %v681 = vpack.c.b16 %v489, %v481
    %v682 = vpack.c.b16 %v490, %v482
    %v683 = vpack.c.b16 %v491, %v483
    %v684 = vpack.c.b16 %v492, %v484
    %v685 = vpack.c.b16 %v493, %v485
    %v686 = vpack.c.b16 %v494, %v486
    %v687 = vpack.c.b16 %v495, %v487
    %v688 = vpack.c.b16 %v496, %v488
    %v689 = vpack.c.b16 %v505, %v497
    %v690 = vpack.c.b16 %v506, %v498
    %v691 = vpack.c.b16 %v507, %v499
    %v692 = vpack.c.b16 %v508, %v500
    %v693 = vpack.c.b16 %v509, %v501
    %v694 = vpack.c.b16 %v510, %v502
    %v695 = vpack.c.b16 %v511, %v503
    %v696 = vpack.c.b16 %v512, %v504
    %v697 = vpack.c.b16 %v521, %v513
    %v698 = vpack.c.b16 %v522, %v514
    %v699 = vpack.c.b16 %v523, %v515
    %v700 = vpack.c.b16 %v524, %v516
    %v701 = vpack.c.b16 %v525, %v517
    %v702 = vpack.c.b16 %v526, %v518
    %v703 = vpack.c.b16 %v527, %v519
    %v704 = vpack.c.b16 %v528, %v520
    %v705 = vpack.c.b16 %v537, %v529
    %v706 = vpack.c.b16 %v538, %v530
    %v707 = vpack.c.b16 %v539, %v531
    %v708 = vpack.c.b16 %v540, %v532
    %v709 = vpack.c.b16 %v541, %v533
    %v710 = vpack.c.b16 %v542, %v534
    %v711 = vpack.c.b16 %v543, %v535
    %v712 = vpack.c.b16 %v544, %v536
    %v713 = vpack.c.b16 %v553, %v545
    %v714 = vpack.c.b16 %v554, %v546
    %v715 = vpack.c.b16 %v555, %v547
    %v716 = vpack.c.b16 %v556, %v548
    %v717 = vpack.c.b16 %v557, %v549
    %v718 = vpack.c.b16 %v558, %v550
    %v719 = vpack.c.b16 %v559, %v551
    %v720 = vpack.c.b16 %v560, %v552
    %v721 = vpack.c.b16 %v569, %v561
    %v722 = vpack.c.b16 %v570, %v562
    %v723 = vpack.c.b16 %v571, %v563
    %v724 = vpack.c.b16 %v572, %v564
    %v725 = vpack.c.b16 %v573, %v565
    %v726 = vpack.c.b16 %v574, %v566
    %v727 = vpack.c.b16 %v575, %v567
    %v728 = vpack.c.b16 %v576, %v568
    %v729 = vpack.c.b16 %v585, %v577
    %v730 = vpack.c.b16 %v586, %v578
    %v731 = vpack.c.b16 %v587, %v579
    %v732 = vpack.c.b16 %v588, %v580
    %v733 = vpack.c.b16 %v589, %v581
    %v734 = vpack.c.b16 %v590, %v582
    %v735 = vpack.c.b16 %v591, %v583
    %v736 = vpack.c.b16 %v592, %v584
    %v737 = vpack.c.b16 %v601, %v593
    %v738 = vpack.c.b16 %v602, %v594
    %v739 = vpack.c.b16 %v603, %v595
    %v740 = vpack.c.b16 %v604, %v596
    %v741 = vpack.c.b16 %v605, %v597
    %v742 = vpack.c.b16 %v606, %v598
    %v743 = vpack.c.b16 %v607, %v599
    %v744 = vpack.c.b16 %v608, %v600
    %v745 = vpack.c.b16 %v617, %v609
    %v746 = vpack.c.b16 %v618, %v610
    %v747 = vpack.c.b16 %v619, %v611
    %v748 = vpack.c.b16 %v620, %v612
    %v749 = vpack.c.b16 %v621, %v613
    %v750 = vpack.c.b16 %v622, %v614
    %v751 = vpack.c.b16 %v623, %v615
    %v752 = vpack.c.b16 %v624, %v616
    %v753 = vpack.c.b16 %v633, %v625
    %v754 = vpack.c.b16 %v634, %v626
    %v755 = vpack.c.b16 %v635, %v627
    %v756 = vpack.c.b16 %v636, %v628
    %v757 = vpack.c.b16 %v637, %v629
    %v758 = vpack.c.b16 %v638, %v630
    %v759 = vpack.c.b16 %v639, %v631
    %v760 = vpack.c.b16 %v640, %v632
    %v761 = vpack.c.b16 %v641, %v641
    %v762 = vpack.c.b16 %v642, %v642
    %v763 = vpack.c.b16 %v643, %v643
    %v764 = vpack.c.b16 %v644, %v644
    %v765 = vpack.c.b16 %v645, %v645
    %v766 = vpack.c.b16 %v646, %v646
    %v767 = vpack.c.b16 %v647, %v647
    %v768 = vpack.c.b16 %v648, %v648
    %vm881 = vcmask 793600
    %v883 = vsel %vm881, %v290, 0
    %v886 = vsel %vm881, %v292, 0
    %v889 = vsel %vm881, %v294, 0
    %v892 = vsel %vm881, %v296, 0
    %vm894 = vcmask 1040384
    %v895 = vsel 0, 4294967295, 65535
    %v896 = vsel %vm894, %v895, 0
    %v898 = vand.u32 %v761, %v896
    %v901 = vand.u32 %v762, %v896
    %v904 = vand.u32 %v763, %v896
    %v907 = vand.u32 %v764, %v896
    %v910 = vand.u32 %v765, %v896
    %v913 = vand.u32 %v766, %v896
    %v916 = vand.u32 %v767, %v896
    %v919 = vand.u32 %v768, %v896
    %921 = vmatprep.subr.bf16.mxu0 %v650
    %922 = vmatpush1.bf16.msra.mxu0 %v649
    %923 = vmatprep.subr.bf16.mxu0 %v658
    %924 = vmatpush1.bf16.msra.mxu0 %v657
    %925 = vmatprep.subr.bf16.mxu0 %v666
    %926 = vmatpush1.bf16.msra.mxu0 %v665
    %927 = vmatprep.subr.bf16.mxu0 %v674
    %928 = vmatpush1.bf16.msra.mxu0 %v673
    %929 = vmatprep.subr.bf16.mxu0 %v682
    %930 = vmatpush1.bf16.msra.mxu0 %v681
    %931 = vmatprep.subr.bf16.mxu0 %v690
    %932 = vmatpush1.bf16.msra.mxu0 %v689
    %933 = vmatprep.subr.bf16.mxu0 %v698
    %934 = vmatpush1.bf16.msra.mxu0 %v697
    %935 = vmatprep.subr.bf16.mxu0 %v706
    %936 = vmatpush1.bf16.msra.mxu0 %v705
    %937 = vmatprep.subr.bf16.mxu0 %v714
    %938 = vmatpush1.bf16.msra.mxu0 %v713
    %939 = vmatprep.subr.bf16.mxu0 %v722
    %940 = vmatpush1.bf16.msra.mxu0 %v721
    %941 = vmatprep.subr.bf16.mxu0 %v730
    %942 = vmatpush1.bf16.msra.mxu0 %v729
    %943 = vmatprep.subr.bf16.mxu0 %v738
    %944 = vmatpush1.bf16.msra.mxu0 %v737
    %945 = vmatprep.subr.bf16.mxu0 %v746
    %946 = vmatpush1.bf16.msra.mxu0 %v745
    %947 = vmatprep.subr.bf16.mxu0 %v754
    %948 = vmatpush1.bf16.msra.mxu0 %v753
    %949 = vmatprep.subr.bf16.mxu0 %v901
    %950 = vmatpush1.bf16.msra.mxu0 %v898
    %951 = vmatprep.subr.bf16.mxu0 0
    %952 = vmatpush1.bf16.msra.mxu0 0
    %953 = vmatprep.mubr.bf16.mxu0 %v883
    %954 = vmatmul.mubr.bf16.gmra.mrb[0].mxu0 %v289
    %v955 = vpop.f32.mrb[0].mxu0
    %v956 = vadd.f32 %v228, %v955
    %v957 = vpop.f32.mrb[0].mxu0
    %v958 = vadd.f32 %v232, %v957
    %v959 = vpop.f32.mrb[0].mxu0
    %v960 = vadd.f32 %v228, %v959
    %v961 = vpop.f32.mrb[0].mxu0
    %v962 = vadd.f32 %v232, %v961
    %963 = vmatprep.mubr.bf16.mxu0 %v886
    %964 = vmatmul.mubr.bf16.gmra.mrb[0].mxu0 %v291
    %v965 = vpop.f32.mrb[0].mxu0
    %v966 = vadd.f32 %v228, %v965
    %v967 = vpop.f32.mrb[0].mxu0
    %v968 = vadd.f32 %v232, %v967
    %v969 = vpop.f32.mrb[0].mxu0
    %v970 = vadd.f32 %v228, %v969
    %v971 = vpop.f32.mrb[0].mxu0
    %v972 = vadd.f32 %v232, %v971
    %973 = vmatprep.mubr.bf16.mxu0 %v889
    %974 = vmatmul.mubr.bf16.gmra.mrb[0].mxu0 %v293
    %v975 = vpop.f32.mrb[0].mxu0
    %v976 = vadd.f32 %v228, %v975
    %v977 = vpop.f32.mrb[0].mxu0
    %v978 = vadd.f32 %v232, %v977
    %v979 = vpop.f32.mrb[0].mxu0
    %v980 = vadd.f32 %v228, %v979
    %v981 = vpop.f32.mrb[0].mxu0
    %v982 = vadd.f32 %v232, %v981
    %983 = vmatprep.mubr.bf16.mxu0 %v892
    %984 = vmatmul.mubr.bf16.gmra.mrb[0].mxu0 %v295
    %v985 = vpop.f32.mrb[0].mxu0
    %v986 = vadd.f32 %v228, %v985
    %v987 = vpop.f32.mrb[0].mxu0
    %v988 = vadd.f32 %v232, %v987
    %v989 = vpop.f32.mrb[0].mxu0
    %v990 = vadd.f32 %v228, %v989
    %v991 = vpop.f32.mrb[0].mxu0
    %v992 = vadd.f32 %v232, %v991
    %993 = vdwg.mxu0
    %994 = vmatprep.subr.bf16.mxu0 %v652
    %995 = vmatpush1.bf16.msra.mxu0 %v651
    %996 = vmatprep.subr.bf16.mxu0 %v660
    %997 = vmatpush1.bf16.msra.mxu0 %v659
    %998 = vmatprep.subr.bf16.mxu0 %v668
    %999 = vmatpush1.bf16.msra.mxu0 %v667
    %1000 = vmatprep.subr.bf16.mxu0 %v676
    %1001 = vmatpush1.bf16.msra.mxu0 %v675
    %1002 = vmatprep.subr.bf16.mxu0 %v684
    %1003 = vmatpush1.bf16.msra.mxu0 %v683
    %1004 = vmatprep.subr.bf16.mxu0 %v692
    %1005 = vmatpush1.bf16.msra.mxu0 %v691
    %1006 = vmatprep.subr.bf16.mxu0 %v700
    %1007 = vmatpush1.bf16.msra.mxu0 %v699
    %1008 = vmatprep.subr.bf16.mxu0 %v708
    %1009 = vmatpush1.bf16.msra.mxu0 %v707
    %1010 = vmatprep.subr.bf16.mxu0 %v716
    %1011 = vmatpush1.bf16.msra.mxu0 %v715
    %1012 = vmatprep.subr.bf16.mxu0 %v724
    %1013 = vmatpush1.bf16.msra.mxu0 %v723
    %1014 = vmatprep.subr.bf16.mxu0 %v732
    %1015 = vmatpush1.bf16.msra.mxu0 %v731
    %1016 = vmatprep.subr.bf16.mxu0 %v740
    %1017 = vmatpush1.bf16.msra.mxu0 %v739
    %1018 = vmatprep.subr.bf16.mxu0 %v748
    %1019 = vmatpush1.bf16.msra.mxu0 %v747
    %1020 = vmatprep.subr.bf16.mxu0 %v756
    %1021 = vmatpush1.bf16.msra.mxu0 %v755
    %1022 = vmatprep.subr.bf16.mxu0 %v907
    %1023 = vmatpush1.bf16.msra.mxu0 %v904
    %1024 = vmatprep.subr.bf16.mxu0 0
    %1025 = vmatpush1.bf16.msra.mxu0 0
    %1026 = vmatprep.mubr.bf16.mxu0 %v883
    %1027 = vmatmul.mubr.bf16.gmra.mrb[0].mxu0 %v289
    %v1028 = vpop.f32.mrb[0].mxu0
    %v1029 = vadd.f32 %v236, %v1028
    %v1030 = vpop.f32.mrb[0].mxu0
    %v1031 = vadd.f32 %v240, %v1030
    %v1032 = vpop.f32.mrb[0].mxu0
    %v1033 = vadd.f32 %v236, %v1032
    %v1034 = vpop.f32.mrb[0].mxu0
    %v1035 = vadd.f32 %v240, %v1034
    %1036 = vmatprep.mubr.bf16.mxu0 %v886
    %1037 = vmatmul.mubr.bf16.gmra.mrb[0].mxu0 %v291
    %v1038 = vpop.f32.mrb[0].mxu0
    %v1039 = vadd.f32 %v236, %v1038
    %v1040 = vpop.f32.mrb[0].mxu0
    %v1041 = vadd.f32 %v240, %v1040
    %v1042 = vpop.f32.mrb[0].mxu0
    %v1043 = vadd.f32 %v236, %v1042
    %v1044 = vpop.f32.mrb[0].mxu0
    %v1045 = vadd.f32 %v240, %v1044
    %1046 = vmatprep.mubr.bf16.mxu0 %v889
    %1047 = vmatmul.mubr.bf16.gmra.mrb[0].mxu0 %v293
    %v1048 = vpop.f32.mrb[0].mxu0
    %v1049 = vadd.f32 %v236, %v1048
    %v1050 = vpop.f32.mrb[0].mxu0
    %v1051 = vadd.f32 %v240, %v1050
    %v1052 = vpop.f32.mrb[0].mxu0
    %v1053 = vadd.f32 %v236, %v1052
    %v1054 = vpop.f32.mrb[0].mxu0
    %v1055 = vadd.f32 %v240, %v1054
    %1056 = vmatprep.mubr.bf16.mxu0 %v892
    %1057 = vmatmul.mubr.bf16.gmra.mrb[0].mxu0 %v295
    %v1058 = vpop.f32.mrb[0].mxu0
    %v1059 = vadd.f32 %v236, %v1058
    %v1060 = vpop.f32.mrb[0].mxu0
    %v1061 = vadd.f32 %v240, %v1060
    %v1062 = vpop.f32.mrb[0].mxu0
    %v1063 = vadd.f32 %v236, %v1062
    %v1064 = vpop.f32.mrb[0].mxu0
    %v1065 = vadd.f32 %v240, %v1064
    %1066 = vdwg.mxu0
    %1067 = vmatprep.subr.bf16.mxu0 %v654
    %1068 = vmatpush1.bf16.msra.mxu0 %v653
    %1069 = vmatprep.subr.bf16.mxu0 %v662
    %1070 = vmatpush1.bf16.msra.mxu0 %v661
    %1071 = vmatprep.subr.bf16.mxu0 %v670
    %1072 = vmatpush1.bf16.msra.mxu0 %v669
    %1073 = vmatprep.subr.bf16.mxu0 %v678
    %1074 = vmatpush1.bf16.msra.mxu0 %v677
    %1075 = vmatprep.subr.bf16.mxu0 %v686
    %1076 = vmatpush1.bf16.msra.mxu0 %v685
    %1077 = vmatprep.subr.bf16.mxu0 %v694
    %1078 = vmatpush1.bf16.msra.mxu0 %v693
    %1079 = vmatprep.subr.bf16.mxu0 %v702
    %1080 = vmatpush1.bf16.msra.mxu0 %v701
    %1081 = vmatprep.subr.bf16.mxu0 %v710
    %1082 = vmatpush1.bf16.msra.mxu0 %v709
    %1083 = vmatprep.subr.bf16.mxu0 %v718
    %1084 = vmatpush1.bf16.msra.mxu0 %v717
    %1085 = vmatprep.subr.bf16.mxu0 %v726
    %1086 = vmatpush1.bf16.msra.mxu0 %v725
    %1087 = vmatprep.subr.bf16.mxu0 %v734
    %1088 = vmatpush1.bf16.msra.mxu0 %v733
    %1089 = vmatprep.subr.bf16.mxu0 %v742
    %1090 = vmatpush1.bf16.msra.mxu0 %v741
    %1091 = vmatprep.subr.bf16.mxu0 %v750
    %1092 = vmatpush1.bf16.msra.mxu0 %v749
    %1093 = vmatprep.subr.bf16.mxu0 %v758
    %1094 = vmatpush1.bf16.msra.mxu0 %v757
    %1095 = vmatprep.subr.bf16.mxu0 %v913
    %1096 = vmatpush1.bf16.msra.mxu0 %v910
    %1097 = vmatprep.subr.bf16.mxu0 0
    %1098 = vmatpush1.bf16.msra.mxu0 0
    %1099 = vmatprep.mubr.bf16.mxu0 %v883
    %1100 = vmatmul.mubr.bf16.gmra.mrb[0].mxu0 %v289
    %v1101 = vpop.f32.mrb[0].mxu0
    %v1102 = vadd.f32 %v244, %v1101
    %v1103 = vpop.f32.mrb[0].mxu0
    %v1104 = vadd.f32 %v248, %v1103
    %v1105 = vpop.f32.mrb[0].mxu0
    %v1106 = vadd.f32 %v244, %v1105
    %v1107 = vpop.f32.mrb[0].mxu0
    %v1108 = vadd.f32 %v248, %v1107
    %1109 = vmatprep.mubr.bf16.mxu0 %v886
    %1110 = vmatmul.mubr.bf16.gmra.mrb[0].mxu0 %v291
    %v1111 = vpop.f32.mrb[0].mxu0
    %v1112 = vadd.f32 %v244, %v1111
    %v1113 = vpop.f32.mrb[0].mxu0
    %v1114 = vadd.f32 %v248, %v1113
    %v1115 = vpop.f32.mrb[0].mxu0
    %v1116 = vadd.f32 %v244, %v1115
    %v1117 = vpop.f32.mrb[0].mxu0
    %v1118 = vadd.f32 %v248, %v1117
    %1119 = vmatprep.mubr.bf16.mxu0 %v889
    %1120 = vmatmul.mubr.bf16.gmra.mrb[0].mxu0 %v293
    %v1121 = vpop.f32.mrb[0].mxu0
    %v1122 = vadd.f32 %v244, %v1121
    %v1123 = vpop.f32.mrb[0].mxu0
    %v1124 = vadd.f32 %v248, %v1123
    %v1125 = vpop.f32.mrb[0].mxu0
    %v1126 = vadd.f32 %v244, %v1125
    %v1127 = vpop.f32.mrb[0].mxu0
    %v1128 = vadd.f32 %v248, %v1127
    %1129 = vmatprep.mubr.bf16.mxu0 %v892
    %1130 = vmatmul.mubr.bf16.gmra.mrb[0].mxu0 %v295
    %v1131 = vpop.f32.mrb[0].mxu0
    %v1132 = vadd.f32 %v244, %v1131
    %v1133 = vpop.f32.mrb[0].mxu0
    %v1134 = vadd.f32 %v248, %v1133
    %v1135 = vpop.f32.mrb[0].mxu0
    %v1136 = vadd.f32 %v244, %v1135
    %v1137 = vpop.f32.mrb[0].mxu0
    %v1138 = vadd.f32 %v248, %v1137
    %1139 = vdwg.mxu0
    %1140 = vmatprep.subr.bf16.mxu0 %v656
    %1141 = vmatpush1.bf16.msra.mxu0 %v655
    %1142 = vmatprep.subr.bf16.mxu0 %v664
    %1143 = vmatpush1.bf16.msra.mxu0 %v663
    %1144 = vmatprep.subr.bf16.mxu0 %v672
    %1145 = vmatpush1.bf16.msra.mxu0 %v671
    %1146 = vmatprep.subr.bf16.mxu0 %v680
    %1147 = vmatpush1.bf16.msra.mxu0 %v679
    %1148 = vmatprep.subr.bf16.mxu0 %v688
    %1149 = vmatpush1.bf16.msra.mxu0 %v687
    %1150 = vmatprep.subr.bf16.mxu0 %v696
    %1151 = vmatpush1.bf16.msra.mxu0 %v695
    %1152 = vmatprep.subr.bf16.mxu0 %v704
    %1153 = vmatpush1.bf16.msra.mxu0 %v703
    %1154 = vmatprep.subr.bf16.mxu0 %v712
    %1155 = vmatpush1.bf16.msra.mxu0 %v711
    %1156 = vmatprep.subr.bf16.mxu0 %v720
    %1157 = vmatpush1.bf16.msra.mxu0 %v719
    %1158 = vmatprep.subr.bf16.mxu0 %v728
    %1159 = vmatpush1.bf16.msra.mxu0 %v727
    %1160 = vmatprep.subr.bf16.mxu0 %v736
    %1161 = vmatpush1.bf16.msra.mxu0 %v735
    %1162 = vmatprep.subr.bf16.mxu0 %v744
    %1163 = vmatpush1.bf16.msra.mxu0 %v743
    %1164 = vmatprep.subr.bf16.mxu0 %v752
    %1165 = vmatpush1.bf16.msra.mxu0 %v751
    %1166 = vmatprep.subr.bf16.mxu0 %v760
    %1167 = vmatpush1.bf16.msra.mxu0 %v759
    %1168 = vmatprep.subr.bf16.mxu0 %v919
    %1169 = vmatpush1.bf16.msra.mxu0 %v916
    %1170 = vmatprep.subr.bf16.mxu0 0
    %1171 = vmatpush1.bf16.msra.mxu0 0
    %1172 = vmatprep.mubr.bf16.mxu0 %v883
    %1173 = vmatmul.mubr.bf16.gmra.mrb[0].mxu0 %v289
    %v1174 = vpop.f32.mrb[0].mxu0
    %v1175 = vadd.f32 %v252, %v1174
    %v1176 = vpop.f32.mrb[0].mxu0
    %v1177 = vadd.f32 %v256, %v1176
    %v1178 = vpop.f32.mrb[0].mxu0
    %v1179 = vadd.f32 %v252, %v1178
    %v1180 = vpop.f32.mrb[0].mxu0
    %v1181 = vadd.f32 %v256, %v1180
    %1182 = vmatprep.mubr.bf16.mxu0 %v886
    %1183 = vmatmul.mubr.bf16.gmra.mrb[0].mxu0 %v291
    %v1184 = vpop.f32.mrb[0].mxu0
    %v1185 = vadd.f32 %v252, %v1184
    %v1186 = vpop.f32.mrb[0].mxu0
    %v1187 = vadd.f32 %v256, %v1186
    %v1188 = vpop.f32.mrb[0].mxu0
    %v1189 = vadd.f32 %v252, %v1188
    %v1190 = vpop.f32.mrb[0].mxu0
    %v1191 = vadd.f32 %v256, %v1190
    %1192 = vmatprep.mubr.bf16.mxu0 %v889
    %1193 = vmatmul.mubr.bf16.gmra.mrb[0].mxu0 %v293
    %v1194 = vpop.f32.mrb[0].mxu0
    %v1195 = vadd.f32 %v252, %v1194
    %v1196 = vpop.f32.mrb[0].mxu0
    %v1197 = vadd.f32 %v256, %v1196
    %v1198 = vpop.f32.mrb[0].mxu0
    %v1199 = vadd.f32 %v252, %v1198
    %v1200 = vpop.f32.mrb[0].mxu0
    %v1201 = vadd.f32 %v256, %v1200
    %1202 = vmatprep.mubr.bf16.mxu0 %v892
    %1203 = vmatmul.mubr.bf16.gmra.mrb[0].mxu0 %v295
    %v1204 = vpop.f32.mrb[0].mxu0
    %v1205 = vadd.f32 %v252, %v1204
    %v1206 = vpop.f32.mrb[0].mxu0
    %v1207 = vadd.f32 %v256, %v1206
    %v1208 = vpop.f32.mrb[0].mxu0
    %v1209 = vadd.f32 %v252, %v1208
    %v1210 = vpop.f32.mrb[0].mxu0
    %v1211 = vadd.f32 %v256, %v1210
    %1212 = vdwg.mxu0
    %1213 = vst [vmem:[#allocation2] sm:$0xff] %v956
    %1214 = vst [vmem:[#allocation2 + $0x8] sm:$0xff] %v958
    %1215 = vst [vmem:[#allocation2 + $0x10] sm:$0xff] %v1029
    %1216 = vst [vmem:[#allocation2 + $0x18] sm:$0xff] %v1031
    %1217 = vst [vmem:[#allocation2 + $0x20] sm:$0xff] %v1102
    %1218 = vst [vmem:[#allocation2 + $0x28] sm:$0xff] %v1104
    %1219 = vst [vmem:[#allocation2 + $0x30] sm:$0xff] %v1175
    %1220 = vst [vmem:[#allocation2 + $0x38] sm:$0xff] %v1177
    %1221 = vst [vmem:[#allocation2 + $0x40] sm:$0xff] %v960
    %1222 = vst [vmem:[#allocation2 + $0x48] sm:$0xff] %v962
    %1223 = vst [vmem:[#allocation2 + $0x50] sm:$0xff] %v1033
    %1224 = vst [vmem:[#allocation2 + $0x58] sm:$0xff] %v1035
    %1225 = vst [vmem:[#allocation2 + $0x60] sm:$0xff] %v1106
    %1226 = vst [vmem:[#allocation2 + $0x68] sm:$0xff] %v1108
    %1227 = vst [vmem:[#allocation2 + $0x70] sm:$0xff] %v1179
    %1228 = vst [vmem:[#allocation2 + $0x78] sm:$0xff] %v1181
    %1229 = vst [vmem:[#allocation2 + $0x80] sm:$0xff] %v966
    %1230 = vst [vmem:[#allocation2 + $0x88] sm:$0xff] %v968
    %1231 = vst [vmem:[#allocation2 + $0x90] sm:$0xff] %v1039
    %1232 = vst [vmem:[#allocation2 + $0x98] sm:$0xff] %v1041
    %1233 = vst [vmem:[#allocation2 + $0xa0] sm:$0xff] %v1112
    %1234 = vst [vmem:[#allocation2 + $0xa8] sm:$0xff] %v1114
    %1235 = vst [vmem:[#allocation2 + $0xb0] sm:$0xff] %v1185
    %1236 = vst [vmem:[#allocation2 + $0xb8] sm:$0xff] %v1187
    %1237 = vst [vmem:[#allocation2 + $0xc0] sm:$0xff] %v970
    %1238 = vst [vmem:[#allocation2 + $0xc8] sm:$0xff] %v972
    %1239 = vst [vmem:[#allocation2 + $0xd0] sm:$0xff] %v1043
    %1240 = vst [vmem:[#allocation2 + $0xd8] sm:$0xff] %v1045
    %1241 = vst [vmem:[#allocation2 + $0xe0] sm:$0xff] %v1116
    %1242 = vst [vmem:[#allocation2 + $0xe8] sm:$0xff] %v1118
    %1243 = vst [vmem:[#allocation2 + $0xf0] sm:$0xff] %v1189
    %1244 = vst [vmem:[#allocation2 + $0xf8] sm:$0xff] %v1191
    %1245 = vst [vmem:[#allocation2 + $0x100] sm:$0xff] %v976
    %1246 = vst [vmem:[#allocation2 + $0x108] sm:$0xff] %v978
    %1247 = vst [vmem:[#allocation2 + $0x110] sm:$0xff] %v1049
    %1248 = vst [vmem:[#allocation2 + $0x118] sm:$0xff] %v1051
    %1249 = vst [vmem:[#allocation2 + $0x120] sm:$0xff] %v1122
    %1250 = vst [vmem:[#allocation2 + $0x128] sm:$0xff] %v1124
    %1251 = vst [vmem:[#allocation2 + $0x130] sm:$0xff] %v1195
    %1252 = vst [vmem:[#allocation2 + $0x138] sm:$0xff] %v1197
    %1253 = vst [vmem:[#allocation2 + $0x140] sm:$0xff] %v980
    %1254 = vst [vmem:[#allocation2 + $0x148] sm:$0xff] %v982
    %1255 = vst [vmem:[#allocation2 + $0x150] sm:$0xff] %v1053
    %1256 = vst [vmem:[#allocation2 + $0x158] sm:$0xff] %v1055
    %1257 = vst [vmem:[#allocation2 + $0x160] sm:$0xff] %v1126
    %1258 = vst [vmem:[#allocation2 + $0x168] sm:$0xff] %v1128
    %1259 = vst [vmem:[#allocation2 + $0x170] sm:$0xff] %v1199
    %1260 = vst [vmem:[#allocation2 + $0x178] sm:$0xff] %v1201
    %1261 = vst [vmem:[#allocation2 + $0x180] sm:$0xff] %v986
    %1262 = vst [vmem:[#allocation2 + $0x188] sm:$0xff] %v988
    %1263 = vst [vmem:[#allocation2 + $0x190] sm:$0xff] %v1059
    %1264 = vst [vmem:[#allocation2 + $0x198] sm:$0xff] %v1061
    %1265 = vst [vmem:[#allocation2 + $0x1a0] sm:$0xff] %v1132
    %1266 = vst [vmem:[#allocation2 + $0x1a8] sm:$0xff] %v1134
    %1267 = vst [vmem:[#allocation2 + $0x1b0] sm:$0xff] %v1205
    %1268 = vst [vmem:[#allocation2 + $0x1b8] sm:$0xff] %v1207
    %1269 = vst [vmem:[#allocation2 + $0x1c0] sm:$0xff] %v990
    %1270 = vst [vmem:[#allocation2 + $0x1c8] sm:$0xff] %v992
    %1271 = vst [vmem:[#allocation2 + $0x1d0] sm:$0xff] %v1063
    %1272 = vst [vmem:[#allocation2 + $0x1d8] sm:$0xff] %v1065
    %1273 = vst [vmem:[#allocation2 + $0x1e0] sm:$0xff] %v1136
    %1274 = vst [vmem:[#allocation2 + $0x1e8] sm:$0xff] %v1138
    %1275 = vst [vmem:[#allocation2 + $0x1f0] sm:$0xff] %v1209
    %1276 = vst [vmem:[#allocation2 + $0x1f8] sm:$0xff] %v1211
    %v1277 = vld [vmem:[#allocation8] sm:$0xff]
    %v1278 = vld [vmem:[#allocation8 + $0x8] sm:$0xff]
    %v1279 = vld [vmem:[#allocation8 + $0x10] sm:$0xff]
    %v1280 = vld [vmem:[#allocation8 + $0x18] sm:$0xff]
    %v1281 = vld [vmem:[#allocation8 + $0x20] sm:$0xff]
    %v1282 = vld [vmem:[#allocation8 + $0x28] sm:$0xff]
    %v1283 = vld [vmem:[#allocation8 + $0x30] sm:$0xff]
    %v1284 = vld [vmem:[#allocation8 + $0x38] sm:$0xff]
    %v1285 = vld [vmem:[#allocation8 + $0x40] sm:$0xff]
    %v1286 = vld [vmem:[#allocation8 + $0x48] sm:$0xff]
    %v1287 = vld [vmem:[#allocation8 + $0x50] sm:$0xff]
    %v1288 = vld [vmem:[#allocation8 + $0x58] sm:$0xff]
    %v1289 = vld [vmem:[#allocation8 + $0x60] sm:$0xff]
    %v1290 = vld [vmem:[#allocation8 + $0x68] sm:$0xff]
    %v1291 = vld [vmem:[#allocation8 + $0x70] sm:$0xff]
    %v1292 = vld [vmem:[#allocation8 + $0x78] sm:$0xff]
    %v1293 = vld [vmem:[#allocation8 + $0x80] sm:$0xff]
    %v1294 = vld [vmem:[#allocation8 + $0x88] sm:$0xff]
    %v1295 = vld [vmem:[#allocation8 + $0x90] sm:$0xff]
    %v1296 = vld [vmem:[#allocation8 + $0x98] sm:$0xff]
    %v1297 = vld [vmem:[#allocation8 + $0xa0] sm:$0xff]
    %v1298 = vld [vmem:[#allocation8 + $0xa8] sm:$0xff]
    %v1299 = vld [vmem:[#allocation8 + $0xb0] sm:$0xff]
    %v1300 = vld [vmem:[#allocation8 + $0xb8] sm:$0xff]
    %v1301 = vld [vmem:[#allocation8 + $0xc0] sm:$0xff]
    %v1302 = vld [vmem:[#allocation8 + $0xc8] sm:$0xff]
    %v1303 = vld [vmem:[#allocation8 + $0xd0] sm:$0xff]
    %v1304 = vld [vmem:[#allocation8 + $0xd8] sm:$0xff]
    %v1305 = vld [vmem:[#allocation8 + $0xe0] sm:$0xff]
    %v1306 = vld [vmem:[#allocation8 + $0xe8] sm:$0xff]
    %v1307 = vld [vmem:[#allocation8 + $0xf0] sm:$0xff]
    %v1308 = vld [vmem:[#allocation8 + $0xf8] sm:$0xff]
    %v1309 = vld [vmem:[#allocation8 + $0x100] sm:$0xff]
    %v1310 = vld [vmem:[#allocation8 + $0x108] sm:$0xff]
    %v1311 = vld [vmem:[#allocation8 + $0x110] sm:$0xff]
    %v1312 = vld [vmem:[#allocation8 + $0x118] sm:$0xff]
    %v1313 = vld [vmem:[#allocation8 + $0x120] sm:$0xff]
    %v1314 = vld [vmem:[#allocation8 + $0x128] sm:$0xff]
    %v1315 = vld [vmem:[#allocation8 + $0x130] sm:$0xff]
    %v1316 = vld [vmem:[#allocation8 + $0x138] sm:$0xff]
    %v1317 = vld [vmem:[#allocation8 + $0x140] sm:$0xff]
    %v1318 = vld [vmem:[#allocation8 + $0x148] sm:$0xff]
    %v1319 = vld [vmem:[#allocation8 + $0x150] sm:$0xff]
    %v1320 = vld [vmem:[#allocation8 + $0x158] sm:$0xff]
    %v1321 = vld [vmem:[#allocation8 + $0x160] sm:$0xff]
    %v1322 = vld [vmem:[#allocation8 + $0x168] sm:$0xff]
    %v1323 = vld [vmem:[#allocation8 + $0x170] sm:$0xff]
    %v1324 = vld [vmem:[#allocation8 + $0x178] sm:$0xff]
    %v1325 = vld [vmem:[#allocation8 + $0x180] sm:$0xff]
    %v1326 = vld [vmem:[#allocation8 + $0x188] sm:$0xff]
    %v1327 = vld [vmem:[#allocation8 + $0x190] sm:$0xff]
    %v1328 = vld [vmem:[#allocation8 + $0x198] sm:$0xff]
    %v1329 = vld [vmem:[#allocation8 + $0x1a0] sm:$0xff]
    %v1330 = vld [vmem:[#allocation8 + $0x1a8] sm:$0xff]
    %v1331 = vld [vmem:[#allocation8 + $0x1b0] sm:$0xff]
    %v1332 = vld [vmem:[#allocation8 + $0x1b8] sm:$0xff]
    %v1333 = vld [vmem:[#allocation8 + $0x1c0] sm:$0xff]
    %v1334 = vld [vmem:[#allocation8 + $0x1c8] sm:$0xff]
    %v1335 = vld [vmem:[#allocation8 + $0x1d0] sm:$0xff]
    %v1336 = vld [vmem:[#allocation8 + $0x1d8] sm:$0xff]
    %v1337 = vld [vmem:[#allocation8 + $0x1e0] sm:$0xff]
    %v1338 = vld [vmem:[#allocation8 + $0x1e8] sm:$0xff]
    %v1339 = vld [vmem:[#allocation8 + $0x1f0] sm:$0xff]
    %v1340 = vld [vmem:[#allocation8 + $0x1f8] sm:$0xff]
    %v1341 = vld [vmem:[#allocation8 + $0x200] sm:$0xff]
    %v1342 = vld [vmem:[#allocation8 + $0x208] sm:$0xff]
    %v1343 = vld [vmem:[#allocation8 + $0x210] sm:$0xff]
    %v1344 = vld [vmem:[#allocation8 + $0x218] sm:$0xff]
    %v1345 = vld [vmem:[#allocation8 + $0x220] sm:$0xff]
    %v1346 = vld [vmem:[#allocation8 + $0x228] sm:$0xff]
    %v1347 = vld [vmem:[#allocation8 + $0x230] sm:$0xff]
    %v1348 = vld [vmem:[#allocation8 + $0x238] sm:$0xff]
    %v1349 = vld [vmem:[#allocation8 + $0x240] sm:$0xff]
    %v1350 = vld [vmem:[#allocation8 + $0x248] sm:$0xff]
    %v1351 = vld [vmem:[#allocation8 + $0x250] sm:$0xff]
    %v1352 = vld [vmem:[#allocation8 + $0x258] sm:$0xff]
    %v1353 = vld [vmem:[#allocation8 + $0x260] sm:$0xff]
    %v1354 = vld [vmem:[#allocation8 + $0x268] sm:$0xff]
    %v1355 = vld [vmem:[#allocation8 + $0x270] sm:$0xff]
    %v1356 = vld [vmem:[#allocation8 + $0x278] sm:$0xff]
    %v1357 = vld [vmem:[#allocation8 + $0x280] sm:$0xff]
    %v1358 = vld [vmem:[#allocation8 + $0x288] sm:$0xff]
    %v1359 = vld [vmem:[#allocation8 + $0x290] sm:$0xff]
    %v1360 = vld [vmem:[#allocation8 + $0x298] sm:$0xff]
    %v1361 = vld [vmem:[#allocation8 + $0x2a0] sm:$0xff]
    %v1362 = vld [vmem:[#allocation8 + $0x2a8] sm:$0xff]
    %v1363 = vld [vmem:[#allocation8 + $0x2b0] sm:$0xff]
    %v1364 = vld [vmem:[#allocation8 + $0x2b8] sm:$0xff]
    %v1365 = vld [vmem:[#allocation8 + $0x2c0] sm:$0xff]
    %v1366 = vld [vmem:[#allocation8 + $0x2c8] sm:$0xff]
    %v1367 = vld [vmem:[#allocation8 + $0x2d0] sm:$0xff]
    %v1368 = vld [vmem:[#allocation8 + $0x2d8] sm:$0xff]
    %v1369 = vld [vmem:[#allocation8 + $0x2e0] sm:$0xff]
    %v1370 = vld [vmem:[#allocation8 + $0x2e8] sm:$0xff]
    %v1371 = vld [vmem:[#allocation8 + $0x2f0] sm:$0xff]
    %v1372 = vld [vmem:[#allocation8 + $0x2f8] sm:$0xff]
    %v1373 = vld [vmem:[#allocation8 + $0x300] sm:$0xff]
    %v1374 = vld [vmem:[#allocation8 + $0x308] sm:$0xff]
    %v1375 = vld [vmem:[#allocation8 + $0x310] sm:$0xff]
    %v1376 = vld [vmem:[#allocation8 + $0x318] sm:$0xff]
    %v1377 = vld [vmem:[#allocation8 + $0x320] sm:$0xff]
    %v1378 = vld [vmem:[#allocation8 + $0x328] sm:$0xff]
    %v1379 = vld [vmem:[#allocation8 + $0x330] sm:$0xff]
    %v1380 = vld [vmem:[#allocation8 + $0x338] sm:$0xff]
    %v1381 = vld [vmem:[#allocation8 + $0x340] sm:$0xff]
    %v1382 = vld [vmem:[#allocation8 + $0x348] sm:$0xff]
    %v1383 = vld [vmem:[#allocation8 + $0x350] sm:$0xff]
    %v1384 = vld [vmem:[#allocation8 + $0x358] sm:$0xff]
    %v1385 = vld [vmem:[#allocation8 + $0x360] sm:$0xff]
    %v1386 = vld [vmem:[#allocation8 + $0x368] sm:$0xff]
    %v1387 = vld [vmem:[#allocation8 + $0x370] sm:$0xff]
    %v1388 = vld [vmem:[#allocation8 + $0x378] sm:$0xff]
    %v1389 = vld [vmem:[#allocation8 + $0x380] sm:$0xff]
    %v1390 = vld [vmem:[#allocation8 + $0x388] sm:$0xff]
    %v1391 = vld [vmem:[#allocation8 + $0x390] sm:$0xff]
    %v1392 = vld [vmem:[#allocation8 + $0x398] sm:$0xff]
    %v1393 = vld [vmem:[#allocation8 + $0x3a0] sm:$0xff]
    %v1394 = vld [vmem:[#allocation8 + $0x3a8] sm:$0xff]
    %v1395 = vld [vmem:[#allocation8 + $0x3b0] sm:$0xff]
    %v1396 = vld [vmem:[#allocation8 + $0x3b8] sm:$0xff]
    %v1397 = vld [vmem:[#allocation8 + $0x3c0] sm:$0xff]
    %v1398 = vld [vmem:[#allocation8 + $0x3c8] sm:$0xff]
    %v1399 = vld [vmem:[#allocation8 + $0x3d0] sm:$0xff]
    %v1400 = vld [vmem:[#allocation8 + $0x3d8] sm:$0xff]
    %v1401 = vld [vmem:[#allocation8 + $0x3e0] sm:$0xff]
    %v1402 = vld [vmem:[#allocation8 + $0x3e8] sm:$0xff]
    %v1403 = vld [vmem:[#allocation8 + $0x3f0] sm:$0xff]
    %v1404 = vld [vmem:[#allocation8 + $0x3f8] sm:$0xff]
    %v1405 = vld [vmem:[#allocation2] sm:$0xff]
    %v1406 = vld [vmem:[#allocation2 + $0x8] sm:$0xff]
    %v1407 = vld [vmem:[#allocation2 + $0x10] sm:$0xff]
    %v1408 = vld [vmem:[#allocation2 + $0x18] sm:$0xff]
    %v1409 = vld [vmem:[#allocation2 + $0x20] sm:$0xff]
    %v1410 = vld [vmem:[#allocation2 + $0x28] sm:$0xff]
    %v1411 = vld [vmem:[#allocation2 + $0x30] sm:$0xff]
    %v1412 = vld [vmem:[#allocation2 + $0x38] sm:$0xff]
    %v1541 = vunpack.c.l.b16 %v1277
    %v1542 = vunpack.c.h.b16 %v1277
    %v1543 = vunpack.c.l.b16 %v1278
    %v1544 = vunpack.c.h.b16 %v1278
    %v1545 = vunpack.c.l.b16 %v1279
    %v1546 = vunpack.c.h.b16 %v1279
    %v1547 = vunpack.c.l.b16 %v1280
    %v1548 = vunpack.c.h.b16 %v1280
    %v1549 = vunpack.c.l.b16 %v1281
    %v1550 = vunpack.c.h.b16 %v1281
    %v1551 = vunpack.c.l.b16 %v1282
    %v1552 = vunpack.c.h.b16 %v1282
    %v1553 = vunpack.c.l.b16 %v1283
    %v1554 = vunpack.c.h.b16 %v1283
    %v1555 = vunpack.c.l.b16 %v1284
    %v1556 = vunpack.c.h.b16 %v1284
    %v1557 = vunpack.c.l.b16 %v1285
    %v1558 = vunpack.c.h.b16 %v1285
    %v1559 = vunpack.c.l.b16 %v1286
    %v1560 = vunpack.c.h.b16 %v1286
    %v1561 = vunpack.c.l.b16 %v1287
    %v1562 = vunpack.c.h.b16 %v1287
    %v1563 = vunpack.c.l.b16 %v1288
    %v1564 = vunpack.c.h.b16 %v1288
    %v1565 = vunpack.c.l.b16 %v1289
    %v1566 = vunpack.c.h.b16 %v1289
    %v1567 = vunpack.c.l.b16 %v1290
    %v1568 = vunpack.c.h.b16 %v1290
    %v1569 = vunpack.c.l.b16 %v1291
    %v1570 = vunpack.c.h.b16 %v1291
    %v1571 = vunpack.c.l.b16 %v1292
    %v1572 = vunpack.c.h.b16 %v1292
    %v1573 = vunpack.c.l.b16 %v1293
    %v1574 = vunpack.c.h.b16 %v1293
    %v1575 = vunpack.c.l.b16 %v1294
    %v1576 = vunpack.c.h.b16 %v1294
    %v1577 = vunpack.c.l.b16 %v1295
    %v1578 = vunpack.c.h.b16 %v1295
    %v1579 = vunpack.c.l.b16 %v1296
    %v1580 = vunpack.c.h.b16 %v1296
    %v1581 = vunpack.c.l.b16 %v1297
    %v1582 = vunpack.c.h.b16 %v1297
    %v1583 = vunpack.c.l.b16 %v1298
    %v1584 = vunpack.c.h.b16 %v1298
    %v1585 = vunpack.c.l.b16 %v1299
    %v1586 = vunpack.c.h.b16 %v1299
    %v1587 = vunpack.c.l.b16 %v1300
    %v1588 = vunpack.c.h.b16 %v1300
    %v1589 = vunpack.c.l.b16 %v1301
    %v1590 = vunpack.c.h.b16 %v1301
    %v1591 = vunpack.c.l.b16 %v1302
    %v1592 = vunpack.c.h.b16 %v1302
    %v1593 = vunpack.c.l.b16 %v1303
    %v1594 = vunpack.c.h.b16 %v1303
    %v1595 = vunpack.c.l.b16 %v1304
    %v1596 = vunpack.c.h.b16 %v1304
    %v1597 = vunpack.c.l.b16 %v1305
    %v1598 = vunpack.c.h.b16 %v1305
    %v1599 = vunpack.c.l.b16 %v1306
    %v1600 = vunpack.c.h.b16 %v1306
    %v1601 = vunpack.c.l.b16 %v1307
    %v1602 = vunpack.c.h.b16 %v1307
    %v1603 = vunpack.c.l.b16 %v1308
    %v1604 = vunpack.c.h.b16 %v1308
    %v1605 = vunpack.c.l.b16 %v1309
    %v1606 = vunpack.c.h.b16 %v1309
    %v1607 = vunpack.c.l.b16 %v1310
    %v1608 = vunpack.c.h.b16 %v1310
    %v1609 = vunpack.c.l.b16 %v1311
    %v1610 = vunpack.c.h.b16 %v1311
    %v1611 = vunpack.c.l.b16 %v1312
    %v1612 = vunpack.c.h.b16 %v1312
    %v1613 = vunpack.c.l.b16 %v1313
    %v1614 = vunpack.c.h.b16 %v1313
    %v1615 = vunpack.c.l.b16 %v1314
    %v1616 = vunpack.c.h.b16 %v1314
    %v1617 = vunpack.c.l.b16 %v1315
    %v1618 = vunpack.c.h.b16 %v1315
    %v1619 = vunpack.c.l.b16 %v1316
    %v1620 = vunpack.c.h.b16 %v1316
    %v1621 = vunpack.c.l.b16 %v1317
    %v1622 = vunpack.c.h.b16 %v1317
    %v1623 = vunpack.c.l.b16 %v1318
    %v1624 = vunpack.c.h.b16 %v1318
    %v1625 = vunpack.c.l.b16 %v1319
    %v1626 = vunpack.c.h.b16 %v1319
    %v1627 = vunpack.c.l.b16 %v1320
    %v1628 = vunpack.c.h.b16 %v1320
    %v1629 = vunpack.c.l.b16 %v1321
    %v1630 = vunpack.c.h.b16 %v1321
    %v1631 = vunpack.c.l.b16 %v1322
    %v1632 = vunpack.c.h.b16 %v1322
    %v1633 = vunpack.c.l.b16 %v1323
    %v1634 = vunpack.c.h.b16 %v1323
    %v1635 = vunpack.c.l.b16 %v1324
    %v1636 = vunpack.c.h.b16 %v1324
    %v1637 = vunpack.c.l.b16 %v1325
    %v1638 = vunpack.c.h.b16 %v1325
    %v1639 = vunpack.c.l.b16 %v1326
    %v1640 = vunpack.c.h.b16 %v1326
    %v1641 = vunpack.c.l.b16 %v1327
    %v1642 = vunpack.c.h.b16 %v1327
    %v1643 = vunpack.c.l.b16 %v1328
    %v1644 = vunpack.c.h.b16 %v1328
    %v1645 = vunpack.c.l.b16 %v1329
    %v1646 = vunpack.c.h.b16 %v1329
    %v1647 = vunpack.c.l.b16 %v1330
    %v1648 = vunpack.c.h.b16 %v1330
    %v1649 = vunpack.c.l.b16 %v1331
    %v1650 = vunpack.c.h.b16 %v1331
    %v1651 = vunpack.c.l.b16 %v1332
    %v1652 = vunpack.c.h.b16 %v1332
    %v1653 = vunpack.c.l.b16 %v1333
    %v1654 = vunpack.c.h.b16 %v1333
    %v1655 = vunpack.c.l.b16 %v1334
    %v1656 = vunpack.c.h.b16 %v1334
    %v1657 = vunpack.c.l.b16 %v1335
    %v1658 = vunpack.c.h.b16 %v1335
    %v1659 = vunpack.c.l.b16 %v1336
    %v1660 = vunpack.c.h.b16 %v1336
    %v1661 = vunpack.c.l.b16 %v1337
    %v1662 = vunpack.c.h.b16 %v1337
    %v1663 = vunpack.c.l.b16 %v1338
    %v1664 = vunpack.c.h.b16 %v1338
    %v1665 = vunpack.c.l.b16 %v1339
    %v1666 = vunpack.c.h.b16 %v1339
    %v1667 = vunpack.c.l.b16 %v1340
    %v1668 = vunpack.c.h.b16 %v1340
    %v1669 = vunpack.c.l.b16 %v1341
    %v1670 = vunpack.c.h.b16 %v1341
    %v1671 = vunpack.c.l.b16 %v1342
    %v1672 = vunpack.c.h.b16 %v1342
    %v1673 = vunpack.c.l.b16 %v1343
    %v1674 = vunpack.c.h.b16 %v1343
    %v1675 = vunpack.c.l.b16 %v1344
    %v1676 = vunpack.c.h.b16 %v1344
    %v1677 = vunpack.c.l.b16 %v1345
    %v1678 = vunpack.c.h.b16 %v1345
    %v1679 = vunpack.c.l.b16 %v1346
    %v1680 = vunpack.c.h.b16 %v1346
    %v1681 = vunpack.c.l.b16 %v1347
    %v1682 = vunpack.c.h.b16 %v1347
    %v1683 = vunpack.c.l.b16 %v1348
    %v1684 = vunpack.c.h.b16 %v1348
    %v1685 = vunpack.c.l.b16 %v1349
    %v1686 = vunpack.c.h.b16 %v1349
    %v1687 = vunpack.c.l.b16 %v1350
    %v1688 = vunpack.c.h.b16 %v1350
    %v1689 = vunpack.c.l.b16 %v1351
    %v1690 = vunpack.c.h.b16 %v1351
    %v1691 = vunpack.c.l.b16 %v1352
    %v1692 = vunpack.c.h.b16 %v1352
    %v1693 = vunpack.c.l.b16 %v1353
    %v1694 = vunpack.c.h.b16 %v1353
    %v1695 = vunpack.c.l.b16 %v1354
    %v1696 = vunpack.c.h.b16 %v1354
    %v1697 = vunpack.c.l.b16 %v1355
    %v1698 = vunpack.c.h.b16 %v1355
    %v1699 = vunpack.c.l.b16 %v1356
    %v1700 = vunpack.c.h.b16 %v1356
    %v1701 = vunpack.c.l.b16 %v1357
    %v1702 = vunpack.c.h.b16 %v1357
    %v1703 = vunpack.c.l.b16 %v1358
    %v1704 = vunpack.c.h.b16 %v1358
    %v1705 = vunpack.c.l.b16 %v1359
    %v1706 = vunpack.c.h.b16 %v1359
    %v1707 = vunpack.c.l.b16 %v1360
    %v1708 = vunpack.c.h.b16 %v1360
    %v1709 = vunpack.c.l.b16 %v1361
    %v1710 = vunpack.c.h.b16 %v1361
    %v1711 = vunpack.c.l.b16 %v1362
    %v1712 = vunpack.c.h.b16 %v1362
    %v1713 = vunpack.c.l.b16 %v1363
    %v1714 = vunpack.c.h.b16 %v1363
    %v1715 = vunpack.c.l.b16 %v1364
    %v1716 = vunpack.c.h.b16 %v1364
    %v1717 = vunpack.c.l.b16 %v1365
    %v1718 = vunpack.c.h.b16 %v1365
    %v1719 = vunpack.c.l.b16 %v1366
    %v1720 = vunpack.c.h.b16 %v1366
    %v1721 = vunpack.c.l.b16 %v1367
    %v1722 = vunpack.c.h.b16 %v1367
    %v1723 = vunpack.c.l.b16 %v1368
    %v1724 = vunpack.c.h.b16 %v1368
    %v1725 = vunpack.c.l.b16 %v1369
    %v1726 = vunpack.c.h.b16 %v1369
    %v1727 = vunpack.c.l.b16 %v1370
    %v1728 = vunpack.c.h.b16 %v1370
    %v1729 = vunpack.c.l.b16 %v1371
    %v1730 = vunpack.c.h.b16 %v1371
    %v1731 = vunpack.c.l.b16 %v1372
    %v1732 = vunpack.c.h.b16 %v1372
    %v1733 = vunpack.c.l.b16 %v1373
    %v1734 = vunpack.c.h.b16 %v1373
    %v1735 = vunpack.c.l.b16 %v1374
    %v1736 = vunpack.c.h.b16 %v1374
    %v1737 = vunpack.c.l.b16 %v1375
    %v1738 = vunpack.c.h.b16 %v1375
    %v1739 = vunpack.c.l.b16 %v1376
    %v1740 = vunpack.c.h.b16 %v1376
    %v1741 = vunpack.c.l.b16 %v1377
    %v1742 = vunpack.c.h.b16 %v1377
    %v1743 = vunpack.c.l.b16 %v1378
    %v1744 = vunpack.c.h.b16 %v1378
    %v1745 = vunpack.c.l.b16 %v1379
    %v1746 = vunpack.c.h.b16 %v1379
    %v1747 = vunpack.c.l.b16 %v1380
    %v1748 = vunpack.c.h.b16 %v1380
    %v1749 = vunpack.c.l.b16 %v1381
    %v1750 = vunpack.c.h.b16 %v1381
    %v1751 = vunpack.c.l.b16 %v1382
    %v1752 = vunpack.c.h.b16 %v1382
    %v1753 = vunpack.c.l.b16 %v1383
    %v1754 = vunpack.c.h.b16 %v1383
    %v1755 = vunpack.c.l.b16 %v1384
    %v1756 = vunpack.c.h.b16 %v1384
    %v1757 = vunpack.c.l.b16 %v1385
    %v1758 = vunpack.c.h.b16 %v1385
    %v1759 = vunpack.c.l.b16 %v1386
    %v1760 = vunpack.c.h.b16 %v1386
    %v1761 = vunpack.c.l.b16 %v1387
    %v1762 = vunpack.c.h.b16 %v1387
    %v1763 = vunpack.c.l.b16 %v1388
    %v1764 = vunpack.c.h.b16 %v1388
    %v1765 = vunpack.c.l.b16 %v1389
    %v1766 = vunpack.c.h.b16 %v1389
    %v1767 = vunpack.c.l.b16 %v1390
    %v1768 = vunpack.c.h.b16 %v1390
    %v1769 = vunpack.c.l.b16 %v1391
    %v1770 = vunpack.c.h.b16 %v1391
    %v1771 = vunpack.c.l.b16 %v1392
    %v1772 = vunpack.c.h.b16 %v1392
    %v1773 = vunpack.c.l.b16 %v1393
    %v1774 = vunpack.c.h.b16 %v1393
    %v1775 = vunpack.c.l.b16 %v1394
    %v1776 = vunpack.c.h.b16 %v1394
    %v1777 = vunpack.c.l.b16 %v1395
    %v1778 = vunpack.c.h.b16 %v1395
    %v1779 = vunpack.c.l.b16 %v1396
    %v1780 = vunpack.c.h.b16 %v1396
    %v1781 = vunpack.c.l.b16 %v1397
    %v1782 = vunpack.c.h.b16 %v1397
    %v1783 = vunpack.c.l.b16 %v1398
    %v1784 = vunpack.c.h.b16 %v1398
    %v1785 = vunpack.c.l.b16 %v1399
    %v1786 = vunpack.c.h.b16 %v1399
    %v1787 = vunpack.c.l.b16 %v1400
    %v1788 = vunpack.c.h.b16 %v1400
    %v1789 = vunpack.c.l.b16 %v1401
    %v1790 = vunpack.c.h.b16 %v1401
    %v1791 = vunpack.c.l.b16 %v1402
    %v1792 = vunpack.c.h.b16 %v1402
    %v1793 = vunpack.c.l.b16 %v1403
    %v1794 = vunpack.c.h.b16 %v1403
    %v1795 = vunpack.c.l.b16 %v1404
    %v1796 = vunpack.c.h.b16 %v1404
    %v1797 = vpack.c.b16 %v1549, %v1541
    %v1798 = vpack.c.b16 %v1550, %v1542
    %v1799 = vpack.c.b16 %v1551, %v1543
    %v1800 = vpack.c.b16 %v1552, %v1544
    %v1801 = vpack.c.b16 %v1553, %v1545
    %v1802 = vpack.c.b16 %v1554, %v1546
    %v1803 = vpack.c.b16 %v1555, %v1547
    %v1804 = vpack.c.b16 %v1556, %v1548
    %v1805 = vpack.c.b16 %v1565, %v1557
    %v1806 = vpack.c.b16 %v1566, %v1558
    %v1807 = vpack.c.b16 %v1567, %v1559
    %v1808 = vpack.c.b16 %v1568, %v1560
    %v1809 = vpack.c.b16 %v1569, %v1561
    %v1810 = vpack.c.b16 %v1570, %v1562
    %v1811 = vpack.c.b16 %v1571, %v1563
    %v1812 = vpack.c.b16 %v1572, %v1564
    %v1813 = vpack.c.b16 %v1581, %v1573
    %v1814 = vpack.c.b16 %v1582, %v1574
    %v1815 = vpack.c.b16 %v1583, %v1575
    %v1816 = vpack.c.b16 %v1584, %v1576
    %v1817 = vpack.c.b16 %v1585, %v1577
    %v1818 = vpack.c.b16 %v1586, %v1578
    %v1819 = vpack.c.b16 %v1587, %v1579
    %v1820 = vpack.c.b16 %v1588, %v1580
    %v1821 = vpack.c.b16 %v1597, %v1589
    %v1822 = vpack.c.b16 %v1598, %v1590
    %v1823 = vpack.c.b16 %v1599, %v1591
    %v1824 = vpack.c.b16 %v1600, %v1592
    %v1825 = vpack.c.b16 %v1601, %v1593
    %v1826 = vpack.c.b16 %v1602, %v1594
    %v1827 = vpack.c.b16 %v1603, %v1595
    %v1828 = vpack.c.b16 %v1604, %v1596
    %v1829 = vpack.c.b16 %v1613, %v1605
    %v1830 = vpack.c.b16 %v1614, %v1606
    %v1831 = vpack.c.b16 %v1615, %v1607
    %v1832 = vpack.c.b16 %v1616, %v1608
    %v1833 = vpack.c.b16 %v1617, %v1609
    %v1834 = vpack.c.b16 %v1618, %v1610
    %v1835 = vpack.c.b16 %v1619, %v1611
    %v1836 = vpack.c.b16 %v1620, %v1612
    %v1837 = vpack.c.b16 %v1629, %v1621
    %v1838 = vpack.c.b16 %v1630, %v1622
    %v1839 = vpack.c.b16 %v1631, %v1623
    %v1840 = vpack.c.b16 %v1632, %v1624
    %v1841 = vpack.c.b16 %v1633, %v1625
    %v1842 = vpack.c.b16 %v1634, %v1626
    %v1843 = vpack.c.b16 %v1635, %v1627
    %v1844 = vpack.c.b16 %v1636, %v1628
    %v1845 = vpack.c.b16 %v1645, %v1637
    %v1846 = vpack.c.b16 %v1646, %v1638
    %v1847 = vpack.c.b16 %v1647, %v1639
    %v1848 = vpack.c.b16 %v1648, %v1640
    %v1849 = vpack.c.b16 %v1649, %v1641
    %v1850 = vpack.c.b16 %v1650, %v1642
    %v1851 = vpack.c.b16 %v1651, %v1643
    %v1852 = vpack.c.b16 %v1652, %v1644
    %v1853 = vpack.c.b16 %v1661, %v1653
    %v1854 = vpack.c.b16 %v1662, %v1654
    %v1855 = vpack.c.b16 %v1663, %v1655
    %v1856 = vpack.c.b16 %v1664, %v1656
    %v1857 = vpack.c.b16 %v1665, %v1657
    %v1858 = vpack.c.b16 %v1666, %v1658
    %v1859 = vpack.c.b16 %v1667, %v1659
    %v1860 = vpack.c.b16 %v1668, %v1660
    %v1861 = vpack.c.b16 %v1677, %v1669
    %v1862 = vpack.c.b16 %v1678, %v1670
    %v1863 = vpack.c.b16 %v1679, %v1671
    %v1864 = vpack.c.b16 %v1680, %v1672
    %v1865 = vpack.c.b16 %v1681, %v1673
    %v1866 = vpack.c.b16 %v1682, %v1674
    %v1867 = vpack.c.b16 %v1683, %v1675
    %v1868 = vpack.c.b16 %v1684, %v1676
    %v1869 = vpack.c.b16 %v1693, %v1685
    %v1870 = vpack.c.b16 %v1694, %v1686
    %v1871 = vpack.c.b16 %v1695, %v1687
    %v1872 = vpack.c.b16 %v1696, %v1688
    %v1873 = vpack.c.b16 %v1697, %v1689
    %v1874 = vpack.c.b16 %v1698, %v1690
    %v1875 = vpack.c.b16 %v1699, %v1691
    %v1876 = vpack.c.b16 %v1700, %v1692
    %v1877 = vpack.c.b16 %v1709, %v1701
    %v1878 = vpack.c.b16 %v1710, %v1702
    %v1879 = vpack.c.b16 %v1711, %v1703
    %v1880 = vpack.c.b16 %v1712, %v1704
    %v1881 = vpack.c.b16 %v1713, %v1705
    %v1882 = vpack.c.b16 %v1714, %v1706
    %v1883 = vpack.c.b16 %v1715, %v1707
    %v1884 = vpack.c.b16 %v1716, %v1708
    %v1885 = vpack.c.b16 %v1725, %v1717
    %v1886 = vpack.c.b16 %v1726, %v1718
    %v1887 = vpack.c.b16 %v1727, %v1719
    %v1888 = vpack.c.b16 %v1728, %v1720
    %v1889 = vpack.c.b16 %v1729, %v1721
    %v1890 = vpack.c.b16 %v1730, %v1722
    %v1891 = vpack.c.b16 %v1731, %v1723
    %v1892 = vpack.c.b16 %v1732, %v1724
    %v1893 = vpack.c.b16 %v1741, %v1733
    %v1894 = vpack.c.b16 %v1742, %v1734
    %v1895 = vpack.c.b16 %v1743, %v1735
    %v1896 = vpack.c.b16 %v1744, %v1736
    %v1897 = vpack.c.b16 %v1745, %v1737
    %v1898 = vpack.c.b16 %v1746, %v1738
    %v1899 = vpack.c.b16 %v1747, %v1739
    %v1900 = vpack.c.b16 %v1748, %v1740
    %v1901 = vpack.c.b16 %v1757, %v1749
    %v1902 = vpack.c.b16 %v1758, %v1750
    %v1903 = vpack.c.b16 %v1759, %v1751
    %v1904 = vpack.c.b16 %v1760, %v1752
    %v1905 = vpack.c.b16 %v1761, %v1753
    %v1906 = vpack.c.b16 %v1762, %v1754
    %v1907 = vpack.c.b16 %v1763, %v1755
    %v1908 = vpack.c.b16 %v1764, %v1756
    %v1909 = vpack.c.b16 %v1773, %v1765
    %v1910 = vpack.c.b16 %v1774, %v1766
    %v1911 = vpack.c.b16 %v1775, %v1767
    %v1912 = vpack.c.b16 %v1776, %v1768
    %v1913 = vpack.c.b16 %v1777, %v1769
    %v1914 = vpack.c.b16 %v1778, %v1770
    %v1915 = vpack.c.b16 %v1779, %v1771
    %v1916 = vpack.c.b16 %v1780, %v1772
    %v1917 = vpack.c.b16 %v1789, %v1781
    %v1918 = vpack.c.b16 %v1790, %v1782
    %v1919 = vpack.c.b16 %v1791, %v1783
    %v1920 = vpack.c.b16 %v1792, %v1784
    %v1921 = vpack.c.b16 %v1793, %v1785
    %v1922 = vpack.c.b16 %v1794, %v1786
    %v1923 = vpack.c.b16 %v1795, %v1787
    %v1924 = vpack.c.b16 %v1796, %v1788
    %2053 = vmatprep.subr.bf16.mxu0 %v1798
    %2054 = vmatpush1.bf16.msra.mxu0 %v1797
    %2055 = vmatprep.subr.bf16.mxu0 %v1806
    %2056 = vmatpush1.bf16.msra.mxu0 %v1805
    %2057 = vmatprep.subr.bf16.mxu0 %v1814
    %2058 = vmatpush1.bf16.msra.mxu0 %v1813
    %2059 = vmatprep.subr.bf16.mxu0 %v1822
    %2060 = vmatpush1.bf16.msra.mxu0 %v1821
    %2061 = vmatprep.subr.bf16.mxu0 %v1830
    %2062 = vmatpush1.bf16.msra.mxu0 %v1829
    %2063 = vmatprep.subr.bf16.mxu0 %v1838
    %2064 = vmatpush1.bf16.msra.mxu0 %v1837
    %2065 = vmatprep.subr.bf16.mxu0 %v1846
    %2066 = vmatpush1.bf16.msra.mxu0 %v1845
    %2067 = vmatprep.subr.bf16.mxu0 %v1854
    %2068 = vmatpush1.bf16.msra.mxu0 %v1853
    %2069 = vmatprep.subr.bf16.mxu0 %v1862
    %2070 = vmatpush1.bf16.msra.mxu0 %v1861
    %2071 = vmatprep.subr.bf16.mxu0 %v1870
    %2072 = vmatpush1.bf16.msra.mxu0 %v1869
    %2073 = vmatprep.subr.bf16.mxu0 %v1878
    %2074 = vmatpush1.bf16.msra.mxu0 %v1877
    %2075 = vmatprep.subr.bf16.mxu0 %v1886
    %2076 = vmatpush1.bf16.msra.mxu0 %v1885
    %2077 = vmatprep.subr.bf16.mxu0 %v1894
    %2078 = vmatpush1.bf16.msra.mxu0 %v1893
    %2079 = vmatprep.subr.bf16.mxu0 %v1902
    %2080 = vmatpush1.bf16.msra.mxu0 %v1901
    %2081 = vmatprep.subr.bf16.mxu0 %v1910
    %2082 = vmatpush1.bf16.msra.mxu0 %v1909
    %2083 = vmatprep.subr.bf16.mxu0 %v1918
    %2084 = vmatpush1.bf16.msra.mxu0 %v1917
    %2085 = vmatprep.mubr.bf16.mxu0 0
    %2086 = vmatmul.mubr.bf16.gmra.mrb[0].mxu0 0
    %v2087 = vpop.f32.mrb[0].mxu0
    %v2088 = vadd.f32 0.0, %v2087
    %v2089 = vpop.f32.mrb[0].mxu0
    %v2090 = vadd.f32 0.0, %v2089
    %v2091 = vpop.f32.mrb[0].mxu0
    %v2092 = vpop.f32.mrb[0].mxu0
    %2093 = vdwg.mxu0
    %2094 = vmatprep.subr.bf16.mxu0 %v1800
    %2095 = vmatpush1.bf16.msra.mxu0 %v1799
    %2096 = vmatprep.subr.bf16.mxu0 %v1808
    %2097 = vmatpush1.bf16.msra.mxu0 %v1807
    %2098 = vmatprep.subr.bf16.mxu0 %v1816
    %2099 = vmatpush1.bf16.msra.mxu0 %v1815
    %2100 = vmatprep.subr.bf16.mxu0 %v1824
    %2101 = vmatpush1.bf16.msra.mxu0 %v1823
    %2102 = vmatprep.subr.bf16.mxu0 %v1832
    %2103 = vmatpush1.bf16.msra.mxu0 %v1831
    %2104 = vmatprep.subr.bf16.mxu0 %v1840
    %2105 = vmatpush1.bf16.msra.mxu0 %v1839
    %2106 = vmatprep.subr.bf16.mxu0 %v1848
    %2107 = vmatpush1.bf16.msra.mxu0 %v1847
    %2108 = vmatprep.subr.bf16.mxu0 %v1856
    %2109 = vmatpush1.bf16.msra.mxu0 %v1855
    %2110 = vmatprep.subr.bf16.mxu0 %v1864
    %2111 = vmatpush1.bf16.msra.mxu0 %v1863
    %2112 = vmatprep.subr.bf16.mxu0 %v1872
    %2113 = vmatpush1.bf16.msra.mxu0 %v1871
    %2114 = vmatprep.subr.bf16.mxu0 %v1880
    %2115 = vmatpush1.bf16.msra.mxu0 %v1879
    %2116 = vmatprep.subr.bf16.mxu0 %v1888
    %2117 = vmatpush1.bf16.msra.mxu0 %v1887
    %2118 = vmatprep.subr.bf16.mxu0 %v1896
    %2119 = vmatpush1.bf16.msra.mxu0 %v1895
    %2120 = vmatprep.subr.bf16.mxu0 %v1904
    %2121 = vmatpush1.bf16.msra.mxu0 %v1903
    %2122 = vmatprep.subr.bf16.mxu0 %v1912
    %2123 = vmatpush1.bf16.msra.mxu0 %v1911
    %2124 = vmatprep.subr.bf16.mxu0 %v1920
    %2125 = vmatpush1.bf16.msra.mxu0 %v1919
    %2126 = vmatprep.mubr.bf16.mxu0 0
    %2127 = vmatmul.mubr.bf16.gmra.mrb[0].mxu0 0
    %v2128 = vpop.f32.mrb[0].mxu0
    %v2129 = vadd.f32 0.0, %v2128
    %v2130 = vpop.f32.mrb[0].mxu0
    %v2131 = vadd.f32 0.0, %v2130
    %v2132 = vpop.f32.mrb[0].mxu0
    %v2133 = vpop.f32.mrb[0].mxu0
    %2134 = vdwg.mxu0
    %2135 = vmatprep.subr.bf16.mxu0 %v1802
    %2136 = vmatpush1.bf16.msra.mxu0 %v1801
    %2137 = vmatprep.subr.bf16.mxu0 %v1810
    %2138 = vmatpush1.bf16.msra.mxu0 %v1809
    %2139 = vmatprep.subr.bf16.mxu0 %v1818
    %2140 = vmatpush1.bf16.msra.mxu0 %v1817
    %2141 = vmatprep.subr.bf16.mxu0 %v1826
    %2142 = vmatpush1.bf16.msra.mxu0 %v1825
    %2143 = vmatprep.subr.bf16.mxu0 %v1834
    %2144 = vmatpush1.bf16.msra.mxu0 %v1833
    %2145 = vmatprep.subr.bf16.mxu0 %v1842
    %2146 = vmatpush1.bf16.msra.mxu0 %v1841
    %2147 = vmatprep.subr.bf16.mxu0 %v1850
    %2148 = vmatpush1.bf16.msra.mxu0 %v1849
    %2149 = vmatprep.subr.bf16.mxu0 %v1858
    %2150 = vmatpush1.bf16.msra.mxu0 %v1857
    %2151 = vmatprep.subr.bf16.mxu0 %v1866
    %2152 = vmatpush1.bf16.msra.mxu0 %v1865
    %2153 = vmatprep.subr.bf16.mxu0 %v1874
    %2154 = vmatpush1.bf16.msra.mxu0 %v1873
    %2155 = vmatprep.subr.bf16.mxu0 %v1882
    %2156 = vmatpush1.bf16.msra.mxu0 %v1881
    %2157 = vmatprep.subr.bf16.mxu0 %v1890
    %2158 = vmatpush1.bf16.msra.mxu0 %v1889
    %2159 = vmatprep.subr.bf16.mxu0 %v1898
    %2160 = vmatpush1.bf16.msra.mxu0 %v1897
    %2161 = vmatprep.subr.bf16.mxu0 %v1906
    %2162 = vmatpush1.bf16.msra.mxu0 %v1905
    %2163 = vmatprep.subr.bf16.mxu0 %v1914
    %2164 = vmatpush1.bf16.msra.mxu0 %v1913
    %2165 = vmatprep.subr.bf16.mxu0 %v1922
    %2166 = vmatpush1.bf16.msra.mxu0 %v1921
    %2167 = vmatprep.mubr.bf16.mxu0 0
    %2168 = vmatmul.mubr.bf16.gmra.mrb[0].mxu0 0
    %v2169 = vpop.f32.mrb[0].mxu0
    %v2170 = vadd.f32 0.0, %v2169
    %v2171 = vpop.f32.mrb[0].mxu0
    %v2172 = vadd.f32 0.0, %v2171
    %v2173 = vpop.f32.mrb[0].mxu0
    %v2174 = vpop.f32.mrb[0].mxu0
    %2175 = vdwg.mxu0
    %2176 = vmatprep.subr.bf16.mxu0 %v1804
    %2177 = vmatpush1.bf16.msra.mxu0 %v1803
    %2178 = vmatprep.subr.bf16.mxu0 %v1812
    %2179 = vmatpush1.bf16.msra.mxu0 %v1811
    %2180 = vmatprep.subr.bf16.mxu0 %v1820
    %2181 = vmatpush1.bf16.msra.mxu0 %v1819
    %2182 = vmatprep.subr.bf16.mxu0 %v1828
    %2183 = vmatpush1.bf16.msra.mxu0 %v1827
    %2184 = vmatprep.subr.bf16.mxu0 %v1836
    %2185 = vmatpush1.bf16.msra.mxu0 %v1835
    %2186 = vmatprep.subr.bf16.mxu0 %v1844
    %2187 = vmatpush1.bf16.msra.mxu0 %v1843
    %2188 = vmatprep.subr.bf16.mxu0 %v1852
    %2189 = vmatpush1.bf16.msra.mxu0 %v1851
    %2190 = vmatprep.subr.bf16.mxu0 %v1860
    %2191 = vmatpush1.bf16.msra.mxu0 %v1859
    %2192 = vmatprep.subr.bf16.mxu0 %v1868
    %2193 = vmatpush1.bf16.msra.mxu0 %v1867
    %2194 = vmatprep.subr.bf16.mxu0 %v1876
    %2195 = vmatpush1.bf16.msra.mxu0 %v1875
    %2196 = vmatprep.subr.bf16.mxu0 %v1884
    %2197 = vmatpush1.bf16.msra.mxu0 %v1883
    %2198 = vmatprep.subr.bf16.mxu0 %v1892
    %2199 = vmatpush1.bf16.msra.mxu0 %v1891
    %2200 = vmatprep.subr.bf16.mxu0 %v1900
    %2201 = vmatpush1.bf16.msra.mxu0 %v1899
    %2202 = vmatprep.subr.bf16.mxu0 %v1908
    %2203 = vmatpush1.bf16.msra.mxu0 %v1907
    %2204 = vmatprep.subr.bf16.mxu0 %v1916
    %2205 = vmatpush1.bf16.msra.mxu0 %v1915
    %2206 = vmatprep.subr.bf16.mxu0 %v1924
    %2207 = vmatpush1.bf16.msra.mxu0 %v1923
    %2208 = vmatprep.mubr.bf16.mxu0 0
    %2209 = vmatmul.mubr.bf16.gmra.mrb[0].mxu0 0
    %v2210 = vpop.f32.mrb[0].mxu0
    %v2211 = vadd.f32 0.0, %v2210
    %v2212 = vpop.f32.mrb[0].mxu0
    %v2213 = vadd.f32 0.0, %v2212
    %v2214 = vpop.f32.mrb[0].mxu0
    %v2215 = vpop.f32.mrb[0].mxu0
    %2216 = vdwg.mxu0
    %v2217 = vadd.f32 %v1405, %v2088
    %v2218 = vadd.f32 %v1406, %v2090
    %v2219 = vadd.f32 %v1407, %v2129
    %v2220 = vadd.f32 %v1408, %v2131
    %v2221 = vadd.f32 %v1409, %v2170
    %v2222 = vadd.f32 %v1410, %v2172
    %v2223 = vadd.f32 %v1411, %v2211
    %v2224 = vadd.f32 %v1412, %v2213
    %v2225 = vxor.u32 %v2217, 2147483648
    %v2226 = vxor.u32 %v2218, 2147483648
    %v2227 = vmul.f32 %v2225, 1.442695
    %v2228 = vpow.pop %v2227
    %v2229 = vmul.f32 %v2226, 1.442695
    %v2230 = vpow.pop %v2229
    %v2231 = vadd.f32 %v2228, 1.0
    %v2232 = vadd.f32 %v2230, 1.0
    %v2233 = vrcp.pop %v2231
    %v2234 = vmul.f32 1.0, %v2233
    %v2235 = vrcp.pop %v2232
    %v2236 = vmul.f32 1.0, %v2235
    %v2237 = vxor.u32 %v2219, 2147483648
    %v2238 = vxor.u32 %v2220, 2147483648
    %v2239 = vmul.f32 %v2237, 1.442695
    %v2240 = vpow.pop %v2239
    %v2241 = vmul.f32 %v2238, 1.442695
    %v2242 = vpow.pop %v2241
    %v2243 = vadd.f32 %v2240, 1.0
    %v2244 = vadd.f32 %v2242, 1.0
    %v2245 = vrcp.pop %v2243
    %v2246 = vmul.f32 1.0, %v2245
    %v2247 = vrcp.pop %v2244
    %v2248 = vmul.f32 1.0, %v2247
    %v2249 = vtanh.pop %v2221
    %v2250 = vtanh.pop %v2222
    %v2251 = vxor.u32 %v2223, 2147483648
    %v2252 = vxor.u32 %v2224, 2147483648
    %v2253 = vmul.f32 %v2251, 1.442695
    %v2254 = vpow.pop %v2253
    %v2255 = vmul.f32 %v2252, 1.442695
    %v2256 = vpow.pop %v2255
    %v2257 = vadd.f32 %v2254, 1.0
    %v2258 = vadd.f32 %v2256, 1.0
    %v2259 = vrcp.pop %v2257
    %v2260 = vmul.f32 1.0, %v2259
    %v2261 = vrcp.pop %v2258
    %v2262 = vmul.f32 1.0, %v2261
    %v2263 = vmul.f32 %v2246, 0.0
    %v2264 = vmul.f32 %v2248, 0.0
    %v2265 = vmul.f32 %v2234, %v2249
    %v2266 = vmul.f32 %v2236, %v2250
    %v2267 = vadd.f32 %v2263, %v2265
    %v2268 = vadd.f32 %v2264, %v2266
    %v2269 = vtanh.pop %v2267
    %v2270 = vtanh.pop %v2268
    %v2271 = vmul.f32 %v2260, %v2269
    %v2272 = vmul.f32 %v2262, %v2270
    %v2273 = vld [vmem:[#allocation2 + $0x40] sm:$0xff]
    %v2274 = vld [vmem:[#allocation2 + $0x48] sm:$0xff]
    %v2275 = vld [vmem:[#allocation2 + $0x50] sm:$0xff]
    %v2276 = vld [vmem:[#allocation2 + $0x58] sm:$0xff]
    %v2277 = vld [vmem:[#allocation2 + $0x60] sm:$0xff]
    %v2278 = vld [vmem:[#allocation2 + $0x68] sm:$0xff]
    %v2279 = vld [vmem:[#allocation2 + $0x70] sm:$0xff]
    %v2280 = vld [vmem:[#allocation2 + $0x78] sm:$0xff]
    %v2281 = vpack.c.bf16 %v2271, %v2271
    %v2282 = vpack.c.bf16 %v2272, %v2272
    %2283 = vmatprep.subr.bf16.mxu0 %v1798
    %2284 = vmatpush1.bf16.msra.mxu0 %v1797
    %2285 = vmatprep.subr.bf16.mxu0 %v1806
    %2286 = vmatpush1.bf16.msra.mxu0 %v1805
    %2287 = vmatprep.subr.bf16.mxu0 %v1814
    %2288 = vmatpush1.bf16.msra.mxu0 %v1813
    %2289 = vmatprep.subr.bf16.mxu0 %v1822
    %2290 = vmatpush1.bf16.msra.mxu0 %v1821
    %2291 = vmatprep.subr.bf16.mxu0 %v1830
    %2292 = vmatpush1.bf16.msra.mxu0 %v1829
    %2293 = vmatprep.subr.bf16.mxu0 %v1838
    %2294 = vmatpush1.bf16.msra.mxu0 %v1837
    %2295 = vmatprep.subr.bf16.mxu0 %v1846
    %2296 = vmatpush1.bf16.msra.mxu0 %v1845
    %2297 = vmatprep.subr.bf16.mxu0 %v1854
    %2298 = vmatpush1.bf16.msra.mxu0 %v1853
    %2299 = vmatprep.subr.bf16.mxu0 %v1862
    %2300 = vmatpush1.bf16.msra.mxu0 %v1861
    %2301 = vmatprep.subr.bf16.mxu0 %v1870
    %2302 = vmatpush1.bf16.msra.mxu0 %v1869
    %2303 = vmatprep.subr.bf16.mxu0 %v1878
    %2304 = vmatpush1.bf16.msra.mxu0 %v1877
    %2305 = vmatprep.subr.bf16.mxu0 %v1886
    %2306 = vmatpush1.bf16.msra.mxu0 %v1885
    %2307 = vmatprep.subr.bf16.mxu0 %v1894
    %2308 = vmatpush1.bf16.msra.mxu0 %v1893
    %2309 = vmatprep.subr.bf16.mxu0 %v1902
    %2310 = vmatpush1.bf16.msra.mxu0 %v1901
    %2311 = vmatprep.subr.bf16.mxu0 %v1910
    %2312 = vmatpush1.bf16.msra.mxu0 %v1909
    %2313 = vmatprep.subr.bf16.mxu0 %v1918
    %2314 = vmatpush1.bf16.msra.mxu0 %v1917
    %2315 = vmatprep.mubr.bf16.mxu0 %v2282
    %2316 = vmatmul.mubr.bf16.gmra.mrb[0].mxu0 %v2281
    %v2317 = vpop.f32.mrb[0].mxu0
    %v2318 = vadd.f32 0.0, %v2317
    %v2319 = vpop.f32.mrb[0].mxu0
    %v2320 = vadd.f32 0.0, %v2319
    %v2321 = vpop.f32.mrb[0].mxu0
    %v2322 = vpop.f32.mrb[0].mxu0
    %2323 = vdwg.mxu0
    %2324 = vmatprep.subr.bf16.mxu0 %v1800
    %2325 = vmatpush1.bf16.msra.mxu0 %v1799
    %2326 = vmatprep.subr.bf16.mxu0 %v1808
    %2327 = vmatpush1.bf16.msra.mxu0 %v1807
    %2328 = vmatprep.subr.bf16.mxu0 %v1816
    %2329 = vmatpush1.bf16.msra.mxu0 %v1815
    %2330 = vmatprep.subr.bf16.mxu0 %v1824
    %2331 = vmatpush1.bf16.msra.mxu0 %v1823
    %2332 = vmatprep.subr.bf16.mxu0 %v1832
    %2333 = vmatpush1.bf16.msra.mxu0 %v1831
    %2334 = vmatprep.subr.bf16.mxu0 %v1840
    %2335 = vmatpush1.bf16.msra.mxu0 %v1839
    %2336 = vmatprep.subr.bf16.mxu0 %v1848
    %2337 = vmatpush1.bf16.msra.mxu0 %v1847
    %2338 = vmatprep.subr.bf16.mxu0 %v1856
    %2339 = vmatpush1.bf16.msra.mxu0 %v1855
    %2340 = vmatprep.subr.bf16.mxu0 %v1864
    %2341 = vmatpush1.bf16.msra.mxu0 %v1863
    %2342 = vmatprep.subr.bf16.mxu0 %v1872
    %2343 = vmatpush1.bf16.msra.mxu0 %v1871
    %2344 = vmatprep.subr.bf16.mxu0 %v1880
    %2345 = vmatpush1.bf16.msra.mxu0 %v1879
    %2346 = vmatprep.subr.bf16.mxu0 %v1888
    %2347 = vmatpush1.bf16.msra.mxu0 %v1887
    %2348 = vmatprep.subr.bf16.mxu0 %v1896
    %2349 = vmatpush1.bf16.msra.mxu0 %v1895
    %2350 = vmatprep.subr.bf16.mxu0 %v1904
    %2351 = vmatpush1.bf16.msra.mxu0 %v1903
    %2352 = vmatprep.subr.bf16.mxu0 %v1912
    %2353 = vmatpush1.bf16.msra.mxu0 %v1911
    %2354 = vmatprep.subr.bf16.mxu0 %v1920
    %2355 = vmatpush1.bf16.msra.mxu0 %v1919
    %2356 = vmatprep.mubr.bf16.mxu0 %v2282
    %2357 = vmatmul.mubr.bf16.gmra.mrb[0].mxu0 %v2281
    %v2358 = vpop.f32.mrb[0].mxu0
    %v2359 = vadd.f32 0.0, %v2358
    %v2360 = vpop.f32.mrb[0].mxu0
    %v2361 = vadd.f32 0.0, %v2360
    %v2362 = vpop.f32.mrb[0].mxu0
    %v2363 = vpop.f32.mrb[0].mxu0
    %2364 = vdwg.mxu0
    %2365 = vmatprep.subr.bf16.mxu0 %v1802
    %2366 = vmatpush1.bf16.msra.mxu0 %v1801
    %2367 = vmatprep.subr.bf16.mxu0 %v1810
    %2368 = vmatpush1.bf16.msra.mxu0 %v1809
    %2369 = vmatprep.subr.bf16.mxu0 %v1818
    %2370 = vmatpush1.bf16.msra.mxu0 %v1817
    %2371 = vmatprep.subr.bf16.mxu0 %v1826
    %2372 = vmatpush1.bf16.msra.mxu0 %v1825
    %2373 = vmatprep.subr.bf16.mxu0 %v1834
    %2374 = vmatpush1.bf16.msra.mxu0 %v1833
    %2375 = vmatprep.subr.bf16.mxu0 %v1842
    %2376 = vmatpush1.bf16.msra.mxu0 %v1841
    %2377 = vmatprep.subr.bf16.mxu0 %v1850
    %2378 = vmatpush1.bf16.msra.mxu0 %v1849
    %2379 = vmatprep.subr.bf16.mxu0 %v1858
    %2380 = vmatpush1.bf16.msra.mxu0 %v1857
    %2381 = vmatprep.subr.bf16.mxu0 %v1866
    %2382 = vmatpush1.bf16.msra.mxu0 %v1865
    %2383 = vmatprep.subr.bf16.mxu0 %v1874
    %2384 = vmatpush1.bf16.msra.mxu0 %v1873
    %2385 = vmatprep.subr.bf16.mxu0 %v1882
    %2386 = vmatpush1.bf16.msra.mxu0 %v1881
    %2387 = vmatprep.subr.bf16.mxu0 %v1890
    %2388 = vmatpush1.bf16.msra.mxu0 %v1889
    %2389 = vmatprep.subr.bf16.mxu0 %v1898
    %2390 = vmatpush1.bf16.msra.mxu0 %v1897
    %2391 = vmatprep.subr.bf16.mxu0 %v1906
    %2392 = vmatpush1.bf16.msra.mxu0 %v1905
    %2393 = vmatprep.subr.bf16.mxu0 %v1914
    %2394 = vmatpush1.bf16.msra.mxu0 %v1913
    %2395 = vmatprep.subr.bf16.mxu0 %v1922
    %2396 = vmatpush1.bf16.msra.mxu0 %v1921
    %2397 = vmatprep.mubr.bf16.mxu0 %v2282
    %2398 = vmatmul.mubr.bf16.gmra.mrb[0].mxu0 %v2281
    %v2399 = vpop.f32.mrb[0].mxu0
    %v2400 = vadd.f32 0.0, %v2399
    %v2401 = vpop.f32.mrb[0].mxu0
    %v2402 = vadd.f32 0.0, %v2401
    %v2403 = vpop.f32.mrb[0].mxu0
    %v2404 = vpop.f32.mrb[0].mxu0
    %2405 = vdwg.mxu0
    %2406 = vmatprep.subr.bf16.mxu0 %v1804
    %2407 = vmatpush1.bf16.msra.mxu0 %v1803
    %2408 = vmatprep.subr.bf16.mxu0 %v1812
    %2409 = vmatpush1.bf16.msra.mxu0 %v1811
    %2410 = vmatprep.subr.bf16.mxu0 %v1820
    %2411 = vmatpush1.bf16.msra.mxu0 %v1819
    %2412 = vmatprep.subr.bf16.mxu0 %v1828
    %2413 = vmatpush1.bf16.msra.mxu0 %v1827
    %2414 = vmatprep.subr.bf16.mxu0 %v1836
    %2415 = vmatpush1.bf16.msra.mxu0 %v1835
    %2416 = vmatprep.subr.bf16.mxu0 %v1844
    %2417 = vmatpush1.bf16.msra.mxu0 %v1843
    %2418 = vmatprep.subr.bf16.mxu0 %v1852
    %2419 = vmatpush1.bf16.msra.mxu0 %v1851
    %2420 = vmatprep.subr.bf16.mxu0 %v1860
    %2421 = vmatpush1.bf16.msra.mxu0 %v1859
    %2422 = vmatprep.subr.bf16.mxu0 %v1868
    %2423 = vmatpush1.bf16.msra.mxu0 %v1867
    %2424 = vmatprep.subr.bf16.mxu0 %v1876
    %2425 = vmatpush1.bf16.msra.mxu0 %v1875
    %2426 = vmatprep.subr.bf16.mxu0 %v1884
    %2427 = vmatpush1.bf16.msra.mxu0 %v1883
    %2428 = vmatprep.subr.bf16.mxu0 %v1892
    %2429 = vmatpush1.bf16.msra.mxu0 %v1891
    %2430 = vmatprep.subr.bf16.mxu0 %v1900
    %2431 = vmatpush1.bf16.msra.mxu0 %v1899
    %2432 = vmatprep.subr.bf16.mxu0 %v1908
    %2433 = vmatpush1.bf16.msra.mxu0 %v1907
    %2434 = vmatprep.subr.bf16.mxu0 %v1916
    %2435 = vmatpush1.bf16.msra.mxu0 %v1915
    %2436 = vmatprep.subr.bf16.mxu0 %v1924
    %2437 = vmatpush1.bf16.msra.mxu0 %v1923
    %2438 = vmatprep.mubr.bf16.mxu0 %v2282
    %2439 = vmatmul.mubr.bf16.gmra.mrb[0].mxu0 %v2281
    %v2440 = vpop.f32.mrb[0].mxu0
    %v2441 = vadd.f32 0.0, %v2440
    %v2442 = vpop.f32.mrb[0].mxu0
    %v2443 = vadd.f32 0.0, %v2442
    %v2444 = vpop.f32.mrb[0].mxu0
    %v2445 = vpop.f32.mrb[0].mxu0
    %2446 = vdwg.mxu0
    %v2447 = vadd.f32 %v2273, %v2318
    %v2448 = vadd.f32 %v2274, %v2320
    %v2449 = vadd.f32 %v2275, %v2359
    %v2450 = vadd.f32 %v2276, %v2361
    %v2451 = vadd.f32 %v2277, %v2400
    %v2452 = vadd.f32 %v2278, %v2402
    %v2453 = vadd.f32 %v2279, %v2441
    %v2454 = vadd.f32 %v2280, %v2443
    %v2455 = vxor.u32 %v2447, 2147483648
    %v2456 = vxor.u32 %v2448, 2147483648
    %v2457 = vmul.f32 %v2455, 1.442695
    %v2458 = vpow.pop %v2457
    %v2459 = vmul.f32 %v2456, 1.442695
    %v2460 = vpow.pop %v2459
    %v2461 = vadd.f32 %v2458, 1.0
    %v2462 = vadd.f32 %v2460, 1.0
    %v2463 = vrcp.pop %v2461
    %v2464 = vmul.f32 1.0, %v2463
    %v2465 = vrcp.pop %v2462
    %v2466 = vmul.f32 1.0, %v2465
    %v2467 = vxor.u32 %v2449, 2147483648
    %v2468 = vxor.u32 %v2450, 2147483648
    %v2469 = vmul.f32 %v2467, 1.442695
    %v2470 = vpow.pop %v2469
    %v2471 = vmul.f32 %v2468, 1.442695
    %v2472 = vpow.pop %v2471
    %v2473 = vadd.f32 %v2470, 1.0
    %v2474 = vadd.f32 %v2472, 1.0
    %v2475 = vrcp.pop %v2473
    %v2476 = vmul.f32 1.0, %v2475
    %v2477 = vrcp.pop %v2474
    %v2478 = vmul.f32 1.0, %v2477
    %v2479 = vtanh.pop %v2451
    %v2480 = vtanh.pop %v2452
    %v2481 = vxor.u32 %v2453, 2147483648
    %v2482 = vxor.u32 %v2454, 2147483648
    %v2483 = vmul.f32 %v2481, 1.442695
    %v2484 = vpow.pop %v2483
    %v2485 = vmul.f32 %v2482, 1.442695
    %v2486 = vpow.pop %v2485
    %v2487 = vadd.f32 %v2484, 1.0
    %v2488 = vadd.f32 %v2486, 1.0
    %v2489 = vrcp.pop %v2487
    %v2490 = vmul.f32 1.0, %v2489
    %v2491 = vrcp.pop %v2488
    %v2492 = vmul.f32 1.0, %v2491
    %v2493 = vmul.f32 %v2476, %v2267
    %v2494 = vmul.f32 %v2478, %v2268
    %v2495 = vmul.f32 %v2464, %v2479
    %v2496 = vmul.f32 %v2466, %v2480
    %v2497 = vadd.f32 %v2493, %v2495
    %v2498 = vadd.f32 %v2494, %v2496
    %v2499 = vtanh.pop %v2497
    %v2500 = vtanh.pop %v2498
    %v2501 = vmul.f32 %v2490, %v2499
    %v2502 = vmul.f32 %v2492, %v2500
    %v2503 = vld [vmem:[#allocation2 + $0x80] sm:$0xff]
    %v2504 = vld [vmem:[#allocation2 + $0x88] sm:$0xff]
    %v2505 = vld [vmem:[#allocation2 + $0x90] sm:$0xff]
    %v2506 = vld [vmem:[#allocation2 + $0x98] sm:$0xff]
    %v2507 = vld [vmem:[#allocation2 + $0xa0] sm:$0xff]
    %v2508 = vld [vmem:[#allocation2 + $0xa8] sm:$0xff]
    %v2509 = vld [vmem:[#allocation2 + $0xb0] sm:$0xff]
    %v2510 = vld [vmem:[#allocation2 + $0xb8] sm:$0xff]
    %v2511 = vpack.c.bf16 %v2501, %v2501
    %v2512 = vpack.c.bf16 %v2502, %v2502
    %2513 = vmatprep.subr.bf16.mxu0 %v1798
    %2514 = vmatpush1.bf16.msra.mxu0 %v1797
    %2515 = vmatprep.subr.bf16.mxu0 %v1806
    %2516 = vmatpush1.bf16.msra.mxu0 %v1805
    %2517 = vmatprep.subr.bf16.mxu0 %v1814
    %2518 = vmatpush1.bf16.msra.mxu0 %v1813
    %2519 = vmatprep.subr.bf16.mxu0 %v1822
    %2520 = vmatpush1.bf16.msra.mxu0 %v1821
    %2521 = vmatprep.subr.bf16.mxu0 %v1830
    %2522 = vmatpush1.bf16.msra.mxu0 %v1829
    %2523 = vmatprep.subr.bf16.mxu0 %v1838
    %2524 = vmatpush1.bf16.msra.mxu0 %v1837
    %2525 = vmatprep.subr.bf16.mxu0 %v1846
    %2526 = vmatpush1.bf16.msra.mxu0 %v1845
    %2527 = vmatprep.subr.bf16.mxu0 %v1854
    %2528 = vmatpush1.bf16.msra.mxu0 %v1853
    %2529 = vmatprep.subr.bf16.mxu0 %v1862
    %2530 = vmatpush1.bf16.msra.mxu0 %v1861
    %2531 = vmatprep.subr.bf16.mxu0 %v1870
    %2532 = vmatpush1.bf16.msra.mxu0 %v1869
    %2533 = vmatprep.subr.bf16.mxu0 %v1878
    %2534 = vmatpush1.bf16.msra.mxu0 %v1877
    %2535 = vmatprep.subr.bf16.mxu0 %v1886
    %2536 = vmatpush1.bf16.msra.mxu0 %v1885
    %2537 = vmatprep.subr.bf16.mxu0 %v1894
    %2538 = vmatpush1.bf16.msra.mxu0 %v1893
    %2539 = vmatprep.subr.bf16.mxu0 %v1902
    %2540 = vmatpush1.bf16.msra.mxu0 %v1901
    %2541 = vmatprep.subr.bf16.mxu0 %v1910
    %2542 = vmatpush1.bf16.msra.mxu0 %v1909
    %2543 = vmatprep.subr.bf16.mxu0 %v1918
    %2544 = vmatpush1.bf16.msra.mxu0 %v1917
    %2545 = vmatprep.mubr.bf16.mxu0 %v2512
    %2546 = vmatmul.mubr.bf16.gmra.mrb[0].mxu0 %v2511
    %v2547 = vpop.f32.mrb[0].mxu0
    %v2548 = vadd.f32 0.0, %v2547
    %v2549 = vpop.f32.mrb[0].mxu0
    %v2550 = vadd.f32 0.0, %v2549
    %v2551 = vpop.f32.mrb[0].mxu0
    %v2552 = vpop.f32.mrb[0].mxu0
    %2553 = vdwg.mxu0
    %2554 = vmatprep.subr.bf16.mxu0 %v1800
    %2555 = vmatpush1.bf16.msra.mxu0 %v1799
    %2556 = vmatprep.subr.bf16.mxu0 %v1808
    %2557 = vmatpush1.bf16.msra.mxu0 %v1807
    %2558 = vmatprep.subr.bf16.mxu0 %v1816
    %2559 = vmatpush1.bf16.msra.mxu0 %v1815
    %2560 = vmatprep.subr.bf16.mxu0 %v1824
    %2561 = vmatpush1.bf16.msra.mxu0 %v1823
    %2562 = vmatprep.subr.bf16.mxu0 %v1832
    %2563 = vmatpush1.bf16.msra.mxu0 %v1831
    %2564 = vmatprep.subr.bf16.mxu0 %v1840
    %2565 = vmatpush1.bf16.msra.mxu0 %v1839
    %2566 = vmatprep.subr.bf16.mxu0 %v1848
    %2567 = vmatpush1.bf16.msra.mxu0 %v1847
    %2568 = vmatprep.subr.bf16.mxu0 %v1856
    %2569 = vmatpush1.bf16.msra.mxu0 %v1855
    %2570 = vmatprep.subr.bf16.mxu0 %v1864
    %2571 = vmatpush1.bf16.msra.mxu0 %v1863
    %2572 = vmatprep.subr.bf16.mxu0 %v1872
    %2573 = vmatpush1.bf16.msra.mxu0 %v1871
    %2574 = vmatprep.subr.bf16.mxu0 %v1880
    %2575 = vmatpush1.bf16.msra.mxu0 %v1879
    %2576 = vmatprep.subr.bf16.mxu0 %v1888
    %2577 = vmatpush1.bf16.msra.mxu0 %v1887
    %2578 = vmatprep.subr.bf16.mxu0 %v1896
    %2579 = vmatpush1.bf16.msra.mxu0 %v1895
    %2580 = vmatprep.subr.bf16.mxu0 %v1904
    %2581 = vmatpush1.bf16.msra.mxu0 %v1903
    %2582 = vmatprep.subr.bf16.mxu0 %v1912
    %2583 = vmatpush1.bf16.msra.mxu0 %v1911
    %2584 = vmatprep.subr.bf16.mxu0 %v1920
    %2585 = vmatpush1.bf16.msra.mxu0 %v1919
    %2586 = vmatprep.mubr.bf16.mxu0 %v2512
    %2587 = vmatmul.mubr.bf16.gmra.mrb[0].mxu0 %v2511
    %v2588 = vpop.f32.mrb[0].mxu0
    %v2589 = vadd.f32 0.0, %v2588
    %v2590 = vpop.f32.mrb[0].mxu0
    %v2591 = vadd.f32 0.0, %v2590
    %v2592 = vpop.f32.mrb[0].mxu0
    %v2593 = vpop.f32.mrb[0].mxu0
    %2594 = vdwg.mxu0
    %2595 = vmatprep.subr.bf16.mxu0 %v1802
    %2596 = vmatpush1.bf16.msra.mxu0 %v1801
    %2597 = vmatprep.subr.bf16.mxu0 %v1810
    %2598 = vmatpush1.bf16.msra.mxu0 %v1809
    %2599 = vmatprep.subr.bf16.mxu0 %v1818
    %2600 = vmatpush1.bf16.msra.mxu0 %v1817
    %2601 = vmatprep.subr.bf16.mxu0 %v1826
    %2602 = vmatpush1.bf16.msra.mxu0 %v1825
    %2603 = vmatprep.subr.bf16.mxu0 %v1834
    %2604 = vmatpush1.bf16.msra.mxu0 %v1833
    %2605 = vmatprep.subr.bf16.mxu0 %v1842
    %2606 = vmatpush1.bf16.msra.mxu0 %v1841
    %2607 = vmatprep.subr.bf16.mxu0 %v1850
    %2608 = vmatpush1.bf16.msra.mxu0 %v1849
    %2609 = vmatprep.subr.bf16.mxu0 %v1858
    %2610 = vmatpush1.bf16.msra.mxu0 %v1857
    %2611 = vmatprep.subr.bf16.mxu0 %v1866
    %2612 = vmatpush1.bf16.msra.mxu0 %v1865
    %2613 = vmatprep.subr.bf16.mxu0 %v1874
    %2614 = vmatpush1.bf16.msra.mxu0 %v1873
    %2615 = vmatprep.subr.bf16.mxu0 %v1882
    %2616 = vmatpush1.bf16.msra.mxu0 %v1881
    %2617 = vmatprep.subr.bf16.mxu0 %v1890
    %2618 = vmatpush1.bf16.msra.mxu0 %v1889
    %2619 = vmatprep.subr.bf16.mxu0 %v1898
    %2620 = vmatpush1.bf16.msra.mxu0 %v1897
    %2621 = vmatprep.subr.bf16.mxu0 %v1906
    %2622 = vmatpush1.bf16.msra.mxu0 %v1905
    %2623 = vmatprep.subr.bf16.mxu0 %v1914
    %2624 = vmatpush1.bf16.msra.mxu0 %v1913
    %2625 = vmatprep.subr.bf16.mxu0 %v1922
    %2626 = vmatpush1.bf16.msra.mxu0 %v1921
    %2627 = vmatprep.mubr.bf16.mxu0 %v2512
    %2628 = vmatmul.mubr.bf16.gmra.mrb[0].mxu0 %v2511
    %v2629 = vpop.f32.mrb[0].mxu0
    %v2630 = vadd.f32 0.0, %v2629
    %v2631 = vpop.f32.mrb[0].mxu0
    %v2632 = vadd.f32 0.0, %v2631
    %v2633 = vpop.f32.mrb[0].mxu0
    %v2634 = vpop.f32.mrb[0].mxu0
    %2635 = vdwg.mxu0
    %2636 = vmatprep.subr.bf16.mxu0 %v1804
    %2637 = vmatpush1.bf16.msra.mxu0 %v1803
    %2638 = vmatprep.subr.bf16.mxu0 %v1812
    %2639 = vmatpush1.bf16.msra.mxu0 %v1811
    %2640 = vmatprep.subr.bf16.mxu0 %v1820
    %2641 = vmatpush1.bf16.msra.mxu0 %v1819
    %2642 = vmatprep.subr.bf16.mxu0 %v1828
    %2643 = vmatpush1.bf16.msra.mxu0 %v1827
    %2644 = vmatprep.subr.bf16.mxu0 %v1836
    %2645 = vmatpush1.bf16.msra.mxu0 %v1835
    %2646 = vmatprep.subr.bf16.mxu0 %v1844
    %2647 = vmatpush1.bf16.msra.mxu0 %v1843
    %2648 = vmatprep.subr.bf16.mxu0 %v1852
    %2649 = vmatpush1.bf16.msra.mxu0 %v1851
    %2650 = vmatprep.subr.bf16.mxu0 %v1860
    %2651 = vmatpush1.bf16.msra.mxu0 %v1859
    %2652 = vmatprep.subr.bf16.mxu0 %v1868
    %2653 = vmatpush1.bf16.msra.mxu0 %v1867
    %2654 = vmatprep.subr.bf16.mxu0 %v1876
    %2655 = vmatpush1.bf16.msra.mxu0 %v1875
    %2656 = vmatprep.subr.bf16.mxu0 %v1884
    %2657 = vmatpush1.bf16.msra.mxu0 %v1883
    %2658 = vmatprep.subr.bf16.mxu0 %v1892
    %2659 = vmatpush1.bf16.msra.mxu0 %v1891
    %2660 = vmatprep.subr.bf16.mxu0 %v1900
    %2661 = vmatpush1.bf16.msra.mxu0 %v1899
    %2662 = vmatprep.subr.bf16.mxu0 %v1908
    %2663 = vmatpush1.bf16.msra.mxu0 %v1907
    %2664 = vmatprep.subr.bf16.mxu0 %v1916
    %2665 = vmatpush1.bf16.msra.mxu0 %v1915
    %2666 = vmatprep.subr.bf16.mxu0 %v1924
    %2667 = vmatpush1.bf16.msra.mxu0 %v1923
    %2668 = vmatprep.mubr.bf16.mxu0 %v2512
    %2669 = vmatmul.mubr.bf16.gmra.mrb[0].mxu0 %v2511
    %v2670 = vpop.f32.mrb[0].mxu0
    %v2671 = vadd.f32 0.0, %v2670
    %v2672 = vpop.f32.mrb[0].mxu0
    %v2673 = vadd.f32 0.0, %v2672
    %v2674 = vpop.f32.mrb[0].mxu0
    %v2675 = vpop.f32.mrb[0].mxu0
    %2676 = vdwg.mxu0
    %v2677 = vadd.f32 %v2503, %v2548
    %v2678 = vadd.f32 %v2504, %v2550
    %v2679 = vadd.f32 %v2505, %v2589
    %v2680 = vadd.f32 %v2506, %v2591
    %v2681 = vadd.f32 %v2507, %v2630
    %v2682 = vadd.f32 %v2508, %v2632
    %v2683 = vadd.f32 %v2509, %v2671
    %v2684 = vadd.f32 %v2510, %v2673
    %v2685 = vxor.u32 %v2677, 2147483648
    %v2686 = vxor.u32 %v2678, 2147483648
    %v2687 = vmul.f32 %v2685, 1.442695
    %v2688 = vpow.pop %v2687
    %v2689 = vmul.f32 %v2686, 1.442695
    %v2690 = vpow.pop %v2689
    %v2691 = vadd.f32 %v2688, 1.0
    %v2692 = vadd.f32 %v2690, 1.0
    %v2693 = vrcp.pop %v2691
    %v2694 = vmul.f32 1.0, %v2693
    %v2695 = vrcp.pop %v2692
    %v2696 = vmul.f32 1.0, %v2695
    %v2697 = vxor.u32 %v2679, 2147483648
    %v2698 = vxor.u32 %v2680, 2147483648
    %v2699 = vmul.f32 %v2697, 1.442695
    %v2700 = vpow.pop %v2699
    %v2701 = vmul.f32 %v2698, 1.442695
    %v2702 = vpow.pop %v2701
    %v2703 = vadd.f32 %v2700, 1.0
    %v2704 = vadd.f32 %v2702, 1.0
    %v2705 = vrcp.pop %v2703
    %v2706 = vmul.f32 1.0, %v2705
    %v2707 = vrcp.pop %v2704
    %v2708 = vmul.f32 1.0, %v2707
    %v2709 = vtanh.pop %v2681
    %v2710 = vtanh.pop %v2682
    %v2711 = vxor.u32 %v2683, 2147483648
    %v2712 = vxor.u32 %v2684, 2147483648
    %v2713 = vmul.f32 %v2711, 1.442695
    %v2714 = vpow.pop %v2713
    %v2715 = vmul.f32 %v2712, 1.442695
    %v2716 = vpow.pop %v2715
    %v2717 = vadd.f32 %v2714, 1.0
    %v2718 = vadd.f32 %v2716, 1.0
    %v2719 = vrcp.pop %v2717
    %v2720 = vmul.f32 1.0, %v2719
    %v2721 = vrcp.pop %v2718
    %v2722 = vmul.f32 1.0, %v2721
    %v2723 = vmul.f32 %v2706, %v2497
    %v2724 = vmul.f32 %v2708, %v2498
    %v2725 = vmul.f32 %v2694, %v2709
    %v2726 = vmul.f32 %v2696, %v2710
    %v2727 = vadd.f32 %v2723, %v2725
    %v2728 = vadd.f32 %v2724, %v2726
    %v2729 = vtanh.pop %v2727
    %v2730 = vtanh.pop %v2728
    %v2731 = vmul.f32 %v2720, %v2729
    %v2732 = vmul.f32 %v2722, %v2730
    %v2733 = vld [vmem:[#allocation2 + $0xc0] sm:$0xff]
    %v2734 = vld [vmem:[#allocation2 + $0xc8] sm:$0xff]
    %v2735 = vld [vmem:[#allocation2 + $0xd0] sm:$0xff]
    %v2736 = vld [vmem:[#allocation2 + $0xd8] sm:$0xff]
    %v2737 = vld [vmem:[#allocation2 + $0xe0] sm:$0xff]
    %v2738 = vld [vmem:[#allocation2 + $0xe8] sm:$0xff]
    %v2739 = vld [vmem:[#allocation2 + $0xf0] sm:$0xff]
    %v2740 = vld [vmem:[#allocation2 + $0xf8] sm:$0xff]
    %v2741 = vpack.c.bf16 %v2731, %v2731
    %v2742 = vpack.c.bf16 %v2732, %v2732
    %2743 = vmatprep.subr.bf16.mxu0 %v1798
    %2744 = vmatpush1.bf16.msra.mxu0 %v1797
    %2745 = vmatprep.subr.bf16.mxu0 %v1806
    %2746 = vmatpush1.bf16.msra.mxu0 %v1805
    %2747 = vmatprep.subr.bf16.mxu0 %v1814
    %2748 = vmatpush1.bf16.msra.mxu0 %v1813
    %2749 = vmatprep.subr.bf16.mxu0 %v1822
    %2750 = vmatpush1.bf16.msra.mxu0 %v1821
    %2751 = vmatprep.subr.bf16.mxu0 %v1830
    %2752 = vmatpush1.bf16.msra.mxu0 %v1829
    %2753 = vmatprep.subr.bf16.mxu0 %v1838
    %2754 = vmatpush1.bf16.msra.mxu0 %v1837
    %2755 = vmatprep.subr.bf16.mxu0 %v1846
    %2756 = vmatpush1.bf16.msra.mxu0 %v1845
    %2757 = vmatprep.subr.bf16.mxu0 %v1854
    %2758 = vmatpush1.bf16.msra.mxu0 %v1853
    %2759 = vmatprep.subr.bf16.mxu0 %v1862
    %2760 = vmatpush1.bf16.msra.mxu0 %v1861
    %2761 = vmatprep.subr.bf16.mxu0 %v1870
    %2762 = vmatpush1.bf16.msra.mxu0 %v1869
    %2763 = vmatprep.subr.bf16.mxu0 %v1878
    %2764 = vmatpush1.bf16.msra.mxu0 %v1877
    %2765 = vmatprep.subr.bf16.mxu0 %v1886
    %2766 = vmatpush1.bf16.msra.mxu0 %v1885
    %2767 = vmatprep.subr.bf16.mxu0 %v1894
    %2768 = vmatpush1.bf16.msra.mxu0 %v1893
    %2769 = vmatprep.subr.bf16.mxu0 %v1902
    %2770 = vmatpush1.bf16.msra.mxu0 %v1901
    %2771 = vmatprep.subr.bf16.mxu0 %v1910
    %2772 = vmatpush1.bf16.msra.mxu0 %v1909
    %2773 = vmatprep.subr.bf16.mxu0 %v1918
    %2774 = vmatpush1.bf16.msra.mxu0 %v1917
    %2775 = vmatprep.mubr.bf16.mxu0 %v2742
    %2776 = vmatmul.mubr.bf16.gmra.mrb[0].mxu0 %v2741
    %v2777 = vpop.f32.mrb[0].mxu0
    %v2778 = vadd.f32 0.0, %v2777
    %v2779 = vpop.f32.mrb[0].mxu0
    %v2780 = vadd.f32 0.0, %v2779
    %v2781 = vpop.f32.mrb[0].mxu0
    %v2782 = vpop.f32.mrb[0].mxu0
    %2783 = vdwg.mxu0
    %2784 = vmatprep.subr.bf16.mxu0 %v1800
    %2785 = vmatpush1.bf16.msra.mxu0 %v1799
    %2786 = vmatprep.subr.bf16.mxu0 %v1808
    %2787 = vmatpush1.bf16.msra.mxu0 %v1807
    %2788 = vmatprep.subr.bf16.mxu0 %v1816
    %2789 = vmatpush1.bf16.msra.mxu0 %v1815
    %2790 = vmatprep.subr.bf16.mxu0 %v1824
    %2791 = vmatpush1.bf16.msra.mxu0 %v1823
    %2792 = vmatprep.subr.bf16.mxu0 %v1832
    %2793 = vmatpush1.bf16.msra.mxu0 %v1831
    %2794 = vmatprep.subr.bf16.mxu0 %v1840
    %2795 = vmatpush1.bf16.msra.mxu0 %v1839
    %2796 = vmatprep.subr.bf16.mxu0 %v1848
    %2797 = vmatpush1.bf16.msra.mxu0 %v1847
    %2798 = vmatprep.subr.bf16.mxu0 %v1856
    %2799 = vmatpush1.bf16.msra.mxu0 %v1855
    %2800 = vmatprep.subr.bf16.mxu0 %v1864
    %2801 = vmatpush1.bf16.msra.mxu0 %v1863
    %2802 = vmatprep.subr.bf16.mxu0 %v1872
    %2803 = vmatpush1.bf16.msra.mxu0 %v1871
    %2804 = vmatprep.subr.bf16.mxu0 %v1880
    %2805 = vmatpush1.bf16.msra.mxu0 %v1879
    %2806 = vmatprep.subr.bf16.mxu0 %v1888
    %2807 = vmatpush1.bf16.msra.mxu0 %v1887
    %2808 = vmatprep.subr.bf16.mxu0 %v1896
    %2809 = vmatpush1.bf16.msra.mxu0 %v1895
    %2810 = vmatprep.subr.bf16.mxu0 %v1904
    %2811 = vmatpush1.bf16.msra.mxu0 %v1903
    %2812 = vmatprep.subr.bf16.mxu0 %v1912
    %2813 = vmatpush1.bf16.msra.mxu0 %v1911
    %2814 = vmatprep.subr.bf16.mxu0 %v1920
    %2815 = vmatpush1.bf16.msra.mxu0 %v1919
    %2816 = vmatprep.mubr.bf16.mxu0 %v2742
    %2817 = vmatmul.mubr.bf16.gmra.mrb[0].mxu0 %v2741
    %v2818 = vpop.f32.mrb[0].mxu0
    %v2819 = vadd.f32 0.0, %v2818
    %v2820 = vpop.f32.mrb[0].mxu0
    %v2821 = vadd.f32 0.0, %v2820
    %v2822 = vpop.f32.mrb[0].mxu0
    %v2823 = vpop.f32.mrb[0].mxu0
    %2824 = vdwg.mxu0
    %2825 = vmatprep.subr.bf16.mxu0 %v1802
    %2826 = vmatpush1.bf16.msra.mxu0 %v1801
    %2827 = vmatprep.subr.bf16.mxu0 %v1810
    %2828 = vmatpush1.bf16.msra.mxu0 %v1809
    %2829 = vmatprep.subr.bf16.mxu0 %v1818
    %2830 = vmatpush1.bf16.msra.mxu0 %v1817
    %2831 = vmatprep.subr.bf16.mxu0 %v1826
    %2832 = vmatpush1.bf16.msra.mxu0 %v1825
    %2833 = vmatprep.subr.bf16.mxu0 %v1834
    %2834 = vmatpush1.bf16.msra.mxu0 %v1833
    %2835 = vmatprep.subr.bf16.mxu0 %v1842
    %2836 = vmatpush1.bf16.msra.mxu0 %v1841
    %2837 = vmatprep.subr.bf16.mxu0 %v1850
    %2838 = vmatpush1.bf16.msra.mxu0 %v1849
    %2839 = vmatprep.subr.bf16.mxu0 %v1858
    %2840 = vmatpush1.bf16.msra.mxu0 %v1857
    %2841 = vmatprep.subr.bf16.mxu0 %v1866
    %2842 = vmatpush1.bf16.msra.mxu0 %v1865
    %2843 = vmatprep.subr.bf16.mxu0 %v1874
    %2844 = vmatpush1.bf16.msra.mxu0 %v1873
    %2845 = vmatprep.subr.bf16.mxu0 %v1882
    %2846 = vmatpush1.bf16.msra.mxu0 %v1881
    %2847 = vmatprep.subr.bf16.mxu0 %v1890
    %2848 = vmatpush1.bf16.msra.mxu0 %v1889
    %2849 = vmatprep.subr.bf16.mxu0 %v1898
    %2850 = vmatpush1.bf16.msra.mxu0 %v1897
    %2851 = vmatprep.subr.bf16.mxu0 %v1906
    %2852 = vmatpush1.bf16.msra.mxu0 %v1905
    %2853 = vmatprep.subr.bf16.mxu0 %v1914
    %2854 = vmatpush1.bf16.msra.mxu0 %v1913
    %2855 = vmatprep.subr.bf16.mxu0 %v1922
    %2856 = vmatpush1.bf16.msra.mxu0 %v1921
    %2857 = vmatprep.mubr.bf16.mxu0 %v2742
    %2858 = vmatmul.mubr.bf16.gmra.mrb[0].mxu0 %v2741
    %v2859 = vpop.f32.mrb[0].mxu0
    %v2860 = vadd.f32 0.0, %v2859
    %v2861 = vpop.f32.mrb[0].mxu0
    %v2862 = vadd.f32 0.0, %v2861
    %v2863 = vpop.f32.mrb[0].mxu0
    %v2864 = vpop.f32.mrb[0].mxu0
    %2865 = vdwg.mxu0
    %2866 = vmatprep.subr.bf16.mxu0 %v1804
    %2867 = vmatpush1.bf16.msra.mxu0 %v1803
    %2868 = vmatprep.subr.bf16.mxu0 %v1812
    %2869 = vmatpush1.bf16.msra.mxu0 %v1811
    %2870 = vmatprep.subr.bf16.mxu0 %v1820
    %2871 = vmatpush1.bf16.msra.mxu0 %v1819
    %2872 = vmatprep.subr.bf16.mxu0 %v1828
    %2873 = vmatpush1.bf16.msra.mxu0 %v1827
    %2874 = vmatprep.subr.bf16.mxu0 %v1836
    %2875 = vmatpush1.bf16.msra.mxu0 %v1835
    %2876 = vmatprep.subr.bf16.mxu0 %v1844
    %2877 = vmatpush1.bf16.msra.mxu0 %v1843
    %2878 = vmatprep.subr.bf16.mxu0 %v1852
    %2879 = vmatpush1.bf16.msra.mxu0 %v1851
    %2880 = vmatprep.subr.bf16.mxu0 %v1860
    %2881 = vmatpush1.bf16.msra.mxu0 %v1859
    %2882 = vmatprep.subr.bf16.mxu0 %v1868
    %2883 = vmatpush1.bf16.msra.mxu0 %v1867
    %2884 = vmatprep.subr.bf16.mxu0 %v1876
    %2885 = vmatpush1.bf16.msra.mxu0 %v1875
    %2886 = vmatprep.subr.bf16.mxu0 %v1884
    %2887 = vmatpush1.bf16.msra.mxu0 %v1883
    %2888 = vmatprep.subr.bf16.mxu0 %v1892
    %2889 = vmatpush1.bf16.msra.mxu0 %v1891
    %2890 = vmatprep.subr.bf16.mxu0 %v1900
    %2891 = vmatpush1.bf16.msra.mxu0 %v1899
    %2892 = vmatprep.subr.bf16.mxu0 %v1908
    %2893 = vmatpush1.bf16.msra.mxu0 %v1907
    %2894 = vmatprep.subr.bf16.mxu0 %v1916
    %2895 = vmatpush1.bf16.msra.mxu0 %v1915
    %2896 = vmatprep.subr.bf16.mxu0 %v1924
    %2897 = vmatpush1.bf16.msra.mxu0 %v1923
    %2898 = vmatprep.mubr.bf16.mxu0 %v2742
    %2899 = vmatmul.mubr.bf16.gmra.mrb[0].mxu0 %v2741
    %v2900 = vpop.f32.mrb[0].mxu0
    %v2901 = vadd.f32 0.0, %v2900
    %v2902 = vpop.f32.mrb[0].mxu0
    %v2903 = vadd.f32 0.0, %v2902
    %v2904 = vpop.f32.mrb[0].mxu0
    %v2905 = vpop.f32.mrb[0].mxu0
    %2906 = vdwg.mxu0
    %v2907 = vadd.f32 %v2733, %v2778
    %v2908 = vadd.f32 %v2734, %v2780
    %v2909 = vadd.f32 %v2735, %v2819
    %v2910 = vadd.f32 %v2736, %v2821
    %v2911 = vadd.f32 %v2737, %v2860
    %v2912 = vadd.f32 %v2738, %v2862
    %v2913 = vadd.f32 %v2739, %v2901
    %v2914 = vadd.f32 %v2740, %v2903
    %v2915 = vxor.u32 %v2907, 2147483648
    %v2916 = vxor.u32 %v2908, 2147483648
    %v2917 = vmul.f32 %v2915, 1.442695
    %v2918 = vpow.pop %v2917
    %v2919 = vmul.f32 %v2916, 1.442695
    %v2920 = vpow.pop %v2919
    %v2921 = vadd.f32 %v2918, 1.0
    %v2922 = vadd.f32 %v2920, 1.0
    %v2923 = vrcp.pop %v2921
    %v2924 = vmul.f32 1.0, %v2923
    %v2925 = vrcp.pop %v2922
    %v2926 = vmul.f32 1.0, %v2925
    %v2927 = vxor.u32 %v2909, 2147483648
    %v2928 = vxor.u32 %v2910, 2147483648
    %v2929 = vmul.f32 %v2927, 1.442695
    %v2930 = vpow.pop %v2929
    %v2931 = vmul.f32 %v2928, 1.442695
    %v2932 = vpow.pop %v2931
    %v2933 = vadd.f32 %v2930, 1.0
    %v2934 = vadd.f32 %v2932, 1.0
    %v2935 = vrcp.pop %v2933
    %v2936 = vmul.f32 1.0, %v2935
    %v2937 = vrcp.pop %v2934
    %v2938 = vmul.f32 1.0, %v2937
    %v2939 = vtanh.pop %v2911
    %v2940 = vtanh.pop %v2912
    %v2941 = vxor.u32 %v2913, 2147483648
    %v2942 = vxor.u32 %v2914, 2147483648
    %v2943 = vmul.f32 %v2941, 1.442695
    %v2944 = vpow.pop %v2943
    %v2945 = vmul.f32 %v2942, 1.442695
    %v2946 = vpow.pop %v2945
    %v2947 = vadd.f32 %v2944, 1.0
    %v2948 = vadd.f32 %v2946, 1.0
    %v2949 = vrcp.pop %v2947
    %v2950 = vmul.f32 1.0, %v2949
    %v2951 = vrcp.pop %v2948
    %v2952 = vmul.f32 1.0, %v2951
    %v2953 = vmul.f32 %v2936, %v2727
    %v2954 = vmul.f32 %v2938, %v2728
    %v2955 = vmul.f32 %v2924, %v2939
    %v2956 = vmul.f32 %v2926, %v2940
    %v2957 = vadd.f32 %v2953, %v2955
    %v2958 = vadd.f32 %v2954, %v2956
    %v2959 = vtanh.pop %v2957
    %v2960 = vtanh.pop %v2958
    %v2961 = vmul.f32 %v2950, %v2959
    %v2962 = vmul.f32 %v2952, %v2960
    %v2963 = vld [vmem:[#allocation2 + $0x100] sm:$0xff]
    %v2964 = vld [vmem:[#allocation2 + $0x108] sm:$0xff]
    %v2965 = vld [vmem:[#allocation2 + $0x110] sm:$0xff]
    %v2966 = vld [vmem:[#allocation2 + $0x118] sm:$0xff]
    %v2967 = vld [vmem:[#allocation2 + $0x120] sm:$0xff]
    %v2968 = vld [vmem:[#allocation2 + $0x128] sm:$0xff]
    %v2969 = vld [vmem:[#allocation2 + $0x130] sm:$0xff]
    %v2970 = vld [vmem:[#allocation2 + $0x138] sm:$0xff]
    %v2971 = vpack.c.bf16 %v2961, %v2961
    %v2972 = vpack.c.bf16 %v2962, %v2962
    %2973 = vmatprep.subr.bf16.mxu0 %v1798
    %2974 = vmatpush1.bf16.msra.mxu0 %v1797
    %2975 = vmatprep.subr.bf16.mxu0 %v1806
    %2976 = vmatpush1.bf16.msra.mxu0 %v1805
    %2977 = vmatprep.subr.bf16.mxu0 %v1814
    %2978 = vmatpush1.bf16.msra.mxu0 %v1813
    %2979 = vmatprep.subr.bf16.mxu0 %v1822
    %2980 = vmatpush1.bf16.msra.mxu0 %v1821
    %2981 = vmatprep.subr.bf16.mxu0 %v1830
    %2982 = vmatpush1.bf16.msra.mxu0 %v1829
    %2983 = vmatprep.subr.bf16.mxu0 %v1838
    %2984 = vmatpush1.bf16.msra.mxu0 %v1837
    %2985 = vmatprep.subr.bf16.mxu0 %v1846
    %2986 = vmatpush1.bf16.msra.mxu0 %v1845
    %2987 = vmatprep.subr.bf16.mxu0 %v1854
    %2988 = vmatpush1.bf16.msra.mxu0 %v1853
    %2989 = vmatprep.subr.bf16.mxu0 %v1862
    %2990 = vmatpush1.bf16.msra.mxu0 %v1861
    %2991 = vmatprep.subr.bf16.mxu0 %v1870
    %2992 = vmatpush1.bf16.msra.mxu0 %v1869
    %2993 = vmatprep.subr.bf16.mxu0 %v1878
    %2994 = vmatpush1.bf16.msra.mxu0 %v1877
    %2995 = vmatprep.subr.bf16.mxu0 %v1886
    %2996 = vmatpush1.bf16.msra.mxu0 %v1885
    %2997 = vmatprep.subr.bf16.mxu0 %v1894
    %2998 = vmatpush1.bf16.msra.mxu0 %v1893
    %2999 = vmatprep.subr.bf16.mxu0 %v1902
    %3000 = vmatpush1.bf16.msra.mxu0 %v1901
    %3001 = vmatprep.subr.bf16.mxu0 %v1910
    %3002 = vmatpush1.bf16.msra.mxu0 %v1909
    %3003 = vmatprep.subr.bf16.mxu0 %v1918
    %3004 = vmatpush1.bf16.msra.mxu0 %v1917
    %3005 = vmatprep.mubr.bf16.mxu0 %v2972
    %3006 = vmatmul.mubr.bf16.gmra.mrb[0].mxu0 %v2971
    %v3007 = vpop.f32.mrb[0].mxu0
    %v3008 = vadd.f32 0.0, %v3007
    %v3009 = vpop.f32.mrb[0].mxu0
    %v3010 = vadd.f32 0.0, %v3009
    %v3011 = vpop.f32.mrb[0].mxu0
    %v3012 = vpop.f32.mrb[0].mxu0
    %3013 = vdwg.mxu0
    %3014 = vmatprep.subr.bf16.mxu0 %v1800
    %3015 = vmatpush1.bf16.msra.mxu0 %v1799
    %3016 = vmatprep.subr.bf16.mxu0 %v1808
    %3017 = vmatpush1.bf16.msra.mxu0 %v1807
    %3018 = vmatprep.subr.bf16.mxu0 %v1816
    %3019 = vmatpush1.bf16.msra.mxu0 %v1815
    %3020 = vmatprep.subr.bf16.mxu0 %v1824
    %3021 = vmatpush1.bf16.msra.mxu0 %v1823
    %3022 = vmatprep.subr.bf16.mxu0 %v1832
    %3023 = vmatpush1.bf16.msra.mxu0 %v1831
    %3024 = vmatprep.subr.bf16.mxu0 %v1840
    %3025 = vmatpush1.bf16.msra.mxu0 %v1839
    %3026 = vmatprep.subr.bf16.mxu0 %v1848
    %3027 = vmatpush1.bf16.msra.mxu0 %v1847
    %3028 = vmatprep.subr.bf16.mxu0 %v1856
    %3029 = vmatpush1.bf16.msra.mxu0 %v1855
    %3030 = vmatprep.subr.bf16.mxu0 %v1864
    %3031 = vmatpush1.bf16.msra.mxu0 %v1863
    %3032 = vmatprep.subr.bf16.mxu0 %v1872
    %3033 = vmatpush1.bf16.msra.mxu0 %v1871
    %3034 = vmatprep.subr.bf16.mxu0 %v1880
    %3035 = vmatpush1.bf16.msra.mxu0 %v1879
    %3036 = vmatprep.subr.bf16.mxu0 %v1888
    %3037 = vmatpush1.bf16.msra.mxu0 %v1887
    %3038 = vmatprep.subr.bf16.mxu0 %v1896
    %3039 = vmatpush1.bf16.msra.mxu0 %v1895
    %3040 = vmatprep.subr.bf16.mxu0 %v1904
    %3041 = vmatpush1.bf16.msra.mxu0 %v1903
    %3042 = vmatprep.subr.bf16.mxu0 %v1912
    %3043 = vmatpush1.bf16.msra.mxu0 %v1911
    %3044 = vmatprep.subr.bf16.mxu0 %v1920
    %3045 = vmatpush1.bf16.msra.mxu0 %v1919
    %3046 = vmatprep.mubr.bf16.mxu0 %v2972
    %3047 = vmatmul.mubr.bf16.gmra.mrb[0].mxu0 %v2971
    %v3048 = vpop.f32.mrb[0].mxu0
    %v3049 = vadd.f32 0.0, %v3048
    %v3050 = vpop.f32.mrb[0].mxu0
    %v3051 = vadd.f32 0.0, %v3050
    %v3052 = vpop.f32.mrb[0].mxu0
    %v3053 = vpop.f32.mrb[0].mxu0
    %3054 = vdwg.mxu0
    %3055 = vmatprep.subr.bf16.mxu0 %v1802
    %3056 = vmatpush1.bf16.msra.mxu0 %v1801
    %3057 = vmatprep.subr.bf16.mxu0 %v1810
    %3058 = vmatpush1.bf16.msra.mxu0 %v1809
    %3059 = vmatprep.subr.bf16.mxu0 %v1818
    %3060 = vmatpush1.bf16.msra.mxu0 %v1817
    %3061 = vmatprep.subr.bf16.mxu0 %v1826
    %3062 = vmatpush1.bf16.msra.mxu0 %v1825
    %3063 = vmatprep.subr.bf16.mxu0 %v1834
    %3064 = vmatpush1.bf16.msra.mxu0 %v1833
    %3065 = vmatprep.subr.bf16.mxu0 %v1842
    %3066 = vmatpush1.bf16.msra.mxu0 %v1841
    %3067 = vmatprep.subr.bf16.mxu0 %v1850
    %3068 = vmatpush1.bf16.msra.mxu0 %v1849
    %3069 = vmatprep.subr.bf16.mxu0 %v1858
    %3070 = vmatpush1.bf16.msra.mxu0 %v1857
    %3071 = vmatprep.subr.bf16.mxu0 %v1866
    %3072 = vmatpush1.bf16.msra.mxu0 %v1865
    %3073 = vmatprep.subr.bf16.mxu0 %v1874
    %3074 = vmatpush1.bf16.msra.mxu0 %v1873
    %3075 = vmatprep.subr.bf16.mxu0 %v1882
    %3076 = vmatpush1.bf16.msra.mxu0 %v1881
    %3077 = vmatprep.subr.bf16.mxu0 %v1890
    %3078 = vmatpush1.bf16.msra.mxu0 %v1889
    %3079 = vmatprep.subr.bf16.mxu0 %v1898
    %3080 = vmatpush1.bf16.msra.mxu0 %v1897
    %3081 = vmatprep.subr.bf16.mxu0 %v1906
    %3082 = vmatpush1.bf16.msra.mxu0 %v1905
    %3083 = vmatprep.subr.bf16.mxu0 %v1914
    %3084 = vmatpush1.bf16.msra.mxu0 %v1913
    %3085 = vmatprep.subr.bf16.mxu0 %v1922
    %3086 = vmatpush1.bf16.msra.mxu0 %v1921
    %3087 = vmatprep.mubr.bf16.mxu0 %v2972
    %3088 = vmatmul.mubr.bf16.gmra.mrb[0].mxu0 %v2971
    %v3089 = vpop.f32.mrb[0].mxu0
    %v3090 = vadd.f32 0.0, %v3089
    %v3091 = vpop.f32.mrb[0].mxu0
    %v3092 = vadd.f32 0.0, %v3091
    %v3093 = vpop.f32.mrb[0].mxu0
    %v3094 = vpop.f32.mrb[0].mxu0
    %3095 = vdwg.mxu0
    %3096 = vmatprep.subr.bf16.mxu0 %v1804
    %3097 = vmatpush1.bf16.msra.mxu0 %v1803
    %3098 = vmatprep.subr.bf16.mxu0 %v1812
    %3099 = vmatpush1.bf16.msra.mxu0 %v1811
    %3100 = vmatprep.subr.bf16.mxu0 %v1820
    %3101 = vmatpush1.bf16.msra.mxu0 %v1819
    %3102 = vmatprep.subr.bf16.mxu0 %v1828
    %3103 = vmatpush1.bf16.msra.mxu0 %v1827
    %3104 = vmatprep.subr.bf16.mxu0 %v1836
    %3105 = vmatpush1.bf16.msra.mxu0 %v1835
    %3106 = vmatprep.subr.bf16.mxu0 %v1844
    %3107 = vmatpush1.bf16.msra.mxu0 %v1843
    %3108 = vmatprep.subr.bf16.mxu0 %v1852
    %3109 = vmatpush1.bf16.msra.mxu0 %v1851
    %3110 = vmatprep.subr.bf16.mxu0 %v1860
    %3111 = vmatpush1.bf16.msra.mxu0 %v1859
    %3112 = vmatprep.subr.bf16.mxu0 %v1868
    %3113 = vmatpush1.bf16.msra.mxu0 %v1867
    %3114 = vmatprep.subr.bf16.mxu0 %v1876
    %3115 = vmatpush1.bf16.msra.mxu0 %v1875
    %3116 = vmatprep.subr.bf16.mxu0 %v1884
    %3117 = vmatpush1.bf16.msra.mxu0 %v1883
    %3118 = vmatprep.subr.bf16.mxu0 %v1892
    %3119 = vmatpush1.bf16.msra.mxu0 %v1891
    %3120 = vmatprep.subr.bf16.mxu0 %v1900
    %3121 = vmatpush1.bf16.msra.mxu0 %v1899
    %3122 = vmatprep.subr.bf16.mxu0 %v1908
    %3123 = vmatpush1.bf16.msra.mxu0 %v1907
    %3124 = vmatprep.subr.bf16.mxu0 %v1916
    %3125 = vmatpush1.bf16.msra.mxu0 %v1915
    %3126 = vmatprep.subr.bf16.mxu0 %v1924
    %3127 = vmatpush1.bf16.msra.mxu0 %v1923
    %3128 = vmatprep.mubr.bf16.mxu0 %v2972
    %3129 = vmatmul.mubr.bf16.gmra.mrb[0].mxu0 %v2971
    %v3130 = vpop.f32.mrb[0].mxu0
    %v3131 = vadd.f32 0.0, %v3130
    %v3132 = vpop.f32.mrb[0].mxu0
    %v3133 = vadd.f32 0.0, %v3132
    %v3134 = vpop.f32.mrb[0].mxu0
    %v3135 = vpop.f32.mrb[0].mxu0
    %3136 = vdwg.mxu0
    %v3137 = vadd.f32 %v2963, %v3008
    %v3138 = vadd.f32 %v2964, %v3010
    %v3139 = vadd.f32 %v2965, %v3049
    %v3140 = vadd.f32 %v2966, %v3051
    %v3141 = vadd.f32 %v2967, %v3090
    %v3142 = vadd.f32 %v2968, %v3092
    %v3143 = vadd.f32 %v2969, %v3131
    %v3144 = vadd.f32 %v2970, %v3133
    %v3145 = vxor.u32 %v3137, 2147483648
    %v3146 = vxor.u32 %v3138, 2147483648
    %v3147 = vmul.f32 %v3145, 1.442695
    %v3148 = vpow.pop %v3147
    %v3149 = vmul.f32 %v3146, 1.442695
    %v3150 = vpow.pop %v3149
    %v3151 = vadd.f32 %v3148, 1.0
    %v3152 = vadd.f32 %v3150, 1.0
    %v3153 = vrcp.pop %v3151
    %v3154 = vmul.f32 1.0, %v3153
    %v3155 = vrcp.pop %v3152
    %v3156 = vmul.f32 1.0, %v3155
    %v3157 = vxor.u32 %v3139, 2147483648
    %v3158 = vxor.u32 %v3140, 2147483648
    %v3159 = vmul.f32 %v3157, 1.442695
    %v3160 = vpow.pop %v3159
    %v3161 = vmul.f32 %v3158, 1.442695
    %v3162 = vpow.pop %v3161
    %v3163 = vadd.f32 %v3160, 1.0
    %v3164 = vadd.f32 %v3162, 1.0
    %v3165 = vrcp.pop %v3163
    %v3166 = vmul.f32 1.0, %v3165
    %v3167 = vrcp.pop %v3164
    %v3168 = vmul.f32 1.0, %v3167
    %v3169 = vtanh.pop %v3141
    %v3170 = vtanh.pop %v3142
    %v3171 = vxor.u32 %v3143, 2147483648
    %v3172 = vxor.u32 %v3144, 2147483648
    %v3173 = vmul.f32 %v3171, 1.442695
    %v3174 = vpow.pop %v3173
    %v3175 = vmul.f32 %v3172, 1.442695
    %v3176 = vpow.pop %v3175
    %v3177 = vadd.f32 %v3174, 1.0
    %v3178 = vadd.f32 %v3176, 1.0
    %v3179 = vrcp.pop %v3177
    %v3180 = vmul.f32 1.0, %v3179
    %v3181 = vrcp.pop %v3178
    %v3182 = vmul.f32 1.0, %v3181
    %v3183 = vmul.f32 %v3166, %v2957
    %v3184 = vmul.f32 %v3168, %v2958
    %v3185 = vmul.f32 %v3154, %v3169
    %v3186 = vmul.f32 %v3156, %v3170
    %v3187 = vadd.f32 %v3183, %v3185
    %v3188 = vadd.f32 %v3184, %v3186
    %v3189 = vtanh.pop %v3187
    %v3190 = vtanh.pop %v3188
    %v3191 = vmul.f32 %v3180, %v3189
    %v3192 = vmul.f32 %v3182, %v3190
    %v3193 = vld [vmem:[#allocation2 + $0x140] sm:$0xff]
    %v3194 = vld [vmem:[#allocation2 + $0x148] sm:$0xff]
    %v3195 = vld [vmem:[#allocation2 + $0x150] sm:$0xff]
    %v3196 = vld [vmem:[#allocation2 + $0x158] sm:$0xff]
    %v3197 = vld [vmem:[#allocation2 + $0x160] sm:$0xff]
    %v3198 = vld [vmem:[#allocation2 + $0x168] sm:$0xff]
    %v3199 = vld [vmem:[#allocation2 + $0x170] sm:$0xff]
    %v3200 = vld [vmem:[#allocation2 + $0x178] sm:$0xff]
    %v3201 = vpack.c.bf16 %v3191, %v3191
    %v3202 = vpack.c.bf16 %v3192, %v3192
    %3203 = vmatprep.subr.bf16.mxu0 %v1798
    %3204 = vmatpush1.bf16.msra.mxu0 %v1797
    %3205 = vmatprep.subr.bf16.mxu0 %v1806
    %3206 = vmatpush1.bf16.msra.mxu0 %v1805
    %3207 = vmatprep.subr.bf16.mxu0 %v1814
    %3208 = vmatpush1.bf16.msra.mxu0 %v1813
    %3209 = vmatprep.subr.bf16.mxu0 %v1822
    %3210 = vmatpush1.bf16.msra.mxu0 %v1821
    %3211 = vmatprep.subr.bf16.mxu0 %v1830
    %3212 = vmatpush1.bf16.msra.mxu0 %v1829
    %3213 = vmatprep.subr.bf16.mxu0 %v1838
    %3214 = vmatpush1.bf16.msra.mxu0 %v1837
    %3215 = vmatprep.subr.bf16.mxu0 %v1846
    %3216 = vmatpush1.bf16.msra.mxu0 %v1845
    %3217 = vmatprep.subr.bf16.mxu0 %v1854
    %3218 = vmatpush1.bf16.msra.mxu0 %v1853
    %3219 = vmatprep.subr.bf16.mxu0 %v1862
    %3220 = vmatpush1.bf16.msra.mxu0 %v1861
    %3221 = vmatprep.subr.bf16.mxu0 %v1870
    %3222 = vmatpush1.bf16.msra.mxu0 %v1869
    %3223 = vmatprep.subr.bf16.mxu0 %v1878
    %3224 = vmatpush1.bf16.msra.mxu0 %v1877
    %3225 = vmatprep.subr.bf16.mxu0 %v1886
    %3226 = vmatpush1.bf16.msra.mxu0 %v1885
    %3227 = vmatprep.subr.bf16.mxu0 %v1894
    %3228 = vmatpush1.bf16.msra.mxu0 %v1893
    %3229 = vmatprep.subr.bf16.mxu0 %v1902
    %3230 = vmatpush1.bf16.msra.mxu0 %v1901
    %3231 = vmatprep.subr.bf16.mxu0 %v1910
    %3232 = vmatpush1.bf16.msra.mxu0 %v1909
    %3233 = vmatprep.subr.bf16.mxu0 %v1918
    %3234 = vmatpush1.bf16.msra.mxu0 %v1917
    %3235 = vmatprep.mubr.bf16.mxu0 %v3202
    %3236 = vmatmul.mubr.bf16.gmra.mrb[0].mxu0 %v3201
    %v3237 = vpop.f32.mrb[0].mxu0
    %v3238 = vadd.f32 0.0, %v3237
    %v3239 = vpop.f32.mrb[0].mxu0
    %v3240 = vadd.f32 0.0, %v3239
    %v3241 = vpop.f32.mrb[0].mxu0
    %v3242 = vpop.f32.mrb[0].mxu0
    %3243 = vdwg.mxu0
    %3244 = vmatprep.subr.bf16.mxu0 %v1800
    %3245 = vmatpush1.bf16.msra.mxu0 %v1799
    %3246 = vmatprep.subr.bf16.mxu0 %v1808
    %3247 = vmatpush1.bf16.msra.mxu0 %v1807
    %3248 = vmatprep.subr.bf16.mxu0 %v1816
    %3249 = vmatpush1.bf16.msra.mxu0 %v1815
    %3250 = vmatprep.subr.bf16.mxu0 %v1824
    %3251 = vmatpush1.bf16.msra.mxu0 %v1823
    %3252 = vmatprep.subr.bf16.mxu0 %v1832
    %3253 = vmatpush1.bf16.msra.mxu0 %v1831
    %3254 = vmatprep.subr.bf16.mxu0 %v1840
    %3255 = vmatpush1.bf16.msra.mxu0 %v1839
    %3256 = vmatprep.subr.bf16.mxu0 %v1848
    %3257 = vmatpush1.bf16.msra.mxu0 %v1847
    %3258 = vmatprep.subr.bf16.mxu0 %v1856
    %3259 = vmatpush1.bf16.msra.mxu0 %v1855
    %3260 = vmatprep.subr.bf16.mxu0 %v1864
    %3261 = vmatpush1.bf16.msra.mxu0 %v1863
    %3262 = vmatprep.subr.bf16.mxu0 %v1872
    %3263 = vmatpush1.bf16.msra.mxu0 %v1871
    %3264 = vmatprep.subr.bf16.mxu0 %v1880
    %3265 = vmatpush1.bf16.msra.mxu0 %v1879
    %3266 = vmatprep.subr.bf16.mxu0 %v1888
    %3267 = vmatpush1.bf16.msra.mxu0 %v1887
    %3268 = vmatprep.subr.bf16.mxu0 %v1896
    %3269 = vmatpush1.bf16.msra.mxu0 %v1895
    %3270 = vmatprep.subr.bf16.mxu0 %v1904
    %3271 = vmatpush1.bf16.msra.mxu0 %v1903
    %3272 = vmatprep.subr.bf16.mxu0 %v1912
    %3273 = vmatpush1.bf16.msra.mxu0 %v1911
    %3274 = vmatprep.subr.bf16.mxu0 %v1920
    %3275 = vmatpush1.bf16.msra.mxu0 %v1919
    %3276 = vmatprep.mubr.bf16.mxu0 %v3202
    %3277 = vmatmul.mubr.bf16.gmra.mrb[0].mxu0 %v3201
    %v3278 = vpop.f32.mrb[0].mxu0
    %v3279 = vadd.f32 0.0, %v3278
    %v3280 = vpop.f32.mrb[0].mxu0
    %v3281 = vadd.f32 0.0, %v3280
    %v3282 = vpop.f32.mrb[0].mxu0
    %v3283 = vpop.f32.mrb[0].mxu0
    %3284 = vdwg.mxu0
    %3285 = vmatprep.subr.bf16.mxu0 %v1802
    %3286 = vmatpush1.bf16.msra.mxu0 %v1801
    %3287 = vmatprep.subr.bf16.mxu0 %v1810
    %3288 = vmatpush1.bf16.msra.mxu0 %v1809
    %3289 = vmatprep.subr.bf16.mxu0 %v1818
    %3290 = vmatpush1.bf16.msra.mxu0 %v1817
    %3291 = vmatprep.subr.bf16.mxu0 %v1826
    %3292 = vmatpush1.bf16.msra.mxu0 %v1825
    %3293 = vmatprep.subr.bf16.mxu0 %v1834
    %3294 = vmatpush1.bf16.msra.mxu0 %v1833
    %3295 = vmatprep.subr.bf16.mxu0 %v1842
    %3296 = vmatpush1.bf16.msra.mxu0 %v1841
    %3297 = vmatprep.subr.bf16.mxu0 %v1850
    %3298 = vmatpush1.bf16.msra.mxu0 %v1849
    %3299 = vmatprep.subr.bf16.mxu0 %v1858
    %3300 = vmatpush1.bf16.msra.mxu0 %v1857
    %3301 = vmatprep.subr.bf16.mxu0 %v1866
    %3302 = vmatpush1.bf16.msra.mxu0 %v1865
    %3303 = vmatprep.subr.bf16.mxu0 %v1874
    %3304 = vmatpush1.bf16.msra.mxu0 %v1873
    %3305 = vmatprep.subr.bf16.mxu0 %v1882
    %3306 = vmatpush1.bf16.msra.mxu0 %v1881
    %3307 = vmatprep.subr.bf16.mxu0 %v1890
    %3308 = vmatpush1.bf16.msra.mxu0 %v1889
    %3309 = vmatprep.subr.bf16.mxu0 %v1898
    %3310 = vmatpush1.bf16.msra.mxu0 %v1897
    %3311 = vmatprep.subr.bf16.mxu0 %v1906
    %3312 = vmatpush1.bf16.msra.mxu0 %v1905
    %3313 = vmatprep.subr.bf16.mxu0 %v1914
    %3314 = vmatpush1.bf16.msra.mxu0 %v1913
    %3315 = vmatprep.subr.bf16.mxu0 %v1922
    %3316 = vmatpush1.bf16.msra.mxu0 %v1921
    %3317 = vmatprep.mubr.bf16.mxu0 %v3202
    %3318 = vmatmul.mubr.bf16.gmra.mrb[0].mxu0 %v3201
    %v3319 = vpop.f32.mrb[0].mxu0
    %v3320 = vadd.f32 0.0, %v3319
    %v3321 = vpop.f32.mrb[0].mxu0
    %v3322 = vadd.f32 0.0, %v3321
    %v3323 = vpop.f32.mrb[0].mxu0
    %v3324 = vpop.f32.mrb[0].mxu0
    %3325 = vdwg.mxu0
    %3326 = vmatprep.subr.bf16.mxu0 %v1804
    %3327 = vmatpush1.bf16.msra.mxu0 %v1803
    %3328 = vmatprep.subr.bf16.mxu0 %v1812
    %3329 = vmatpush1.bf16.msra.mxu0 %v1811
    %3330 = vmatprep.subr.bf16.mxu0 %v1820
    %3331 = vmatpush1.bf16.msra.mxu0 %v1819
    %3332 = vmatprep.subr.bf16.mxu0 %v1828
    %3333 = vmatpush1.bf16.msra.mxu0 %v1827
    %3334 = vmatprep.subr.bf16.mxu0 %v1836
    %3335 = vmatpush1.bf16.msra.mxu0 %v1835
    %3336 = vmatprep.subr.bf16.mxu0 %v1844
    %3337 = vmatpush1.bf16.msra.mxu0 %v1843
    %3338 = vmatprep.subr.bf16.mxu0 %v1852
    %3339 = vmatpush1.bf16.msra.mxu0 %v1851
    %3340 = vmatprep.subr.bf16.mxu0 %v1860
    %3341 = vmatpush1.bf16.msra.mxu0 %v1859
    %3342 = vmatprep.subr.bf16.mxu0 %v1868
    %3343 = vmatpush1.bf16.msra.mxu0 %v1867
    %3344 = vmatprep.subr.bf16.mxu0 %v1876
    %3345 = vmatpush1.bf16.msra.mxu0 %v1875
    %3346 = vmatprep.subr.bf16.mxu0 %v1884
    %3347 = vmatpush1.bf16.msra.mxu0 %v1883
    %3348 = vmatprep.subr.bf16.mxu0 %v1892
    %3349 = vmatpush1.bf16.msra.mxu0 %v1891
    %3350 = vmatprep.subr.bf16.mxu0 %v1900
    %3351 = vmatpush1.bf16.msra.mxu0 %v1899
    %3352 = vmatprep.subr.bf16.mxu0 %v1908
    %3353 = vmatpush1.bf16.msra.mxu0 %v1907
    %3354 = vmatprep.subr.bf16.mxu0 %v1916
    %3355 = vmatpush1.bf16.msra.mxu0 %v1915
    %3356 = vmatprep.subr.bf16.mxu0 %v1924
    %3357 = vmatpush1.bf16.msra.mxu0 %v1923
    %3358 = vmatprep.mubr.bf16.mxu0 %v3202
    %3359 = vmatmul.mubr.bf16.gmra.mrb[0].mxu0 %v3201
    %v3360 = vpop.f32.mrb[0].mxu0
    %v3361 = vadd.f32 0.0, %v3360
    %v3362 = vpop.f32.mrb[0].mxu0
    %v3363 = vadd.f32 0.0, %v3362
    %v3364 = vpop.f32.mrb[0].mxu0
    %v3365 = vpop.f32.mrb[0].mxu0
    %3366 = vdwg.mxu0
    %v3367 = vadd.f32 %v3193, %v3238
    %v3368 = vadd.f32 %v3194, %v3240
    %v3369 = vadd.f32 %v3195, %v3279
    %v3370 = vadd.f32 %v3196, %v3281
    %v3371 = vadd.f32 %v3197, %v3320
    %v3372 = vadd.f32 %v3198, %v3322
    %v3373 = vadd.f32 %v3199, %v3361
    %v3374 = vadd.f32 %v3200, %v3363
    %v3375 = vxor.u32 %v3367, 2147483648
    %v3376 = vxor.u32 %v3368, 2147483648
    %v3377 = vmul.f32 %v3375, 1.442695
    %v3378 = vpow.pop %v3377
    %v3379 = vmul.f32 %v3376, 1.442695
    %v3380 = vpow.pop %v3379
    %v3381 = vadd.f32 %v3378, 1.0
    %v3382 = vadd.f32 %v3380, 1.0
    %v3383 = vrcp.pop %v3381
    %v3384 = vmul.f32 1.0, %v3383
    %v3385 = vrcp.pop %v3382
    %v3386 = vmul.f32 1.0, %v3385
    %v3387 = vxor.u32 %v3369, 2147483648
    %v3388 = vxor.u32 %v3370, 2147483648
    %v3389 = vmul.f32 %v3387, 1.442695
    %v3390 = vpow.pop %v3389
    %v3391 = vmul.f32 %v3388, 1.442695
    %v3392 = vpow.pop %v3391
    %v3393 = vadd.f32 %v3390, 1.0
    %v3394 = vadd.f32 %v3392, 1.0
    %v3395 = vrcp.pop %v3393
    %v3396 = vmul.f32 1.0, %v3395
    %v3397 = vrcp.pop %v3394
    %v3398 = vmul.f32 1.0, %v3397
    %v3399 = vtanh.pop %v3371
    %v3400 = vtanh.pop %v3372
    %v3401 = vxor.u32 %v3373, 2147483648
    %v3402 = vxor.u32 %v3374, 2147483648
    %v3403 = vmul.f32 %v3401, 1.442695
    %v3404 = vpow.pop %v3403
    %v3405 = vmul.f32 %v3402, 1.442695
    %v3406 = vpow.pop %v3405
    %v3407 = vadd.f32 %v3404, 1.0
    %v3408 = vadd.f32 %v3406, 1.0
    %v3409 = vrcp.pop %v3407
    %v3410 = vmul.f32 1.0, %v3409
    %v3411 = vrcp.pop %v3408
    %v3412 = vmul.f32 1.0, %v3411
    %v3413 = vmul.f32 %v3396, %v3187
    %v3414 = vmul.f32 %v3398, %v3188
    %v3415 = vmul.f32 %v3384, %v3399
    %v3416 = vmul.f32 %v3386, %v3400
    %v3417 = vadd.f32 %v3413, %v3415
    %v3418 = vadd.f32 %v3414, %v3416
    %v3419 = vtanh.pop %v3417
    %v3420 = vtanh.pop %v3418
    %v3421 = vmul.f32 %v3410, %v3419
    %v3422 = vmul.f32 %v3412, %v3420
    %v3423 = vld [vmem:[#allocation2 + $0x180] sm:$0xff]
    %v3424 = vld [vmem:[#allocation2 + $0x188] sm:$0xff]
    %v3425 = vld [vmem:[#allocation2 + $0x190] sm:$0xff]
    %v3426 = vld [vmem:[#allocation2 + $0x198] sm:$0xff]
    %v3427 = vld [vmem:[#allocation2 + $0x1a0] sm:$0xff]
    %v3428 = vld [vmem:[#allocation2 + $0x1a8] sm:$0xff]
    %v3429 = vld [vmem:[#allocation2 + $0x1b0] sm:$0xff]
    %v3430 = vld [vmem:[#allocation2 + $0x1b8] sm:$0xff]
    %v3431 = vpack.c.bf16 %v3421, %v3421
    %v3432 = vpack.c.bf16 %v3422, %v3422
    %3433 = vmatprep.subr.bf16.mxu0 %v1798
    %3434 = vmatpush1.bf16.msra.mxu0 %v1797
    %3435 = vmatprep.subr.bf16.mxu0 %v1806
    %3436 = vmatpush1.bf16.msra.mxu0 %v1805
    %3437 = vmatprep.subr.bf16.mxu0 %v1814
    %3438 = vmatpush1.bf16.msra.mxu0 %v1813
    %3439 = vmatprep.subr.bf16.mxu0 %v1822
    %3440 = vmatpush1.bf16.msra.mxu0 %v1821
    %3441 = vmatprep.subr.bf16.mxu0 %v1830
    %3442 = vmatpush1.bf16.msra.mxu0 %v1829
    %3443 = vmatprep.subr.bf16.mxu0 %v1838
    %3444 = vmatpush1.bf16.msra.mxu0 %v1837
    %3445 = vmatprep.subr.bf16.mxu0 %v1846
    %3446 = vmatpush1.bf16.msra.mxu0 %v1845
    %3447 = vmatprep.subr.bf16.mxu0 %v1854
    %3448 = vmatpush1.bf16.msra.mxu0 %v1853
    %3449 = vmatprep.subr.bf16.mxu0 %v1862
    %3450 = vmatpush1.bf16.msra.mxu0 %v1861
    %3451 = vmatprep.subr.bf16.mxu0 %v1870
    %3452 = vmatpush1.bf16.msra.mxu0 %v1869
    %3453 = vmatprep.subr.bf16.mxu0 %v1878
    %3454 = vmatpush1.bf16.msra.mxu0 %v1877
    %3455 = vmatprep.subr.bf16.mxu0 %v1886
    %3456 = vmatpush1.bf16.msra.mxu0 %v1885
    %3457 = vmatprep.subr.bf16.mxu0 %v1894
    %3458 = vmatpush1.bf16.msra.mxu0 %v1893
    %3459 = vmatprep.subr.bf16.mxu0 %v1902
    %3460 = vmatpush1.bf16.msra.mxu0 %v1901
    %3461 = vmatprep.subr.bf16.mxu0 %v1910
    %3462 = vmatpush1.bf16.msra.mxu0 %v1909
    %3463 = vmatprep.subr.bf16.mxu0 %v1918
    %3464 = vmatpush1.bf16.msra.mxu0 %v1917
    %3465 = vmatprep.mubr.bf16.mxu0 %v3432
    %3466 = vmatmul.mubr.bf16.gmra.mrb[0].mxu0 %v3431
    %v3467 = vpop.f32.mrb[0].mxu0
    %v3468 = vadd.f32 0.0, %v3467
    %v3469 = vpop.f32.mrb[0].mxu0
    %v3470 = vadd.f32 0.0, %v3469
    %v3471 = vpop.f32.mrb[0].mxu0
    %v3472 = vpop.f32.mrb[0].mxu0
    %3473 = vdwg.mxu0
    %3474 = vmatprep.subr.bf16.mxu0 %v1800
    %3475 = vmatpush1.bf16.msra.mxu0 %v1799
    %3476 = vmatprep.subr.bf16.mxu0 %v1808
    %3477 = vmatpush1.bf16.msra.mxu0 %v1807
    %3478 = vmatprep.subr.bf16.mxu0 %v1816
    %3479 = vmatpush1.bf16.msra.mxu0 %v1815
    %3480 = vmatprep.subr.bf16.mxu0 %v1824
    %3481 = vmatpush1.bf16.msra.mxu0 %v1823
    %3482 = vmatprep.subr.bf16.mxu0 %v1832
    %3483 = vmatpush1.bf16.msra.mxu0 %v1831
    %3484 = vmatprep.subr.bf16.mxu0 %v1840
    %3485 = vmatpush1.bf16.msra.mxu0 %v1839
    %3486 = vmatprep.subr.bf16.mxu0 %v1848
    %3487 = vmatpush1.bf16.msra.mxu0 %v1847
    %3488 = vmatprep.subr.bf16.mxu0 %v1856
    %3489 = vmatpush1.bf16.msra.mxu0 %v1855
    %3490 = vmatprep.subr.bf16.mxu0 %v1864
    %3491 = vmatpush1.bf16.msra.mxu0 %v1863
    %3492 = vmatprep.subr.bf16.mxu0 %v1872
    %3493 = vmatpush1.bf16.msra.mxu0 %v1871
    %3494 = vmatprep.subr.bf16.mxu0 %v1880
    %3495 = vmatpush1.bf16.msra.mxu0 %v1879
    %3496 = vmatprep.subr.bf16.mxu0 %v1888
    %3497 = vmatpush1.bf16.msra.mxu0 %v1887
    %3498 = vmatprep.subr.bf16.mxu0 %v1896
    %3499 = vmatpush1.bf16.msra.mxu0 %v1895
    %3500 = vmatprep.subr.bf16.mxu0 %v1904
    %3501 = vmatpush1.bf16.msra.mxu0 %v1903
    %3502 = vmatprep.subr.bf16.mxu0 %v1912
    %3503 = vmatpush1.bf16.msra.mxu0 %v1911
    %3504 = vmatprep.subr.bf16.mxu0 %v1920
    %3505 = vmatpush1.bf16.msra.mxu0 %v1919
    %3506 = vmatprep.mubr.bf16.mxu0 %v3432
    %3507 = vmatmul.mubr.bf16.gmra.mrb[0].mxu0 %v3431
    %v3508 = vpop.f32.mrb[0].mxu0
    %v3509 = vadd.f32 0.0, %v3508
    %v3510 = vpop.f32.mrb[0].mxu0
    %v3511 = vadd.f32 0.0, %v3510
    %v3512 = vpop.f32.mrb[0].mxu0
    %v3513 = vpop.f32.mrb[0].mxu0
    %3514 = vdwg.mxu0
    %3515 = vmatprep.subr.bf16.mxu0 %v1802
    %3516 = vmatpush1.bf16.msra.mxu0 %v1801
    %3517 = vmatprep.subr.bf16.mxu0 %v1810
    %3518 = vmatpush1.bf16.msra.mxu0 %v1809
    %3519 = vmatprep.subr.bf16.mxu0 %v1818
    %3520 = vmatpush1.bf16.msra.mxu0 %v1817
    %3521 = vmatprep.subr.bf16.mxu0 %v1826
    %3522 = vmatpush1.bf16.msra.mxu0 %v1825
    %3523 = vmatprep.subr.bf16.mxu0 %v1834
    %3524 = vmatpush1.bf16.msra.mxu0 %v1833
    %3525 = vmatprep.subr.bf16.mxu0 %v1842
    %3526 = vmatpush1.bf16.msra.mxu0 %v1841
    %3527 = vmatprep.subr.bf16.mxu0 %v1850
    %3528 = vmatpush1.bf16.msra.mxu0 %v1849
    %3529 = vmatprep.subr.bf16.mxu0 %v1858
    %3530 = vmatpush1.bf16.msra.mxu0 %v1857
    %3531 = vmatprep.subr.bf16.mxu0 %v1866
    %3532 = vmatpush1.bf16.msra.mxu0 %v1865
    %3533 = vmatprep.subr.bf16.mxu0 %v1874
    %3534 = vmatpush1.bf16.msra.mxu0 %v1873
    %3535 = vmatprep.subr.bf16.mxu0 %v1882
    %3536 = vmatpush1.bf16.msra.mxu0 %v1881
    %3537 = vmatprep.subr.bf16.mxu0 %v1890
    %3538 = vmatpush1.bf16.msra.mxu0 %v1889
    %3539 = vmatprep.subr.bf16.mxu0 %v1898
    %3540 = vmatpush1.bf16.msra.mxu0 %v1897
    %3541 = vmatprep.subr.bf16.mxu0 %v1906
    %3542 = vmatpush1.bf16.msra.mxu0 %v1905
    %3543 = vmatprep.subr.bf16.mxu0 %v1914
    %3544 = vmatpush1.bf16.msra.mxu0 %v1913
    %3545 = vmatprep.subr.bf16.mxu0 %v1922
    %3546 = vmatpush1.bf16.msra.mxu0 %v1921
    %3547 = vmatprep.mubr.bf16.mxu0 %v3432
    %3548 = vmatmul.mubr.bf16.gmra.mrb[0].mxu0 %v3431
    %v3549 = vpop.f32.mrb[0].mxu0
    %v3550 = vadd.f32 0.0, %v3549
    %v3551 = vpop.f32.mrb[0].mxu0
    %v3552 = vadd.f32 0.0, %v3551
    %v3553 = vpop.f32.mrb[0].mxu0
    %v3554 = vpop.f32.mrb[0].mxu0
    %3555 = vdwg.mxu0
    %3556 = vmatprep.subr.bf16.mxu0 %v1804
    %3557 = vmatpush1.bf16.msra.mxu0 %v1803
    %3558 = vmatprep.subr.bf16.mxu0 %v1812
    %3559 = vmatpush1.bf16.msra.mxu0 %v1811
    %3560 = vmatprep.subr.bf16.mxu0 %v1820
    %3561 = vmatpush1.bf16.msra.mxu0 %v1819
    %3562 = vmatprep.subr.bf16.mxu0 %v1828
    %3563 = vmatpush1.bf16.msra.mxu0 %v1827
    %3564 = vmatprep.subr.bf16.mxu0 %v1836
    %3565 = vmatpush1.bf16.msra.mxu0 %v1835
    %3566 = vmatprep.subr.bf16.mxu0 %v1844
    %3567 = vmatpush1.bf16.msra.mxu0 %v1843
    %3568 = vmatprep.subr.bf16.mxu0 %v1852
    %3569 = vmatpush1.bf16.msra.mxu0 %v1851
    %3570 = vmatprep.subr.bf16.mxu0 %v1860
    %3571 = vmatpush1.bf16.msra.mxu0 %v1859
    %3572 = vmatprep.subr.bf16.mxu0 %v1868
    %3573 = vmatpush1.bf16.msra.mxu0 %v1867
    %3574 = vmatprep.subr.bf16.mxu0 %v1876
    %3575 = vmatpush1.bf16.msra.mxu0 %v1875
    %3576 = vmatprep.subr.bf16.mxu0 %v1884
    %3577 = vmatpush1.bf16.msra.mxu0 %v1883
    %3578 = vmatprep.subr.bf16.mxu0 %v1892
    %3579 = vmatpush1.bf16.msra.mxu0 %v1891
    %3580 = vmatprep.subr.bf16.mxu0 %v1900
    %3581 = vmatpush1.bf16.msra.mxu0 %v1899
    %3582 = vmatprep.subr.bf16.mxu0 %v1908
    %3583 = vmatpush1.bf16.msra.mxu0 %v1907
    %3584 = vmatprep.subr.bf16.mxu0 %v1916
    %3585 = vmatpush1.bf16.msra.mxu0 %v1915
    %3586 = vmatprep.subr.bf16.mxu0 %v1924
    %3587 = vmatpush1.bf16.msra.mxu0 %v1923
    %3588 = vmatprep.mubr.bf16.mxu0 %v3432
    %3589 = vmatmul.mubr.bf16.gmra.mrb[0].mxu0 %v3431
    %v3590 = vpop.f32.mrb[0].mxu0
    %v3591 = vadd.f32 0.0, %v3590
    %v3592 = vpop.f32.mrb[0].mxu0
    %v3593 = vadd.f32 0.0, %v3592
    %v3594 = vpop.f32.mrb[0].mxu0
    %v3595 = vpop.f32.mrb[0].mxu0
    %3596 = vdwg.mxu0
    %v3597 = vadd.f32 %v3423, %v3468
    %v3598 = vadd.f32 %v3424, %v3470
    %v3599 = vadd.f32 %v3425, %v3509
    %v3600 = vadd.f32 %v3426, %v3511
    %v3601 = vadd.f32 %v3427, %v3550
    %v3602 = vadd.f32 %v3428, %v3552
    %v3603 = vadd.f32 %v3429, %v3591
    %v3604 = vadd.f32 %v3430, %v3593
    %v3605 = vxor.u32 %v3597, 2147483648
    %v3606 = vxor.u32 %v3598, 2147483648
    %v3607 = vmul.f32 %v3605, 1.442695
    %v3608 = vpow.pop %v3607
    %v3609 = vmul.f32 %v3606, 1.442695
    %v3610 = vpow.pop %v3609
    %v3611 = vadd.f32 %v3608, 1.0
    %v3612 = vadd.f32 %v3610, 1.0
    %v3613 = vrcp.pop %v3611
    %v3614 = vmul.f32 1.0, %v3613
    %v3615 = vrcp.pop %v3612
    %v3616 = vmul.f32 1.0, %v3615
    %v3617 = vxor.u32 %v3599, 2147483648
    %v3618 = vxor.u32 %v3600, 2147483648
    %v3619 = vmul.f32 %v3617, 1.442695
    %v3620 = vpow.pop %v3619
    %v3621 = vmul.f32 %v3618, 1.442695
    %v3622 = vpow.pop %v3621
    %v3623 = vadd.f32 %v3620, 1.0
    %v3624 = vadd.f32 %v3622, 1.0
    %v3625 = vrcp.pop %v3623
    %v3626 = vmul.f32 1.0, %v3625
    %v3627 = vrcp.pop %v3624
    %v3628 = vmul.f32 1.0, %v3627
    %v3629 = vtanh.pop %v3601
    %v3630 = vtanh.pop %v3602
    %v3631 = vxor.u32 %v3603, 2147483648
    %v3632 = vxor.u32 %v3604, 2147483648
    %v3633 = vmul.f32 %v3631, 1.442695
    %v3634 = vpow.pop %v3633
    %v3635 = vmul.f32 %v3632, 1.442695
    %v3636 = vpow.pop %v3635
    %v3637 = vadd.f32 %v3634, 1.0
    %v3638 = vadd.f32 %v3636, 1.0
    %v3639 = vrcp.pop %v3637
    %v3640 = vmul.f32 1.0, %v3639
    %v3641 = vrcp.pop %v3638
    %v3642 = vmul.f32 1.0, %v3641
    %v3643 = vmul.f32 %v3626, %v3417
    %v3644 = vmul.f32 %v3628, %v3418
    %v3645 = vmul.f32 %v3614, %v3629
    %v3646 = vmul.f32 %v3616, %v3630
    %v3647 = vadd.f32 %v3643, %v3645
    %v3648 = vadd.f32 %v3644, %v3646
    %v3649 = vtanh.pop %v3647
    %v3650 = vtanh.pop %v3648
    %v3651 = vmul.f32 %v3640, %v3649
    %v3652 = vmul.f32 %v3642, %v3650
    %v3653 = vld [vmem:[#allocation2 + $0x1c0] sm:$0xff]
    %v3654 = vld [vmem:[#allocation2 + $0x1c8] sm:$0xff]
    %v3655 = vld [vmem:[#allocation2 + $0x1d0] sm:$0xff]
    %v3656 = vld [vmem:[#allocation2 + $0x1d8] sm:$0xff]
    %v3657 = vld [vmem:[#allocation2 + $0x1e0] sm:$0xff]
    %v3658 = vld [vmem:[#allocation2 + $0x1e8] sm:$0xff]
    %v3659 = vld [vmem:[#allocation2 + $0x1f0] sm:$0xff]
    %v3660 = vld [vmem:[#allocation2 + $0x1f8] sm:$0xff]
    %v3661 = vpack.c.bf16 %v3651, %v3651
    %v3662 = vpack.c.bf16 %v3652, %v3652
    %3663 = vmatprep.subr.bf16.mxu0 %v1798
    %3664 = vmatpush1.bf16.msra.mxu0 %v1797
    %3665 = vmatprep.subr.bf16.mxu0 %v1806
    %3666 = vmatpush1.bf16.msra.mxu0 %v1805
    %3667 = vmatprep.subr.bf16.mxu0 %v1814
    %3668 = vmatpush1.bf16.msra.mxu0 %v1813
    %3669 = vmatprep.subr.bf16.mxu0 %v1822
    %3670 = vmatpush1.bf16.msra.mxu0 %v1821
    %3671 = vmatprep.subr.bf16.mxu0 %v1830
    %3672 = vmatpush1.bf16.msra.mxu0 %v1829
    %3673 = vmatprep.subr.bf16.mxu0 %v1838
    %3674 = vmatpush1.bf16.msra.mxu0 %v1837
    %3675 = vmatprep.subr.bf16.mxu0 %v1846
    %3676 = vmatpush1.bf16.msra.mxu0 %v1845
    %3677 = vmatprep.subr.bf16.mxu0 %v1854
    %3678 = vmatpush1.bf16.msra.mxu0 %v1853
    %3679 = vmatprep.subr.bf16.mxu0 %v1862
    %3680 = vmatpush1.bf16.msra.mxu0 %v1861
    %3681 = vmatprep.subr.bf16.mxu0 %v1870
    %3682 = vmatpush1.bf16.msra.mxu0 %v1869
    %3683 = vmatprep.subr.bf16.mxu0 %v1878
    %3684 = vmatpush1.bf16.msra.mxu0 %v1877
    %3685 = vmatprep.subr.bf16.mxu0 %v1886
    %3686 = vmatpush1.bf16.msra.mxu0 %v1885
    %3687 = vmatprep.subr.bf16.mxu0 %v1894
    %3688 = vmatpush1.bf16.msra.mxu0 %v1893
    %3689 = vmatprep.subr.bf16.mxu0 %v1902
    %3690 = vmatpush1.bf16.msra.mxu0 %v1901
    %3691 = vmatprep.subr.bf16.mxu0 %v1910
    %3692 = vmatpush1.bf16.msra.mxu0 %v1909
    %3693 = vmatprep.subr.bf16.mxu0 %v1918
    %3694 = vmatpush1.bf16.msra.mxu0 %v1917
    %3695 = vmatprep.mubr.bf16.mxu0 %v3662
    %3696 = vmatmul.mubr.bf16.gmra.mrb[0].mxu0 %v3661
    %v3697 = vpop.f32.mrb[0].mxu0
    %v3698 = vadd.f32 0.0, %v3697
    %v3699 = vpop.f32.mrb[0].mxu0
    %v3700 = vadd.f32 0.0, %v3699
    %v3701 = vpop.f32.mrb[0].mxu0
    %v3702 = vpop.f32.mrb[0].mxu0
    %3703 = vdwg.mxu0
    %3704 = vmatprep.subr.bf16.mxu0 %v1800
    %3705 = vmatpush1.bf16.msra.mxu0 %v1799
    %3706 = vmatprep.subr.bf16.mxu0 %v1808
    %3707 = vmatpush1.bf16.msra.mxu0 %v1807
    %3708 = vmatprep.subr.bf16.mxu0 %v1816
    %3709 = vmatpush1.bf16.msra.mxu0 %v1815
    %3710 = vmatprep.subr.bf16.mxu0 %v1824
    %3711 = vmatpush1.bf16.msra.mxu0 %v1823
    %3712 = vmatprep.subr.bf16.mxu0 %v1832
    %3713 = vmatpush1.bf16.msra.mxu0 %v1831
    %3714 = vmatprep.subr.bf16.mxu0 %v1840
    %3715 = vmatpush1.bf16.msra.mxu0 %v1839
    %3716 = vmatprep.subr.bf16.mxu0 %v1848
    %3717 = vmatpush1.bf16.msra.mxu0 %v1847
    %3718 = vmatprep.subr.bf16.mxu0 %v1856
    %3719 = vmatpush1.bf16.msra.mxu0 %v1855
    %3720 = vmatprep.subr.bf16.mxu0 %v1864
    %3721 = vmatpush1.bf16.msra.mxu0 %v1863
    %3722 = vmatprep.subr.bf16.mxu0 %v1872
    %3723 = vmatpush1.bf16.msra.mxu0 %v1871
    %3724 = vmatprep.subr.bf16.mxu0 %v1880
    %3725 = vmatpush1.bf16.msra.mxu0 %v1879
    %3726 = vmatprep.subr.bf16.mxu0 %v1888
    %3727 = vmatpush1.bf16.msra.mxu0 %v1887
    %3728 = vmatprep.subr.bf16.mxu0 %v1896
    %3729 = vmatpush1.bf16.msra.mxu0 %v1895
    %3730 = vmatprep.subr.bf16.mxu0 %v1904
    %3731 = vmatpush1.bf16.msra.mxu0 %v1903
    %3732 = vmatprep.subr.bf16.mxu0 %v1912
    %3733 = vmatpush1.bf16.msra.mxu0 %v1911
    %3734 = vmatprep.subr.bf16.mxu0 %v1920
    %3735 = vmatpush1.bf16.msra.mxu0 %v1919
    %3736 = vmatprep.mubr.bf16.mxu0 %v3662
    %3737 = vmatmul.mubr.bf16.gmra.mrb[0].mxu0 %v3661
    %v3738 = vpop.f32.mrb[0].mxu0
    %v3739 = vadd.f32 0.0, %v3738
    %v3740 = vpop.f32.mrb[0].mxu0
    %v3741 = vadd.f32 0.0, %v3740
    %v3742 = vpop.f32.mrb[0].mxu0
    %v3743 = vpop.f32.mrb[0].mxu0
    %3744 = vdwg.mxu0
    %3745 = vmatprep.subr.bf16.mxu0 %v1802
    %3746 = vmatpush1.bf16.msra.mxu0 %v1801
    %3747 = vmatprep.subr.bf16.mxu0 %v1810
    %3748 = vmatpush1.bf16.msra.mxu0 %v1809
    %3749 = vmatprep.subr.bf16.mxu0 %v1818
    %3750 = vmatpush1.bf16.msra.mxu0 %v1817
    %3751 = vmatprep.subr.bf16.mxu0 %v1826
    %3752 = vmatpush1.bf16.msra.mxu0 %v1825
    %3753 = vmatprep.subr.bf16.mxu0 %v1834
    %3754 = vmatpush1.bf16.msra.mxu0 %v1833
    %3755 = vmatprep.subr.bf16.mxu0 %v1842
    %3756 = vmatpush1.bf16.msra.mxu0 %v1841
    %3757 = vmatprep.subr.bf16.mxu0 %v1850
    %3758 = vmatpush1.bf16.msra.mxu0 %v1849
    %3759 = vmatprep.subr.bf16.mxu0 %v1858
    %3760 = vmatpush1.bf16.msra.mxu0 %v1857
    %3761 = vmatprep.subr.bf16.mxu0 %v1866
    %3762 = vmatpush1.bf16.msra.mxu0 %v1865
    %3763 = vmatprep.subr.bf16.mxu0 %v1874
    %3764 = vmatpush1.bf16.msra.mxu0 %v1873
    %3765 = vmatprep.subr.bf16.mxu0 %v1882
    %3766 = vmatpush1.bf16.msra.mxu0 %v1881
    %3767 = vmatprep.subr.bf16.mxu0 %v1890
    %3768 = vmatpush1.bf16.msra.mxu0 %v1889
    %3769 = vmatprep.subr.bf16.mxu0 %v1898
    %3770 = vmatpush1.bf16.msra.mxu0 %v1897
    %3771 = vmatprep.subr.bf16.mxu0 %v1906
    %3772 = vmatpush1.bf16.msra.mxu0 %v1905
    %3773 = vmatprep.subr.bf16.mxu0 %v1914
    %3774 = vmatpush1.bf16.msra.mxu0 %v1913
    %3775 = vmatprep.subr.bf16.mxu0 %v1922
    %3776 = vmatpush1.bf16.msra.mxu0 %v1921
    %3777 = vmatprep.mubr.bf16.mxu0 %v3662
    %3778 = vmatmul.mubr.bf16.gmra.mrb[0].mxu0 %v3661
    %v3779 = vpop.f32.mrb[0].mxu0
    %v3780 = vadd.f32 0.0, %v3779
    %v3781 = vpop.f32.mrb[0].mxu0
    %v3782 = vadd.f32 0.0, %v3781
    %v3783 = vpop.f32.mrb[0].mxu0
    %v3784 = vpop.f32.mrb[0].mxu0
    %3785 = vdwg.mxu0
    %3786 = vmatprep.subr.bf16.mxu0 %v1804
    %3787 = vmatpush1.bf16.msra.mxu0 %v1803
    %3788 = vmatprep.subr.bf16.mxu0 %v1812
    %3789 = vmatpush1.bf16.msra.mxu0 %v1811
    %3790 = vmatprep.subr.bf16.mxu0 %v1820
    %3791 = vmatpush1.bf16.msra.mxu0 %v1819
    %3792 = vmatprep.subr.bf16.mxu0 %v1828
    %3793 = vmatpush1.bf16.msra.mxu0 %v1827
    %3794 = vmatprep.subr.bf16.mxu0 %v1836
    %3795 = vmatpush1.bf16.msra.mxu0 %v1835
    %3796 = vmatprep.subr.bf16.mxu0 %v1844
    %3797 = vmatpush1.bf16.msra.mxu0 %v1843
    %3798 = vmatprep.subr.bf16.mxu0 %v1852
    %3799 = vmatpush1.bf16.msra.mxu0 %v1851
    %3800 = vmatprep.subr.bf16.mxu0 %v1860
    %3801 = vmatpush1.bf16.msra.mxu0 %v1859
    %3802 = vmatprep.subr.bf16.mxu0 %v1868
    %3803 = vmatpush1.bf16.msra.mxu0 %v1867
    %3804 = vmatprep.subr.bf16.mxu0 %v1876
    %3805 = vmatpush1.bf16.msra.mxu0 %v1875
    %3806 = vmatprep.subr.bf16.mxu0 %v1884
    %3807 = vmatpush1.bf16.msra.mxu0 %v1883
    %3808 = vmatprep.subr.bf16.mxu0 %v1892
    %3809 = vmatpush1.bf16.msra.mxu0 %v1891
    %3810 = vmatprep.subr.bf16.mxu0 %v1900
    %3811 = vmatpush1.bf16.msra.mxu0 %v1899
    %3812 = vmatprep.subr.bf16.mxu0 %v1908
    %3813 = vmatpush1.bf16.msra.mxu0 %v1907
    %3814 = vmatprep.subr.bf16.mxu0 %v1916
    %3815 = vmatpush1.bf16.msra.mxu0 %v1915
    %3816 = vmatprep.subr.bf16.mxu0 %v1924
    %3817 = vmatpush1.bf16.msra.mxu0 %v1923
    %3818 = vmatprep.mubr.bf16.mxu0 %v3662
    %3819 = vmatmul.mubr.bf16.gmra.mrb[0].mxu0 %v3661
    %v3820 = vpop.f32.mrb[0].mxu0
    %v3821 = vadd.f32 0.0, %v3820
    %v3822 = vpop.f32.mrb[0].mxu0
    %v3823 = vadd.f32 0.0, %v3822
    %v3824 = vpop.f32.mrb[0].mxu0
    %v3825 = vpop.f32.mrb[0].mxu0
    %3826 = vdwg.mxu0
    %v3827 = vadd.f32 %v3653, %v3698
    %v3828 = vadd.f32 %v3654, %v3700
    %v3829 = vadd.f32 %v3655, %v3739
    %v3830 = vadd.f32 %v3656, %v3741
    %v3831 = vadd.f32 %v3657, %v3780
    %v3832 = vadd.f32 %v3658, %v3782
    %v3833 = vadd.f32 %v3659, %v3821
    %v3834 = vadd.f32 %v3660, %v3823
    %v3835 = vxor.u32 %v3827, 2147483648
    %v3836 = vxor.u32 %v3828, 2147483648
    %v3837 = vmul.f32 %v3835, 1.442695
    %v3838 = vpow.pop %v3837
    %v3839 = vmul.f32 %v3836, 1.442695
    %v3840 = vpow.pop %v3839
    %v3841 = vadd.f32 %v3838, 1.0
    %v3842 = vadd.f32 %v3840, 1.0
    %v3843 = vrcp.pop %v3841
    %v3844 = vmul.f32 1.0, %v3843
    %v3845 = vrcp.pop %v3842
    %v3846 = vmul.f32 1.0, %v3845
    %v3847 = vxor.u32 %v3829, 2147483648
    %v3848 = vxor.u32 %v3830, 2147483648
    %v3849 = vmul.f32 %v3847, 1.442695
    %v3850 = vpow.pop %v3849
    %v3851 = vmul.f32 %v3848, 1.442695
    %v3852 = vpow.pop %v3851
    %v3853 = vadd.f32 %v3850, 1.0
    %v3854 = vadd.f32 %v3852, 1.0
    %v3855 = vrcp.pop %v3853
    %v3856 = vmul.f32 1.0, %v3855
    %v3857 = vrcp.pop %v3854
    %v3858 = vmul.f32 1.0, %v3857
    %v3859 = vtanh.pop %v3831
    %v3860 = vtanh.pop %v3832
    %v3861 = vxor.u32 %v3833, 2147483648
    %v3862 = vxor.u32 %v3834, 2147483648
    %v3863 = vmul.f32 %v3861, 1.442695
    %v3864 = vpow.pop %v3863
    %v3865 = vmul.f32 %v3862, 1.442695
    %v3866 = vpow.pop %v3865
    %v3867 = vadd.f32 %v3864, 1.0
    %v3868 = vadd.f32 %v3866, 1.0
    %v3869 = vrcp.pop %v3867
    %v3870 = vmul.f32 1.0, %v3869
    %v3871 = vrcp.pop %v3868
    %v3872 = vmul.f32 1.0, %v3871
    %v3873 = vmul.f32 %v3856, %v3647
    %v3874 = vmul.f32 %v3858, %v3648
    %v3875 = vmul.f32 %v3844, %v3859
    %v3876 = vmul.f32 %v3846, %v3860
    %v3877 = vadd.f32 %v3873, %v3875
    %v3878 = vadd.f32 %v3874, %v3876
    %v3879 = vtanh.pop %v3877
    %v3880 = vtanh.pop %v3878
    %v3881 = vmul.f32 %v3870, %v3879
    %v3882 = vmul.f32 %v3872, %v3880
    %v3883 = vld [vmem:[#allocation3 + $0x38] sm:$0xff]
    %v3884 = vld [vmem:[#allocation9] sm:$0xff]
    %v3885 = vld [vmem:[#allocation9 + $0x10] sm:$0xff]
    %v3886 = vld [vmem:[#allocation9 + $0x18] sm:$0xff]
    %v3887 = vld [vmem:[#allocation9 + $0x20] sm:$0xff]
    %v3888 = vld [vmem:[#allocation9 + $0x30] sm:$0xff]
    %v3889 = vld [vmem:[#allocation9 + $0x38] sm:$0xff]
    %v3890 = vld [vmem:[#allocation9 + $0x40] sm:$0xff]
    %v3891 = vld [vmem:[#allocation9 + $0x50] sm:$0xff]
    %v3892 = vld [vmem:[#allocation9 + $0x58] sm:$0xff]
    %v3893 = vld [vmem:[#allocation9 + $0x60] sm:$0xff]
    %v3894 = vld [vmem:[#allocation9 + $0x70] sm:$0xff]
    %v3895 = vld [vmem:[#allocation9 + $0x78] sm:$0xff]
    %v3896 = vld [vmem:[#allocation9 + $0x80] sm:$0xff]
    %v3897 = vld [vmem:[#allocation9 + $0x90] sm:$0xff]
    %v3898 = vld [vmem:[#allocation9 + $0x98] sm:$0xff]
    %v3899 = vld [vmem:[#allocation9 + $0xa0] sm:$0xff]
    %v3900 = vld [vmem:[#allocation9 + $0xb0] sm:$0xff]
    %v3901 = vld [vmem:[#allocation9 + $0xb8] sm:$0xff]
    %v3902 = vld [vmem:[#allocation9 + $0xc0] sm:$0xff]
    %v3903 = vld [vmem:[#allocation9 + $0xd0] sm:$0xff]
    %v3904 = vld [vmem:[#allocation9 + $0xd8] sm:$0xff]
    %v3905 = vld [vmem:[#allocation9 + $0xe0] sm:$0xff]
    %v3906 = vld [vmem:[#allocation9 + $0xf0] sm:$0xff]
    %v3907 = vld [vmem:[#allocation9 + $0xf8] sm:$0xff]
    %v3908 = vld [vmem:[#allocation9 + $0x100] sm:$0xff]
    %v3909 = vld [vmem:[#allocation9 + $0x110] sm:$0xff]
    %v3910 = vld [vmem:[#allocation9 + $0x118] sm:$0xff]
    %v3911 = vld [vmem:[#allocation9 + $0x120] sm:$0xff]
    %v3912 = vld [vmem:[#allocation9 + $0x130] sm:$0xff]
    %v3913 = vld [vmem:[#allocation9 + $0x138] sm:$0xff]
    %v3914 = vld [vmem:[#allocation9 + $0x140] sm:$0xff]
    %v3915 = vld [vmem:[#allocation9 + $0x150] sm:$0xff]
    %v3916 = vld [vmem:[#allocation9 + $0x158] sm:$0xff]
    %v3917 = vld [vmem:[#allocation9 + $0x160] sm:$0xff]
    %v3918 = vld [vmem:[#allocation9 + $0x170] sm:$0xff]
    %v3919 = vld [vmem:[#allocation9 + $0x178] sm:$0xff]
    %v3920 = vld [vmem:[#allocation9 + $0x180] sm:$0xff]
    %v3921 = vld [vmem:[#allocation9 + $0x190] sm:$0xff]
    %v3922 = vld [vmem:[#allocation9 + $0x198] sm:$0xff]
    %v3923 = vld [vmem:[#allocation9 + $0x1a0] sm:$0xff]
    %v3924 = vld [vmem:[#allocation9 + $0x1b0] sm:$0xff]
    %v3925 = vld [vmem:[#allocation9 + $0x1b8] sm:$0xff]
    %v3926 = vld [vmem:[#allocation9 + $0x1c0] sm:$0xff]
    %v3927 = vld [vmem:[#allocation9 + $0x1d0] sm:$0xff]
    %v3928 = vld [vmem:[#allocation9 + $0x1d8] sm:$0xff]
    %v3929 = vld [vmem:[#allocation9 + $0x1e0] sm:$0xff]
    %v3930 = vld [vmem:[#allocation9 + $0x1f0] sm:$0xff]
    %v3931 = vld [vmem:[#allocation9 + $0x1f8] sm:$0xff]
    %v3932 = vld [vmem:[#allocation9 + $0x200] sm:$0xff]
    %v3933 = vld [vmem:[#allocation9 + $0x210] sm:$0xff]
    %v3934 = vld [vmem:[#allocation9 + $0x218] sm:$0xff]
    %v3935 = vld [vmem:[#allocation9 + $0x220] sm:$0xff]
    %v3936 = vld [vmem:[#allocation9 + $0x230] sm:$0xff]
    %v3937 = vld [vmem:[#allocation9 + $0x238] sm:$0xff]
    %v3938 = vld [vmem:[#allocation9 + $0x240] sm:$0xff]
    %v3939 = vld [vmem:[#allocation9 + $0x250] sm:$0xff]
    %v3940 = vld [vmem:[#allocation9 + $0x258] sm:$0xff]
    %v3941 = vld [vmem:[#allocation9 + $0x260] sm:$0xff]
    %v3942 = vld [vmem:[#allocation9 + $0x270] sm:$0xff]
    %v3943 = vld [vmem:[#allocation9 + $0x278] sm:$0xff]
    %v3944 = vld [vmem:[#allocation9 + $0x280] sm:$0xff]
    %v3945 = vld [vmem:[#allocation9 + $0x290] sm:$0xff]
    %v3946 = vld [vmem:[#allocation9 + $0x298] sm:$0xff]
    %v3947 = vld [vmem:[#allocation9 + $0x2a0] sm:$0xff]
    %v3948 = vld [vmem:[#allocation9 + $0x2b0] sm:$0xff]
    %v3949 = vld [vmem:[#allocation9 + $0x2b8] sm:$0xff]
    %v3950 = vld [vmem:[#allocation9 + $0x2c0] sm:$0xff]
    %v3951 = vld [vmem:[#allocation9 + $0x2d0] sm:$0xff]
    %v3952 = vld [vmem:[#allocation9 + $0x2d8] sm:$0xff]
    %v3953 = vld [vmem:[#allocation9 + $0x2e0] sm:$0xff]
    %v3954 = vld [vmem:[#allocation9 + $0x2f0] sm:$0xff]
    %v3955 = vld [vmem:[#allocation9 + $0x2f8] sm:$0xff]
    %v3956 = vld [vmem:[#allocation9 + $0x300] sm:$0xff]
    %v3957 = vld [vmem:[#allocation9 + $0x310] sm:$0xff]
    %v3958 = vld [vmem:[#allocation9 + $0x318] sm:$0xff]
    %v3959 = vld [vmem:[#allocation9 + $0x320] sm:$0xff]
    %v3960 = vld [vmem:[#allocation9 + $0x330] sm:$0xff]
    %v3961 = vld [vmem:[#allocation9 + $0x338] sm:$0xff]
    %v3962 = vld [vmem:[#allocation9 + $0x340] sm:$0xff]
    %v3963 = vld [vmem:[#allocation9 + $0x350] sm:$0xff]
    %v3964 = vld [vmem:[#allocation9 + $0x358] sm:$0xff]
    %v3965 = vld [vmem:[#allocation9 + $0x360] sm:$0xff]
    %v3966 = vld [vmem:[#allocation9 + $0x370] sm:$0xff]
    %v3967 = vld [vmem:[#allocation9 + $0x378] sm:$0xff]
    %v3968 = vld [vmem:[#allocation9 + $0x380] sm:$0x11]
    %v3969 = vld [vmem:[#allocation9 + $0x390] sm:$0x11]
    %v3970 = vld [vmem:[#allocation9 + $0x398] sm:$0x11]
    %v3971 = vld [vmem:[%s5] sm:$0xff]
    %v3973 = vlaneseq
    %v3974 = vshrl.u32 %v3973, 7
    %v3975 = vsub.s32 0, %v3974
    %v3976 = vrot.slane %v3971, %v3975
    %v3977 = vlaneseq
    %v3978 = vshrl.u32 %v3977, 7
    %v3979 = vsub.s32 1, %v3978
    %v3980 = vrot.slane %v3971, %v3979
    %v3981 = vlaneseq
    %v3982 = vshrl.u32 %v3981, 7
    %v3983 = vsub.s32 4, %v3982
    %v3984 = vrot.slane %v3971, %v3983
    %v3985 = vlaneseq
    %v3986 = vshrl.u32 %v3985, 7
    %v3987 = vsub.s32 5, %v3986
    %v3988 = vrot.slane %v3971, %v3987
    %v3989 = vlaneseq
    %v3990 = vshrl.u32 %v3989, 7
    %v3991 = vsub.s32 6, %v3990
    %v3992 = vrot.slane %v3971, %v3991
    %v3993 = vlaneseq
    %v3994 = vshrl.u32 %v3993, 7
    %v3995 = vsub.s32 7, %v3994
    %v3996 = vrot.slane %v3971, %v3995
    %v4004 = vunpack.c.l.b16 %v3883
    %v4005 = vunpack.c.h.b16 %v3883
    %v4006 = vpack.c.b16 %v4004, %v4004
    %v4007 = vpack.c.b16 %v4005, %v4005
    %v4096 = vunpack.c.l.b16 %v3884
    %v4097 = vunpack.c.h.b16 %v3884
    %v4098 = vunpack.c.l.b16 %v3885
    %v4099 = vunpack.c.h.b16 %v3885
    %v4100 = vunpack.c.l.b16 %v3886
    %v4101 = vunpack.c.h.b16 %v3886
    %v4102 = vunpack.c.l.b16 %v3887
    %v4103 = vunpack.c.h.b16 %v3887
    %v4104 = vunpack.c.l.b16 %v3888
    %v4105 = vunpack.c.h.b16 %v3888
    %v4106 = vunpack.c.l.b16 %v3889
    %v4107 = vunpack.c.h.b16 %v3889
    %v4108 = vunpack.c.l.b16 %v3890
    %v4109 = vunpack.c.h.b16 %v3890
    %v4110 = vunpack.c.l.b16 %v3891
    %v4111 = vunpack.c.h.b16 %v3891
    %v4112 = vunpack.c.l.b16 %v3892
    %v4113 = vunpack.c.h.b16 %v3892
    %v4114 = vunpack.c.l.b16 %v3893
    %v4115 = vunpack.c.h.b16 %v3893
    %v4116 = vunpack.c.l.b16 %v3894
    %v4117 = vunpack.c.h.b16 %v3894
    %v4118 = vunpack.c.l.b16 %v3895
    %v4119 = vunpack.c.h.b16 %v3895
    %v4120 = vunpack.c.l.b16 %v3896
    %v4121 = vunpack.c.h.b16 %v3896
    %v4122 = vunpack.c.l.b16 %v3897
    %v4123 = vunpack.c.h.b16 %v3897
    %v4124 = vunpack.c.l.b16 %v3898
    %v4125 = vunpack.c.h.b16 %v3898
    %v4126 = vunpack.c.l.b16 %v3899
    %v4127 = vunpack.c.h.b16 %v3899
    %v4128 = vunpack.c.l.b16 %v3900
    %v4129 = vunpack.c.h.b16 %v3900
    %v4130 = vunpack.c.l.b16 %v3901
    %v4131 = vunpack.c.h.b16 %v3901
    %v4132 = vunpack.c.l.b16 %v3902
    %v4133 = vunpack.c.h.b16 %v3902
    %v4134 = vunpack.c.l.b16 %v3903
    %v4135 = vunpack.c.h.b16 %v3903
    %v4136 = vunpack.c.l.b16 %v3904
    %v4137 = vunpack.c.h.b16 %v3904
    %v4138 = vunpack.c.l.b16 %v3905
    %v4139 = vunpack.c.h.b16 %v3905
    %v4140 = vunpack.c.l.b16 %v3906
    %v4141 = vunpack.c.h.b16 %v3906
    %v4142 = vunpack.c.l.b16 %v3907
    %v4143 = vunpack.c.h.b16 %v3907
    %v4144 = vunpack.c.l.b16 %v3908
    %v4145 = vunpack.c.h.b16 %v3908
    %v4146 = vunpack.c.l.b16 %v3909
    %v4147 = vunpack.c.h.b16 %v3909
    %v4148 = vunpack.c.l.b16 %v3910
    %v4149 = vunpack.c.h.b16 %v3910
    %v4150 = vunpack.c.l.b16 %v3911
    %v4151 = vunpack.c.h.b16 %v3911
    %v4152 = vunpack.c.l.b16 %v3912
    %v4153 = vunpack.c.h.b16 %v3912
    %v4154 = vunpack.c.l.b16 %v3913
    %v4155 = vunpack.c.h.b16 %v3913
    %v4156 = vunpack.c.l.b16 %v3914
    %v4157 = vunpack.c.h.b16 %v3914
    %v4158 = vunpack.c.l.b16 %v3915
    %v4159 = vunpack.c.h.b16 %v3915
    %v4160 = vunpack.c.l.b16 %v3916
    %v4161 = vunpack.c.h.b16 %v3916
    %v4162 = vunpack.c.l.b16 %v3917
    %v4163 = vunpack.c.h.b16 %v3917
    %v4164 = vunpack.c.l.b16 %v3918
    %v4165 = vunpack.c.h.b16 %v3918
    %v4166 = vunpack.c.l.b16 %v3919
    %v4167 = vunpack.c.h.b16 %v3919
    %v4168 = vunpack.c.l.b16 %v3920
    %v4169 = vunpack.c.h.b16 %v3920
    %v4170 = vunpack.c.l.b16 %v3921
    %v4171 = vunpack.c.h.b16 %v3921
    %v4172 = vunpack.c.l.b16 %v3922
    %v4173 = vunpack.c.h.b16 %v3922
    %v4174 = vunpack.c.l.b16 %v3923
    %v4175 = vunpack.c.h.b16 %v3923
    %v4176 = vunpack.c.l.b16 %v3924
    %v4177 = vunpack.c.h.b16 %v3924
    %v4178 = vunpack.c.l.b16 %v3925
    %v4179 = vunpack.c.h.b16 %v3925
    %v4180 = vunpack.c.l.b16 %v3926
    %v4181 = vunpack.c.h.b16 %v3926
    %v4182 = vunpack.c.l.b16 %v3927
    %v4183 = vunpack.c.h.b16 %v3927
    %v4184 = vunpack.c.l.b16 %v3928
    %v4185 = vunpack.c.h.b16 %v3928
    %v4186 = vunpack.c.l.b16 %v3929
    %v4187 = vunpack.c.h.b16 %v3929
    %v4188 = vunpack.c.l.b16 %v3930
    %v4189 = vunpack.c.h.b16 %v3930
    %v4190 = vunpack.c.l.b16 %v3931
    %v4191 = vunpack.c.h.b16 %v3931
    %v4192 = vunpack.c.l.b16 %v3932
    %v4193 = vunpack.c.h.b16 %v3932
    %v4194 = vunpack.c.l.b16 %v3933
    %v4195 = vunpack.c.h.b16 %v3933
    %v4196 = vunpack.c.l.b16 %v3934
    %v4197 = vunpack.c.h.b16 %v3934
    %v4198 = vunpack.c.l.b16 %v3935
    %v4199 = vunpack.c.h.b16 %v3935
    %v4200 = vunpack.c.l.b16 %v3936
    %v4201 = vunpack.c.h.b16 %v3936
    %v4202 = vunpack.c.l.b16 %v3937
    %v4203 = vunpack.c.h.b16 %v3937
    %v4204 = vunpack.c.l.b16 %v3938
    %v4205 = vunpack.c.h.b16 %v3938
    %v4206 = vunpack.c.l.b16 %v3939
    %v4207 = vunpack.c.h.b16 %v3939
    %v4208 = vunpack.c.l.b16 %v3940
    %v4209 = vunpack.c.h.b16 %v3940
    %v4210 = vunpack.c.l.b16 %v3941
    %v4211 = vunpack.c.h.b16 %v3941
    %v4212 = vunpack.c.l.b16 %v3942
    %v4213 = vunpack.c.h.b16 %v3942
    %v4214 = vunpack.c.l.b16 %v3943
    %v4215 = vunpack.c.h.b16 %v3943
    %v4216 = vunpack.c.l.b16 %v3944
    %v4217 = vunpack.c.h.b16 %v3944
    %v4218 = vunpack.c.l.b16 %v3945
    %v4219 = vunpack.c.h.b16 %v3945
    %v4220 = vunpack.c.l.b16 %v3946
    %v4221 = vunpack.c.h.b16 %v3946
    %v4222 = vunpack.c.l.b16 %v3947
    %v4223 = vunpack.c.h.b16 %v3947
    %v4224 = vunpack.c.l.b16 %v3948
    %v4225 = vunpack.c.h.b16 %v3948
    %v4226 = vunpack.c.l.b16 %v3949
    %v4227 = vunpack.c.h.b16 %v3949
    %v4228 = vunpack.c.l.b16 %v3950
    %v4229 = vunpack.c.h.b16 %v3950
    %v4230 = vunpack.c.l.b16 %v3951
    %v4231 = vunpack.c.h.b16 %v3951
    %v4232 = vunpack.c.l.b16 %v3952
    %v4233 = vunpack.c.h.b16 %v3952
    %v4234 = vunpack.c.l.b16 %v3953
    %v4235 = vunpack.c.h.b16 %v3953
    %v4236 = vunpack.c.l.b16 %v3954
    %v4237 = vunpack.c.h.b16 %v3954
    %v4238 = vunpack.c.l.b16 %v3955
    %v4239 = vunpack.c.h.b16 %v3955
    %v4240 = vunpack.c.l.b16 %v3956
    %v4241 = vunpack.c.h.b16 %v3956
    %v4242 = vunpack.c.l.b16 %v3957
    %v4243 = vunpack.c.h.b16 %v3957
    %v4244 = vunpack.c.l.b16 %v3958
    %v4245 = vunpack.c.h.b16 %v3958
    %v4246 = vunpack.c.l.b16 %v3959
    %v4247 = vunpack.c.h.b16 %v3959
    %v4248 = vunpack.c.l.b16 %v3960
    %v4249 = vunpack.c.h.b16 %v3960
    %v4250 = vunpack.c.l.b16 %v3961
    %v4251 = vunpack.c.h.b16 %v3961
    %v4252 = vunpack.c.l.b16 %v3962
    %v4253 = vunpack.c.h.b16 %v3962
    %v4254 = vunpack.c.l.b16 %v3963
    %v4255 = vunpack.c.h.b16 %v3963
    %v4256 = vunpack.c.l.b16 %v3964
    %v4257 = vunpack.c.h.b16 %v3964
    %v4258 = vunpack.c.l.b16 %v3965
    %v4259 = vunpack.c.h.b16 %v3965
    %v4260 = vunpack.c.l.b16 %v3966
    %v4261 = vunpack.c.h.b16 %v3966
    %v4262 = vunpack.c.l.b16 %v3967
    %v4263 = vunpack.c.h.b16 %v3967
    %v4264 = vunpack.c.l.b16 %v3968
    %v4265 = vunpack.c.h.b16 %v3968
    %v4266 = vunpack.c.l.b16 %v3969
    %v4267 = vunpack.c.h.b16 %v3969
    %v4268 = vunpack.c.l.b16 %v3970
    %v4269 = vunpack.c.h.b16 %v3970
    %v4270 = vpack.c.b16 %v4102, %v4096
    %v4271 = vpack.c.b16 %v4103, %v4097
    %v4272 = vpack.c.b16 %v4104, %v4098
    %v4273 = vpack.c.b16 %v4105, %v4099
    %v4274 = vpack.c.b16 %v4106, %v4100
    %v4275 = vpack.c.b16 %v4107, %v4101
    %v4276 = vpack.c.b16 %v4114, %v4108
    %v4277 = vpack.c.b16 %v4115, %v4109
    %v4278 = vpack.c.b16 %v4116, %v4110
    %v4279 = vpack.c.b16 %v4117, %v4111
    %v4280 = vpack.c.b16 %v4118, %v4112
    %v4281 = vpack.c.b16 %v4119, %v4113
    %v4282 = vpack.c.b16 %v4126, %v4120
    %v4283 = vpack.c.b16 %v4127, %v4121
    %v4284 = vpack.c.b16 %v4128, %v4122
    %v4285 = vpack.c.b16 %v4129, %v4123
    %v4286 = vpack.c.b16 %v4130, %v4124
    %v4287 = vpack.c.b16 %v4131, %v4125
    %v4288 = vpack.c.b16 %v4138, %v4132
    %v4289 = vpack.c.b16 %v4139, %v4133
    %v4290 = vpack.c.b16 %v4140, %v4134
    %v4291 = vpack.c.b16 %v4141, %v4135
    %v4292 = vpack.c.b16 %v4142, %v4136
    %v4293 = vpack.c.b16 %v4143, %v4137
    %v4294 = vpack.c.b16 %v4150, %v4144
    %v4295 = vpack.c.b16 %v4151, %v4145
    %v4296 = vpack.c.b16 %v4152, %v4146
    %v4297 = vpack.c.b16 %v4153, %v4147
    %v4298 = vpack.c.b16 %v4154, %v4148
    %v4299 = vpack.c.b16 %v4155, %v4149
    %v4300 = vpack.c.b16 %v4162, %v4156
    %v4301 = vpack.c.b16 %v4163, %v4157
    %v4302 = vpack.c.b16 %v4164, %v4158
    %v4303 = vpack.c.b16 %v4165, %v4159
    %v4304 = vpack.c.b16 %v4166, %v4160
    %v4305 = vpack.c.b16 %v4167, %v4161
    %v4306 = vpack.c.b16 %v4174, %v4168
    %v4307 = vpack.c.b16 %v4175, %v4169
    %v4308 = vpack.c.b16 %v4176, %v4170
    %v4309 = vpack.c.b16 %v4177, %v4171
    %v4310 = vpack.c.b16 %v4178, %v4172
    %v4311 = vpack.c.b16 %v4179, %v4173
    %v4312 = vpack.c.b16 %v4186, %v4180
    %v4313 = vpack.c.b16 %v4187, %v4181
    %v4314 = vpack.c.b16 %v4188, %v4182
    %v4315 = vpack.c.b16 %v4189, %v4183
    %v4316 = vpack.c.b16 %v4190, %v4184
    %v4317 = vpack.c.b16 %v4191, %v4185
    %v4318 = vpack.c.b16 %v4198, %v4192
    %v4319 = vpack.c.b16 %v4199, %v4193
    %v4320 = vpack.c.b16 %v4200, %v4194
    %v4321 = vpack.c.b16 %v4201, %v4195
    %v4322 = vpack.c.b16 %v4202, %v4196
    %v4323 = vpack.c.b16 %v4203, %v4197
    %v4324 = vpack.c.b16 %v4210, %v4204
    %v4325 = vpack.c.b16 %v4211, %v4205
    %v4326 = vpack.c.b16 %v4212, %v4206
    %v4327 = vpack.c.b16 %v4213, %v4207
    %v4328 = vpack.c.b16 %v4214, %v4208
    %v4329 = vpack.c.b16 %v4215, %v4209
    %v4330 = vpack.c.b16 %v4222, %v4216
    %v4331 = vpack.c.b16 %v4223, %v4217
    %v4332 = vpack.c.b16 %v4224, %v4218
    %v4333 = vpack.c.b16 %v4225, %v4219
    %v4334 = vpack.c.b16 %v4226, %v4220
    %v4335 = vpack.c.b16 %v4227, %v4221
    %v4336 = vpack.c.b16 %v4234, %v4228
    %v4337 = vpack.c.b16 %v4235, %v4229
    %v4338 = vpack.c.b16 %v4236, %v4230
    %v4339 = vpack.c.b16 %v4237, %v4231
    %v4340 = vpack.c.b16 %v4238, %v4232
    %v4341 = vpack.c.b16 %v4239, %v4233
    %v4342 = vpack.c.b16 %v4246, %v4240
    %v4343 = vpack.c.b16 %v4247, %v4241
    %v4344 = vpack.c.b16 %v4248, %v4242
    %v4345 = vpack.c.b16 %v4249, %v4243
    %v4346 = vpack.c.b16 %v4250, %v4244
    %v4347 = vpack.c.b16 %v4251, %v4245
    %v4348 = vpack.c.b16 %v4258, %v4252
    %v4349 = vpack.c.b16 %v4259, %v4253
    %v4350 = vpack.c.b16 %v4260, %v4254
    %v4351 = vpack.c.b16 %v4261, %v4255
    %v4352 = vpack.c.b16 %v4262, %v4256
    %v4353 = vpack.c.b16 %v4263, %v4257
    %v4354 = vpack.c.b16 %v4264, %v4264
    %v4355 = vpack.c.b16 %v4265, %v4265
    %v4356 = vpack.c.b16 %v4266, %v4266
    %v4357 = vpack.c.b16 %v4267, %v4267
    %v4358 = vpack.c.b16 %v4268, %v4268
    %v4359 = vpack.c.b16 %v4269, %v4269
    %v4445 = vsel %vm881, %v4007, 0
    %v4448 = vand.u32 %v4354, %v896
    %v4451 = vand.u32 %v4355, %v896
    %v4454 = vand.u32 %v4356, %v896
    %v4457 = vand.u32 %v4357, %v896
    %v4460 = vand.u32 %v4358, %v896
    %v4463 = vand.u32 %v4359, %v896
    %4465 = vmatprep.subr.bf16.mxu0 %v4271
    %4466 = vmatpush1.bf16.msra.mxu0 %v4270
    %4467 = vmatprep.subr.bf16.mxu0 %v4277
    %4468 = vmatpush1.bf16.msra.mxu0 %v4276
    %4469 = vmatprep.subr.bf16.mxu0 %v4283
    %4470 = vmatpush1.bf16.msra.mxu0 %v4282
    %4471 = vmatprep.subr.bf16.mxu0 %v4289
    %4472 = vmatpush1.bf16.msra.mxu0 %v4288
    %4473 = vmatprep.subr.bf16.mxu0 %v4295
    %4474 = vmatpush1.bf16.msra.mxu0 %v4294
    %4475 = vmatprep.subr.bf16.mxu0 %v4301
    %4476 = vmatpush1.bf16.msra.mxu0 %v4300
    %4477 = vmatprep.subr.bf16.mxu0 %v4307
    %4478 = vmatpush1.bf16.msra.mxu0 %v4306
    %4479 = vmatprep.subr.bf16.mxu0 %v4313
    %4480 = vmatpush1.bf16.msra.mxu0 %v4312
    %4481 = vmatprep.subr.bf16.mxu0 %v4319
    %4482 = vmatpush1.bf16.msra.mxu0 %v4318
    %4483 = vmatprep.subr.bf16.mxu0 %v4325
    %4484 = vmatpush1.bf16.msra.mxu0 %v4324
    %4485 = vmatprep.subr.bf16.mxu0 %v4331
    %4486 = vmatpush1.bf16.msra.mxu0 %v4330
    %4487 = vmatprep.subr.bf16.mxu0 %v4337
    %4488 = vmatpush1.bf16.msra.mxu0 %v4336
    %4489 = vmatprep.subr.bf16.mxu0 %v4343
    %4490 = vmatpush1.bf16.msra.mxu0 %v4342
    %4491 = vmatprep.subr.bf16.mxu0 %v4349
    %4492 = vmatpush1.bf16.msra.mxu0 %v4348
    %4493 = vmatprep.subr.bf16.mxu0 %v4451
    %4494 = vmatpush1.bf16.msra.mxu0 %v4448
    %4495 = vmatprep.subr.bf16.mxu0 0
    %4496 = vmatpush1.bf16.msra.mxu0 0
    %4497 = vmatprep.mubr.bf16.mxu0 %v4445
    %4498 = vmatmul.mubr.bf16.gmra.mrb[0].mxu0 %v4006
    %v4499 = vpop.f32.mrb[0].mxu0
    %v4500 = vadd.f32 %v3976, %v4499
    %v4501 = vpop.f32.mrb[0].mxu0
    %v4502 = vadd.f32 %v3980, %v4501
    %v4503 = vpop.f32.mrb[0].mxu0
    %v4504 = vpop.f32.mrb[0].mxu0
    %4505 = vdwg.mxu0
    %4506 = vmatprep.subr.bf16.mxu0 %v4273
    %4507 = vmatpush1.bf16.msra.mxu0 %v4272
    %4508 = vmatprep.subr.bf16.mxu0 %v4279
    %4509 = vmatpush1.bf16.msra.mxu0 %v4278
    %4510 = vmatprep.subr.bf16.mxu0 %v4285
    %4511 = vmatpush1.bf16.msra.mxu0 %v4284
    %4512 = vmatprep.subr.bf16.mxu0 %v4291
    %4513 = vmatpush1.bf16.msra.mxu0 %v4290
    %4514 = vmatprep.subr.bf16.mxu0 %v4297
    %4515 = vmatpush1.bf16.msra.mxu0 %v4296
    %4516 = vmatprep.subr.bf16.mxu0 %v4303
    %4517 = vmatpush1.bf16.msra.mxu0 %v4302
    %4518 = vmatprep.subr.bf16.mxu0 %v4309
    %4519 = vmatpush1.bf16.msra.mxu0 %v4308
    %4520 = vmatprep.subr.bf16.mxu0 %v4315
    %4521 = vmatpush1.bf16.msra.mxu0 %v4314
    %4522 = vmatprep.subr.bf16.mxu0 %v4321
    %4523 = vmatpush1.bf16.msra.mxu0 %v4320
    %4524 = vmatprep.subr.bf16.mxu0 %v4327
    %4525 = vmatpush1.bf16.msra.mxu0 %v4326
    %4526 = vmatprep.subr.bf16.mxu0 %v4333
    %4527 = vmatpush1.bf16.msra.mxu0 %v4332
    %4528 = vmatprep.subr.bf16.mxu0 %v4339
    %4529 = vmatpush1.bf16.msra.mxu0 %v4338
    %4530 = vmatprep.subr.bf16.mxu0 %v4345
    %4531 = vmatpush1.bf16.msra.mxu0 %v4344
    %4532 = vmatprep.subr.bf16.mxu0 %v4351
    %4533 = vmatpush1.bf16.msra.mxu0 %v4350
    %4534 = vmatprep.subr.bf16.mxu0 %v4457
    %4535 = vmatpush1.bf16.msra.mxu0 %v4454
    %4536 = vmatprep.subr.bf16.mxu0 0
    %4537 = vmatpush1.bf16.msra.mxu0 0
    %4538 = vmatprep.mubr.bf16.mxu0 %v4445
    %4539 = vmatmul.mubr.bf16.gmra.mrb[0].mxu0 %v4006
    %v4540 = vpop.f32.mrb[0].mxu0
    %v4541 = vadd.f32 %v3984, %v4540
    %v4542 = vpop.f32.mrb[0].mxu0
    %v4543 = vadd.f32 %v3988, %v4542
    %v4544 = vpop.f32.mrb[0].mxu0
    %v4545 = vpop.f32.mrb[0].mxu0
    %4546 = vdwg.mxu0
    %4547 = vmatprep.subr.bf16.mxu0 %v4275
    %4548 = vmatpush1.bf16.msra.mxu0 %v4274
    %4549 = vmatprep.subr.bf16.mxu0 %v4281
    %4550 = vmatpush1.bf16.msra.mxu0 %v4280
    %4551 = vmatprep.subr.bf16.mxu0 %v4287
    %4552 = vmatpush1.bf16.msra.mxu0 %v4286
    %4553 = vmatprep.subr.bf16.mxu0 %v4293
    %4554 = vmatpush1.bf16.msra.mxu0 %v4292
    %4555 = vmatprep.subr.bf16.mxu0 %v4299
    %4556 = vmatpush1.bf16.msra.mxu0 %v4298
    %4557 = vmatprep.subr.bf16.mxu0 %v4305
    %4558 = vmatpush1.bf16.msra.mxu0 %v4304
    %4559 = vmatprep.subr.bf16.mxu0 %v4311
    %4560 = vmatpush1.bf16.msra.mxu0 %v4310
    %4561 = vmatprep.subr.bf16.mxu0 %v4317
    %4562 = vmatpush1.bf16.msra.mxu0 %v4316
    %4563 = vmatprep.subr.bf16.mxu0 %v4323
    %4564 = vmatpush1.bf16.msra.mxu0 %v4322
    %4565 = vmatprep.subr.bf16.mxu0 %v4329
    %4566 = vmatpush1.bf16.msra.mxu0 %v4328
    %4567 = vmatprep.subr.bf16.mxu0 %v4335
    %4568 = vmatpush1.bf16.msra.mxu0 %v4334
    %4569 = vmatprep.subr.bf16.mxu0 %v4341
    %4570 = vmatpush1.bf16.msra.mxu0 %v4340
    %4571 = vmatprep.subr.bf16.mxu0 %v4347
    %4572 = vmatpush1.bf16.msra.mxu0 %v4346
    %4573 = vmatprep.subr.bf16.mxu0 %v4353
    %4574 = vmatpush1.bf16.msra.mxu0 %v4352
    %4575 = vmatprep.subr.bf16.mxu0 %v4463
    %4576 = vmatpush1.bf16.msra.mxu0 %v4460
    %4577 = vmatprep.subr.bf16.mxu0 0
    %4578 = vmatpush1.bf16.msra.mxu0 0
    %4579 = vmatprep.mubr.bf16.mxu0 %v4445
    %4580 = vmatmul.mubr.bf16.gmra.mrb[0].mxu0 %v4006
    %v4581 = vpop.f32.mrb[0].mxu0
    %v4582 = vadd.f32 %v3992, %v4581
    %v4583 = vpop.f32.mrb[0].mxu0
    %v4584 = vadd.f32 %v3996, %v4583
    %v4585 = vpop.f32.mrb[0].mxu0
    %v4586 = vpop.f32.mrb[0].mxu0
    %4587 = vdwg.mxu0
    %v4588 = vxor.u32 %v4500, 2147483648
    %v4589 = vxor.u32 %v4502, 2147483648
    %v4590 = vmul.f32 %v4588, 1.442695
    %v4591 = vpow.pop %v4590
    %v4592 = vmul.f32 %v4589, 1.442695
    %v4593 = vpow.pop %v4592
    %v4594 = vadd.f32 %v4591, 1.0
    %v4595 = vadd.f32 %v4593, 1.0
    %v4596 = vrcp.pop %v4594
    %v4597 = vmul.f32 1.0, %v4596
    %v4598 = vrcp.pop %v4595
    %v4599 = vmul.f32 1.0, %v4598
    %v4600 = vtanh.pop %v4541
    %v4601 = vtanh.pop %v4543
    %v4602 = vxor.u32 %v4582, 2147483648
    %v4603 = vxor.u32 %v4584, 2147483648
    %v4604 = vmul.f32 %v4602, 1.442695
    %v4605 = vpow.pop %v4604
    %v4606 = vmul.f32 %v4603, 1.442695
    %v4607 = vpow.pop %v4606
    %v4608 = vadd.f32 %v4605, 1.0
    %v4609 = vadd.f32 %v4607, 1.0
    %v4610 = vrcp.pop %v4608
    %v4611 = vmul.f32 1.0, %v4610
    %v4612 = vrcp.pop %v4609
    %v4613 = vmul.f32 1.0, %v4612
    %v4614 = vmul.f32 %v4597, %v4600
    %v4615 = vmul.f32 %v4599, %v4601
    %v4616 = vtanh.pop %v4614
    %v4617 = vtanh.pop %v4615
    %v4618 = vmul.f32 %v4611, %v4616
    %v4619 = vmul.f32 %v4613, %v4617
    %v4620 = vpack.c.bf16 %v3881, %v3881
    %v4621 = vpack.c.bf16 %v3882, %v3882
    %v4622 = vpack.c.bf16 %v4618, %v4618
    %v4623 = vpack.c.bf16 %v4619, %v4619
    %v4624 = vld [vmem:[#allocation11] sm:$0xf]
    %v4625 = vld [vmem:[#allocation11 + $0x4] sm:$0xf]
    %v4626 = vld [vmem:[#allocation11 + $0x8] sm:$0xf]
    %v4627 = vld [vmem:[#allocation11 + $0xc] sm:$0xf]
    %v4628 = vld [vmem:[#allocation11 + $0x10] sm:$0xf]
    %v4629 = vld [vmem:[#allocation11 + $0x14] sm:$0xf]
    %v4630 = vld [vmem:[#allocation11 + $0x18] sm:$0xf]
    %v4631 = vld [vmem:[#allocation11 + $0x1c] sm:$0xf]
    %v4632 = vld [vmem:[#allocation11 + $0x20] sm:$0xf]
    %v4633 = vld [vmem:[#allocation11 + $0x24] sm:$0xf]
    %v4634 = vld [vmem:[#allocation11 + $0x28] sm:$0xf]
    %v4635 = vld [vmem:[#allocation11 + $0x2c] sm:$0xf]
    %v4636 = vld [vmem:[#allocation11 + $0x30] sm:$0xf]
    %v4637 = vld [vmem:[#allocation11 + $0x34] sm:$0xf]
    %v4638 = vld [vmem:[#allocation11 + $0x38] sm:$0xf]
    %v4639 = vld [vmem:[#allocation11 + $0x3c] sm:$0xf]
    %v4640 = vld [vmem:[#allocation11 + $0x40] sm:$0xf]
    %v4641 = vld [vmem:[#allocation11 + $0x44] sm:$0xf]
    %v4642 = vld [vmem:[#allocation11 + $0x48] sm:$0xf]
    %v4643 = vld [vmem:[#allocation11 + $0x4c] sm:$0xf]
    %v4644 = vld [vmem:[#allocation11 + $0x50] sm:$0xf]
    %v4645 = vld [vmem:[#allocation11 + $0x54] sm:$0xf]
    %v4646 = vld [vmem:[#allocation11 + $0x58] sm:$0xf]
    %v4647 = vld [vmem:[#allocation11 + $0x5c] sm:$0xf]
    %v4648 = vld [vmem:[#allocation11 + $0x60] sm:$0xf]
    %v4649 = vld [vmem:[#allocation11 + $0x64] sm:$0xf]
    %v4650 = vld [vmem:[#allocation11 + $0x68] sm:$0xf]
    %v4651 = vld [vmem:[#allocation11 + $0x6c] sm:$0xf]
    %v4652 = vld [vmem:[#allocation11 + $0x70] sm:$0xf]
    %v4653 = vld [vmem:[#allocation11 + $0x74] sm:$0xf]
    %v4654 = vld [vmem:[#allocation11 + $0x78] sm:$0xf]
    %v4655 = vld [vmem:[#allocation11 + $0x7c] sm:$0xf]
    %v4656 = vld [vmem:[#allocation11 + $0x80] sm:$0xf]
    %v4657 = vld [vmem:[#allocation11 + $0x84] sm:$0xf]
    %v4658 = vld [vmem:[#allocation11 + $0x88] sm:$0xf]
    %v4659 = vld [vmem:[#allocation11 + $0x8c] sm:$0xf]
    %v4660 = vld [vmem:[#allocation11 + $0x90] sm:$0xf]
    %v4661 = vld [vmem:[#allocation11 + $0x94] sm:$0xf]
    %v4662 = vld [vmem:[#allocation11 + $0x98] sm:$0xf]
    %v4663 = vld [vmem:[#allocation11 + $0x9c] sm:$0xf]
    %v4664 = vld [vmem:[#allocation11 + $0xa0] sm:$0xf]
    %v4665 = vld [vmem:[#allocation11 + $0xa4] sm:$0xf]
    %v4666 = vld [vmem:[#allocation11 + $0xa8] sm:$0xf]
    %v4667 = vld [vmem:[#allocation11 + $0xac] sm:$0xf]
    %v4668 = vld [vmem:[#allocation11 + $0xb0] sm:$0xf]
    %v4669 = vld [vmem:[#allocation11 + $0xb4] sm:$0xf]
    %v4670 = vld [vmem:[#allocation11 + $0xb8] sm:$0xf]
    %v4671 = vld [vmem:[#allocation11 + $0xbc] sm:$0xf]
    %v4672 = vld [vmem:[#allocation11 + $0xc0] sm:$0xf]
    %v4673 = vld [vmem:[#allocation11 + $0xc4] sm:$0xf]
    %v4674 = vld [vmem:[#allocation11 + $0xc8] sm:$0xf]
    %v4675 = vld [vmem:[#allocation11 + $0xcc] sm:$0xf]
    %v4676 = vld [vmem:[#allocation11 + $0xd0] sm:$0xf]
    %v4677 = vld [vmem:[#allocation11 + $0xd4] sm:$0xf]
    %v4678 = vld [vmem:[#allocation11 + $0xd8] sm:$0xf]
    %v4679 = vld [vmem:[#allocation11 + $0xdc] sm:$0xf]
    %v4680 = vld [vmem:[#allocation11 + $0xe0] sm:$0xf]
    %v4681 = vld [vmem:[#allocation11 + $0xe4] sm:$0xf]
    %v4682 = vld [vmem:[#allocation11 + $0xe8] sm:$0xf]
    %v4683 = vld [vmem:[#allocation11 + $0xec] sm:$0xf]
    %v4684 = vld [vmem:[#allocation11 + $0xf0] sm:$0xf]
    %v4685 = vld [vmem:[#allocation11 + $0xf4] sm:$0xf]
    %v4686 = vld [vmem:[#allocation11 + $0xf8] sm:$0xf]
    %v4687 = vld [vmem:[#allocation11 + $0xfc] sm:$0xf]
    %v4688 = vld [vmem:[%s7] sm:$0x1]
    %v4690 = vlaneseq
    %v4691 = vshrl.u32 %v4690, 7
    %v4692 = vsub.s32 0, %v4691
    %v4693 = vrot.slane %v4688, %v4692
    %v4759 = vunpack.c.l.b16 %v4624
    %v4760 = vunpack.c.l.b16 %v4625
    %v4761 = vunpack.c.l.b16 %v4626
    %v4762 = vunpack.c.l.b16 %v4627
    %v4763 = vunpack.c.l.b16 %v4628
    %v4764 = vunpack.c.l.b16 %v4629
    %v4765 = vunpack.c.l.b16 %v4630
    %v4766 = vunpack.c.l.b16 %v4631
    %v4767 = vunpack.c.l.b16 %v4632
    %v4768 = vunpack.c.l.b16 %v4633
    %v4769 = vunpack.c.l.b16 %v4634
    %v4770 = vunpack.c.l.b16 %v4635
    %v4771 = vunpack.c.l.b16 %v4636
    %v4772 = vunpack.c.l.b16 %v4637
    %v4773 = vunpack.c.l.b16 %v4638
    %v4774 = vunpack.c.l.b16 %v4639
    %v4775 = vunpack.c.l.b16 %v4640
    %v4776 = vunpack.c.l.b16 %v4641
    %v4777 = vunpack.c.l.b16 %v4642
    %v4778 = vunpack.c.l.b16 %v4643
    %v4779 = vunpack.c.l.b16 %v4644
    %v4780 = vunpack.c.l.b16 %v4645
    %v4781 = vunpack.c.l.b16 %v4646
    %v4782 = vunpack.c.l.b16 %v4647
    %v4783 = vunpack.c.l.b16 %v4648
    %v4784 = vunpack.c.l.b16 %v4649
    %v4785 = vunpack.c.l.b16 %v4650
    %v4786 = vunpack.c.l.b16 %v4651
    %v4787 = vunpack.c.l.b16 %v4652
    %v4788 = vunpack.c.l.b16 %v4653
    %v4789 = vunpack.c.l.b16 %v4654
    %v4790 = vunpack.c.l.b16 %v4655
    %v4791 = vunpack.c.l.b16 %v4656
    %v4792 = vunpack.c.l.b16 %v4657
    %v4793 = vunpack.c.l.b16 %v4658
    %v4794 = vunpack.c.l.b16 %v4659
    %v4795 = vunpack.c.l.b16 %v4660
    %v4796 = vunpack.c.l.b16 %v4661
    %v4797 = vunpack.c.l.b16 %v4662
    %v4798 = vunpack.c.l.b16 %v4663
    %v4799 = vunpack.c.l.b16 %v4664
    %v4800 = vunpack.c.l.b16 %v4665
    %v4801 = vunpack.c.l.b16 %v4666
    %v4802 = vunpack.c.l.b16 %v4667
    %v4803 = vunpack.c.l.b16 %v4668
    %v4804 = vunpack.c.l.b16 %v4669
    %v4805 = vunpack.c.l.b16 %v4670
    %v4806 = vunpack.c.l.b16 %v4671
    %v4807 = vunpack.c.l.b16 %v4672
    %v4808 = vunpack.c.l.b16 %v4673
    %v4809 = vunpack.c.l.b16 %v4674
    %v4810 = vunpack.c.l.b16 %v4675
    %v4811 = vunpack.c.l.b16 %v4676
    %v4812 = vunpack.c.l.b16 %v4677
    %v4813 = vunpack.c.l.b16 %v4678
    %v4814 = vunpack.c.l.b16 %v4679
    %v4815 = vunpack.c.l.b16 %v4680
    %v4816 = vunpack.c.l.b16 %v4681
    %v4817 = vunpack.c.l.b16 %v4682
    %v4818 = vunpack.c.l.b16 %v4683
    %v4819 = vunpack.c.l.b16 %v4684
    %v4820 = vunpack.c.l.b16 %v4685
    %v4821 = vunpack.c.l.b16 %v4686
    %v4822 = vunpack.c.l.b16 %v4687
    %v4823 = vpack.c.b16 %v4760, %v4759
    %v4824 = vpack.c.b16 %v4762, %v4761
    %v4825 = vpack.c.b16 %v4764, %v4763
    %v4826 = vpack.c.b16 %v4766, %v4765
    %v4827 = vpack.c.b16 %v4768, %v4767
    %v4828 = vpack.c.b16 %v4770, %v4769
    %v4829 = vpack.c.b16 %v4772, %v4771
    %v4830 = vpack.c.b16 %v4774, %v4773
    %v4831 = vpack.c.b16 %v4776, %v4775
    %v4832 = vpack.c.b16 %v4778, %v4777
    %v4833 = vpack.c.b16 %v4780, %v4779
    %v4834 = vpack.c.b16 %v4782, %v4781
    %v4835 = vpack.c.b16 %v4784, %v4783
    %v4836 = vpack.c.b16 %v4786, %v4785
    %v4837 = vpack.c.b16 %v4788, %v4787
    %v4838 = vpack.c.b16 %v4790, %v4789
    %v4839 = vpack.c.b16 %v4792, %v4791
    %v4840 = vpack.c.b16 %v4794, %v4793
    %v4841 = vpack.c.b16 %v4796, %v4795
    %v4842 = vpack.c.b16 %v4798, %v4797
    %v4843 = vpack.c.b16 %v4800, %v4799
    %v4844 = vpack.c.b16 %v4802, %v4801
    %v4845 = vpack.c.b16 %v4804, %v4803
    %v4846 = vpack.c.b16 %v4806, %v4805
    %v4847 = vpack.c.b16 %v4808, %v4807
    %v4848 = vpack.c.b16 %v4810, %v4809
    %v4849 = vpack.c.b16 %v4812, %v4811
    %v4850 = vpack.c.b16 %v4814, %v4813
    %v4851 = vpack.c.b16 %v4816, %v4815
    %v4852 = vpack.c.b16 %v4818, %v4817
    %v4853 = vpack.c.b16 %v4820, %v4819
    %v4854 = vpack.c.b16 %v4822, %v4821
    %4887 = vmatprep.subr.bf16.mxu0 0
    %4888 = vmatpush1.bf16.msra.mxu0 %v4823
    %4889 = vmatprep.subr.bf16.mxu0 0
    %4890 = vmatpush1.bf16.msra.mxu0 %v4824
    %4891 = vmatprep.subr.bf16.mxu0 0
    %4892 = vmatpush1.bf16.msra.mxu0 %v4825
    %4893 = vmatprep.subr.bf16.mxu0 0
    %4894 = vmatpush1.bf16.msra.mxu0 %v4826
    %4895 = vmatprep.subr.bf16.mxu0 0
    %4896 = vmatpush1.bf16.msra.mxu0 %v4827
    %4897 = vmatprep.subr.bf16.mxu0 0
    %4898 = vmatpush1.bf16.msra.mxu0 %v4828
    %4899 = vmatprep.subr.bf16.mxu0 0
    %4900 = vmatpush1.bf16.msra.mxu0 %v4829
    %4901 = vmatprep.subr.bf16.mxu0 0
    %4902 = vmatpush1.bf16.msra.mxu0 %v4830
    %4903 = vmatprep.subr.bf16.mxu0 0
    %4904 = vmatpush1.bf16.msra.mxu0 %v4831
    %4905 = vmatprep.subr.bf16.mxu0 0
    %4906 = vmatpush1.bf16.msra.mxu0 %v4832
    %4907 = vmatprep.subr.bf16.mxu0 0
    %4908 = vmatpush1.bf16.msra.mxu0 %v4833
    %4909 = vmatprep.subr.bf16.mxu0 0
    %4910 = vmatpush1.bf16.msra.mxu0 %v4834
    %4911 = vmatprep.subr.bf16.mxu0 0
    %4912 = vmatpush1.bf16.msra.mxu0 %v4835
    %4913 = vmatprep.subr.bf16.mxu0 0
    %4914 = vmatpush1.bf16.msra.mxu0 %v4836
    %4915 = vmatprep.subr.bf16.mxu0 0
    %4916 = vmatpush1.bf16.msra.mxu0 %v4837
    %4917 = vmatprep.subr.bf16.mxu0 0
    %4918 = vmatpush1.bf16.msra.mxu0 %v4838
    %4919 = vmatprep.mubr.bf16.mxu0 %v4621
    %4920 = vmatmul.mubr.bf16.gmra.mrb[0].mxu0 %v4620
    %v4921 = vpop.f32.mrb[0].mxu0
    %v4922 = vadd.f32 %v4693, %v4921
    %v4923 = vpop.f32.mrb[0].mxu0
    %v4924 = vpop.f32.mrb[0].mxu0
    %v4925 = vpop.f32.mrb[0].mxu0
    %4926 = vdwg.mxu0
    %4927 = vmatprep.subr.bf16.mxu0 0
    %4928 = vmatpush1.bf16.msra.mxu0 %v4839
    %4929 = vmatprep.subr.bf16.mxu0 0
    %4930 = vmatpush1.bf16.msra.mxu0 %v4840
    %4931 = vmatprep.subr.bf16.mxu0 0
    %4932 = vmatpush1.bf16.msra.mxu0 %v4841
    %4933 = vmatprep.subr.bf16.mxu0 0
    %4934 = vmatpush1.bf16.msra.mxu0 %v4842
    %4935 = vmatprep.subr.bf16.mxu0 0
    %4936 = vmatpush1.bf16.msra.mxu0 %v4843
    %4937 = vmatprep.subr.bf16.mxu0 0
    %4938 = vmatpush1.bf16.msra.mxu0 %v4844
    %4939 = vmatprep.subr.bf16.mxu0 0
    %4940 = vmatpush1.bf16.msra.mxu0 %v4845
    %4941 = vmatprep.subr.bf16.mxu0 0
    %4942 = vmatpush1.bf16.msra.mxu0 %v4846
    %4943 = vmatprep.subr.bf16.mxu0 0
    %4944 = vmatpush1.bf16.msra.mxu0 %v4847
    %4945 = vmatprep.subr.bf16.mxu0 0
    %4946 = vmatpush1.bf16.msra.mxu0 %v4848
    %4947 = vmatprep.subr.bf16.mxu0 0
    %4948 = vmatpush1.bf16.msra.mxu0 %v4849
    %4949 = vmatprep.subr.bf16.mxu0 0
    %4950 = vmatpush1.bf16.msra.mxu0 %v4850
    %4951 = vmatprep.subr.bf16.mxu0 0
    %4952 = vmatpush1.bf16.msra.mxu0 %v4851
    %4953 = vmatprep.subr.bf16.mxu0 0
    %4954 = vmatpush1.bf16.msra.mxu0 %v4852
    %4955 = vmatprep.subr.bf16.mxu0 0
    %4956 = vmatpush1.bf16.msra.mxu0 %v4853
    %4957 = vmatprep.subr.bf16.mxu0 0
    %4958 = vmatpush1.bf16.msra.mxu0 %v4854
    %4959 = vmatprep.mubr.bf16.mxu0 %v4623
    %4960 = vmatmul.mubr.bf16.gmra.mrb[0].mxu0 %v4622
    %v4961 = vpop.f32.mrb[0].mxu0
    %v4962 = vadd.f32 %v4922, %v4961
    %v4963 = vpop.f32.mrb[0].mxu0
    %v4964 = vpop.f32.mrb[0].mxu0
    %v4965 = vpop.f32.mrb[0].mxu0
    %4966 = vdwg.mxu0
    %4967 = vst [vmem:[#allocation12] sm:$0xff] %v4962
    // Predicated region
    $region54: #{tpu_custom_call.1} parent=1 // pred_check
      _
    $region55: #{tpu_custom_call.1} parent=1 // pred_check_branch
      %4969 = sbr.rel (0) target = $region57
    $region56: #{tpu_custom_call.1} parent=1 // pred_region
      %s4971 = ssub.s32 128, 128
      %4972 = vsyncadd [#allocation5], %s4971
      %s4974 = sshll.u32 [#allocation12], 4
      %s4975 = int_to_ptr.vmem [resolvable:$true] %s4974
      %4977 = dma.vmem_to_hbm [thread:$0]  %s4975, 128, %s8, [#allocation5]
    $region57: #{tpu_custom_call.1} parent=1 // pred_fallthru
      _
    // Predicated region
    $region58: #{tpu_custom_call.1} parent=1 // pred_check
      _
    $region59: #{tpu_custom_call.1} parent=1 // pred_check_branch
      %4979 = sbr.rel (0) target = $region61
    $region60: #{tpu_custom_call.1} parent=1 // pred_region
      %4980 = dma.done [#allocation5], 128
    $region61: #{tpu_custom_call.1} parent=1 // pred_fallthru
      _
    %4981 = vsyncpa [#allocation4], 1
    %4982 = vsyncpa [#allocation7], 1
    %4983 = vsyncpa [#allocation10], 1
    %4984 = vsyncpa [#allocation5], 1

</llo_original>
